<compile_context>
chip_gen: v7x
topology: tpu7x:2x2x1
jax: 0.10.0
libtpu: 0.0.40
codegen_flags: <defaults>
</compile_context>

<pallas_src>
import jax
import jax.numpy as jnp
from jax.experimental import pallas as pl
from jax.experimental.pallas import tpu as pltpu


def dqn_kernel(x_ref,                      # (T*B, D)   time-major, bf16
               wih0_ref, whh0_ref,         # (D,4H), (H,4H)  bf16, g-cols x2
               wih1_ref, whh1_ref,         # (H,4H), (H,4H)  bf16, g-cols x2
               wih2_ref, whh2_ref,         # (H,4H), (H,4H)  bf16, g-cols x2
               b0_ref, b1_ref, b2_ref,     # (1,4H) f32 (b_ih+b_hh, g-cols x2)
               wout_ref, bout_ref,         # (H,O_pad) bf16, (1,O_pad) f32
               out_ref):                   # (B, O_pad) f32
    TB, _ = x_ref.shape
    H4 = whh0_ref.shape[1]
    H = H4 // 4
    B = out_ref.shape[0]
    T = TB // B

    f32 = jnp.float32
    bf16 = jnp.bfloat16

    # --- One-time work, OFF the recurrent critical path -------------------
    # Whole-sequence layer-0 input projection (bias folded in): one batched
    # MXU matmul with M = T*B instead of T tiny per-step pushes.
    xproj = (jnp.dot(x_ref[...], wih0_ref[...], preferred_element_type=f32)
             + b0_ref[...])                               # (T*B, 4H), f32
    # Hoist the (1,4H) -> (B,4H) bias broadcasts out of the loop
    # (JAX does not CSE broadcast_in_dim).
    b1 = jnp.broadcast_to(b1_ref[...], (B, H4))
    b2 = jnp.broadcast_to(b2_ref[...], (B, H4))

    zeros_h = jnp.zeros((B, H), f32)
    h0, c0 = zeros_h, zeros_h
    h1, c1 = zeros_h, zeros_h
    h2, c2 = zeros_h, zeros_h

    def rdot(h, w_ref):
        # bf16 x bf16 MXU operands, f32 accumulation.
        return jnp.dot(h.astype(bf16), w_ref[...], preferred_element_type=f32)

    def cell(gates, c):
        # Single full-slab sigmoid (one EUP push); the g gate is recovered via
        # tanh(x) = 2*sigmoid(2x) - 1, its weight/bias columns having been
        # pre-scaled by 2 in the wrapper.  All elementwise math in f32.
        sig = jax.nn.sigmoid(gates)
        i = sig[:, 0 * H:1 * H]
        f = sig[:, 1 * H:2 * H]
        g = 2.0 * sig[:, 2 * H:3 * H] - 1.0
        o = sig[:, 3 * H:4 * H]
        c_new = f * c + i * g
        h_new = o * jnp.tanh(c_new)
        return h_new, c_new

    # Fully unrolled static time loop; all state is SSA-carried (no VMEM
    # scratch), so layer0[t+1] / layer1[t] / layer2[t-1] can overlap.
    for t in range(T):
        g0 = xproj[t * B:(t + 1) * B, :] + rdot(h0, whh0_ref)
        h0, c0 = cell(g0, c0)

        g1 = rdot(h0, wih1_ref) + rdot(h1, whh1_ref) + b1
        h1, c1 = cell(g1, c1)

        g2 = rdot(h1, wih2_ref) + rdot(h2, whh2_ref) + b2
        h2, c2 = cell(g2, c2)

    # Linear head on the last timestep of the top layer (lane-dense O_pad).
    out_ref[...] = (jnp.dot(h2.astype(bf16), wout_ref[...],
                            preferred_element_type=f32)
                    + bout_ref[...])


def dqn_forward(x, params, *, weight_dtype=jnp.bfloat16):
    """x: (B, T, D_in) batch_first, like the PyTorch module."""
    B, T, D = x.shape
    H = params["whh0"].shape[0]
    O = params["wout"].shape[1]

    B_pad = max(8, ((B + 7) // 8) * 8)          # sublane-dense batch
    O_pad = max(128, ((O + 127) // 128) * 128)  # lane-dense output head

    # Time-major, batch-padded, flattened to (T*B_pad, D): row t*B_pad + b.
    x_tm = jnp.zeros((T, B_pad, D), jnp.float32).at[:, :B, :].set(
        jnp.transpose(x.astype(jnp.float32), (1, 0, 2)))
    x_flat = x_tm.reshape(T * B_pad, D).astype(weight_dtype)

    def prescale_g(w):
        # tanh(x) = 2*sigmoid(2x) - 1  ->  scale the g-gate columns by 2.
        return w.at[..., 2 * H:3 * H].multiply(2.0)

    def wq(w):
        return prescale_g(w).astype(weight_dtype)

    wih0, whh0 = wq(params["wih0"]), wq(params["whh0"])
    wih1, whh1 = wq(params["wih1"]), wq(params["whh1"])
    wih2, whh2 = wq(params["wih2"]), wq(params["whh2"])
    b0 = prescale_g(params["b0"]).astype(jnp.float32)      # (1, 4H)
    b1 = prescale_g(params["b1"]).astype(jnp.float32)
    b2 = prescale_g(params["b2"]).astype(jnp.float32)

    # Zero-pad the output head to a dense 128-lane slab.
    wout = jnp.zeros((H, O_pad), jnp.float32).at[:, :O].set(
        params["wout"]).astype(weight_dtype)
    bout = jnp.zeros((1, O_pad), jnp.float32).at[:, :O].set(params["bout"])

    def fs(shape):
        return pl.BlockSpec(shape, lambda i: tuple(0 for _ in shape))

    out = pl.pallas_call(
        dqn_kernel,
        out_shape=jax.ShapeDtypeStruct((B_pad, O_pad), jnp.float32),
        grid_spec=pltpu.PrefetchScalarGridSpec(
            num_scalar_prefetch=0,
            grid=(1,),   # whole sequence + all weights resident in VMEM
            in_specs=[
                fs((T * B_pad, D)),
                fs((D, 4 * H)), fs((H, 4 * H)),
                fs((H, 4 * H)), fs((H, 4 * H)),
                fs((H, 4 * H)), fs((H, 4 * H)),
                fs((1, 4 * H)), fs((1, 4 * H)), fs((1, 4 * H)),
                fs((H, O_pad)), fs((1, O_pad)),
            ],
            out_specs=fs((B_pad, O_pad)),
        ),
        compiler_params=pltpu.CompilerParams(
            dimension_semantics=("arbitrary",)),
    )(x_flat, wih0, whh0, wih1, whh1, wih2, whh2, b0, b1, b2, wout, bout)

    return out[:B, :O]


def make_params(key, input_size, hidden_size, output_size):
    """Deterministic init mirroring PyTorch LSTM/Linear parameter shapes.

    PyTorch stores weight_ih_l{k}: (4H, D), weight_hh_l{k}: (4H, H); here we
    keep them pre-transposed as (D, 4H) / (H, 4H) with gate order (i, f, g, o)
    and fold b_ih + b_hh into a single (1, 4H) bias per layer.
    """
    H = hidden_size
    scale = 1.0 / jnp.sqrt(jnp.float32(H))
    keys = jax.random.split(key, 16)
    ki = iter(keys)

    def u(shape):
        return jax.random.uniform(next(ki), shape, jnp.float32, -scale, scale)

    params = {}
    in_dims = [input_size, H, H]
    for layer in range(3):
        params[f"wih{layer}"] = u((in_dims[layer], 4 * H))
        params[f"whh{layer}"] = u((H, 4 * H))
        params[f"b{layer}"] = u((1, 4 * H)) + u((1, 4 * H))  # b_ih + b_hh
    params["wout"] = u((H, output_size))
    params["bout"] = u((1, output_size))
    return params


def dqn_reference(x, params):
    """Pure-JAX f32 reference (same math as the PyTorch module)."""
    B, T, D = x.shape
    H = params["whh0"].shape[0]
    seq = x.astype(jnp.float32)
    for layer in range(3):
        wih = params[f"wih{layer}"]
        whh = params[f"whh{layer}"]
        b = params[f"b{layer}"]
        h = jnp.zeros((B, H), jnp.float32)
        c = jnp.zeros((B, H), jnp.float32)
        outs = []
        for t in range(T):
            gates = seq[:, t, :] @ wih + h @ whh + b
            i = jax.nn.sigmoid(gates[:, 0 * H:1 * H])
            f = jax.nn.sigmoid(gates[:, 1 * H:2 * H])
            g = jnp.tanh(gates[:, 2 * H:3 * H])
            o = jax.nn.sigmoid(gates[:, 3 * H:4 * H])
            c = f * c + i * g
            h = o * jnp.tanh(c)
            outs.append(h)
        seq = jnp.stack(outs, axis=1)
    return seq[:, -1, :] @ params["wout"] + params["bout"]


if __name__ == "__main__":
    B, T = 2, 8
    input_size, hidden_size, output_size = 16, 32, 4

    key = jax.random.PRNGKey(0)
    k_x, k_p = jax.random.split(key)
    x = jax.random.normal(k_x, (B, T, input_size), jnp.float32)
    params = make_params(k_p, input_size, hidden_size, output_size)

    out = jax.block_until_ready(dqn_forward(x, params))
    assert out.shape == (B, output_size)

    # (a) Check kernel math against a reference that sees the same bf16
    #     weight/input quantization the kernel's MXU sees (tight tolerance).
    params_q = {k: v.astype(jnp.bfloat16).astype(jnp.float32)
                for k, v in params.items()}
    x_q = x.astype(jnp.bfloat16).astype(jnp.float32)
    ref_q = dqn_reference(x_q, params_q)
    assert jnp.allclose(out, ref_q, atol=1e-2, rtol=1e-2), (out, ref_q)

    # (b) Check against the exact f32 PyTorch-equivalent reference; the looser
    #     tolerance only accounts for the bf16 weight quantization.
    ref = dqn_reference(x, params)
    assert jnp.allclose(out, ref, atol=3e-2, rtol=3e-2), (out, ref)

    print("KERNEL_OK")
</pallas_src>

<mosaic_0001>
module attributes {stable_mosaic.version = 11 : i64} {
  func.func @dqn_kernel(%arg0: i32, %arg1: memref<64x16xbf16, #tpu.memory_space<vmem>>, %arg2: memref<16x128xbf16, #tpu.memory_space<vmem>>, %arg3: memref<32x128xbf16, #tpu.memory_space<vmem>>, %arg4: memref<32x128xbf16, #tpu.memory_space<vmem>>, %arg5: memref<32x128xbf16, #tpu.memory_space<vmem>>, %arg6: memref<32x128xbf16, #tpu.memory_space<vmem>>, %arg7: memref<32x128xbf16, #tpu.memory_space<vmem>>, %arg8: memref<1x128xf32, #tpu.memory_space<vmem>>, %arg9: memref<1x128xf32, #tpu.memory_space<vmem>>, %arg10: memref<1x128xf32, #tpu.memory_space<vmem>>, %arg11: memref<32x128xbf16, #tpu.memory_space<vmem>>, %arg12: memref<1x128xf32, #tpu.memory_space<vmem>>, %arg13: memref<8x128xf32, #tpu.memory_space<vmem>>) attributes {dimension_semantics = [#tpu.dimension_semantics<arbitrary>], iteration_bounds = array<i64: 1>, scalar_prefetch = 0 : i64, scratch_operands = 0 : i64, tpu.core_type = #tpu.core_type<tc>, window_params = [{pipeline_mode = #tpu.pipeline_mode<synchronous>, transform_indices = @transform_0, window_bounds = array<i64: 64, 16>}, {pipeline_mode = #tpu.pipeline_mode<synchronous>, transform_indices = @transform_1, window_bounds = array<i64: 16, 128>}, {pipeline_mode = #tpu.pipeline_mode<synchronous>, transform_indices = @transform_2, window_bounds = array<i64: 32, 128>}, {pipeline_mode = #tpu.pipeline_mode<synchronous>, transform_indices = @transform_3, window_bounds = array<i64: 32, 128>}, {pipeline_mode = #tpu.pipeline_mode<synchronous>, transform_indices = @transform_4, window_bounds = array<i64: 32, 128>}, {pipeline_mode = #tpu.pipeline_mode<synchronous>, transform_indices = @transform_5, window_bounds = array<i64: 32, 128>}, {pipeline_mode = #tpu.pipeline_mode<synchronous>, transform_indices = @transform_6, window_bounds = array<i64: 32, 128>}, {pipeline_mode = #tpu.pipeline_mode<synchronous>, transform_indices = @transform_7, window_bounds = array<i64: 1, 128>}, {pipeline_mode = #tpu.pipeline_mode<synchronous>, transform_indices = @transform_8, window_bounds = array<i64: 1, 128>}, {pipeline_mode = #tpu.pipeline_mode<synchronous>, transform_indices = @transform_9, window_bounds = array<i64: 1, 128>}, {pipeline_mode = #tpu.pipeline_mode<synchronous>, transform_indices = @transform_10, window_bounds = array<i64: 32, 128>}, {pipeline_mode = #tpu.pipeline_mode<synchronous>, transform_indices = @transform_11, window_bounds = array<i64: 1, 128>}, {pipeline_mode = #tpu.pipeline_mode<synchronous>, transform_indices = @transform_12, window_bounds = array<i64: 8, 128>}]} {
    %c0 = arith.constant 0 : index
    %c0_0 = arith.constant 0 : index
    %0 = vector.load %arg1[%c0, %c0_0] : memref<64x16xbf16, #tpu.memory_space<vmem>>, vector<64x16xbf16>
    %c0_1 = arith.constant 0 : index
    %c0_2 = arith.constant 0 : index
    %1 = vector.load %arg2[%c0_1, %c0_2] : memref<16x128xbf16, #tpu.memory_space<vmem>>, vector<16x128xbf16>
    %cst = arith.constant dense<0.000000e+00> : vector<64x128xf32>
    %2 = tpu.matmul %0, %1, %cst {dimension_numbers = #tpu.dot_dimension_numbers<[1], [0], [0], [1], [0, 0, 1, 1], [], []>} : vector<64x16xbf16>, vector<16x128xbf16>, vector<64x128xf32> -> vector<64x128xf32>
    %c0_3 = arith.constant 0 : index
    %c0_4 = arith.constant 0 : index
    %3 = vector.load %arg8[%c0_3, %c0_4] : memref<1x128xf32, #tpu.memory_space<vmem>>, vector<1x128xf32>
    %4 = vector.broadcast %3 : vector<1x128xf32> to vector<64x128xf32>
    %5 = arith.addf %2, %4 : vector<64x128xf32>
    %c0_5 = arith.constant 0 : index
    %c0_6 = arith.constant 0 : index
    %6 = vector.load %arg9[%c0_5, %c0_6] : memref<1x128xf32, #tpu.memory_space<vmem>>, vector<1x128xf32>
    %7 = vector.shape_cast %6 : vector<1x128xf32> to vector<1x128xf32>
    %8 = vector.broadcast %7 : vector<1x128xf32> to vector<8x128xf32>
    %c0_7 = arith.constant 0 : index
    %c0_8 = arith.constant 0 : index
    %9 = vector.load %arg10[%c0_7, %c0_8] : memref<1x128xf32, #tpu.memory_space<vmem>>, vector<1x128xf32>
    %10 = vector.shape_cast %9 : vector<1x128xf32> to vector<1x128xf32>
    %11 = vector.broadcast %10 : vector<1x128xf32> to vector<8x128xf32>
    %cst_9 = arith.constant 0.000000e+00 : f32
    %12 = vector.broadcast %cst_9 : f32 to vector<8x32xf32>
    %13 = vector.extract_strided_slice %5 {offsets = [0, 0], sizes = [8, 128], strides = [1, 1]} : vector<64x128xf32> to vector<8x128xf32>
    %14 = arith.truncf %12 : vector<8x32xf32> to vector<8x32xbf16>
    %c0_10 = arith.constant 0 : index
    %c0_11 = arith.constant 0 : index
    %15 = vector.load %arg3[%c0_10, %c0_11] : memref<32x128xbf16, #tpu.memory_space<vmem>>, vector<32x128xbf16>
    %cst_12 = arith.constant dense<0.000000e+00> : vector<8x128xf32>
    %16 = tpu.matmul %14, %15, %cst_12 {dimension_numbers = #tpu.dot_dimension_numbers<[1], [0], [0], [1], [0, 0, 1, 1], [], []>} : vector<8x32xbf16>, vector<32x128xbf16>, vector<8x128xf32> -> vector<8x128xf32>
    %17 = arith.addf %13, %16 : vector<8x128xf32>
    %18 = arith.negf %17 : vector<8x128xf32>
    %19 = math.exp %18 : vector<8x128xf32>
    %cst_13 = arith.constant 1.000000e+00 : f32
    %20 = vector.broadcast %cst_13 : f32 to vector<8x128xf32>
    %21 = arith.addf %20, %19 : vector<8x128xf32>
    %22 = arith.divf %20, %21 : vector<8x128xf32>
    %23 = vector.extract_strided_slice %22 {offsets = [0, 0], sizes = [8, 32], strides = [1, 1]} : vector<8x128xf32> to vector<8x32xf32>
    %24 = vector.extract_strided_slice %22 {offsets = [0, 32], sizes = [8, 32], strides = [1, 1]} : vector<8x128xf32> to vector<8x32xf32>
    %25 = vector.extract_strided_slice %22 {offsets = [0, 64], sizes = [8, 32], strides = [1, 1]} : vector<8x128xf32> to vector<8x32xf32>
    %cst_14 = arith.constant 2.000000e+00 : f32
    %26 = vector.broadcast %cst_14 : f32 to vector<8x32xf32>
    %27 = arith.mulf %26, %25 : vector<8x32xf32>
    %cst_15 = arith.constant 1.000000e+00 : f32
    %28 = vector.broadcast %cst_15 : f32 to vector<8x32xf32>
    %29 = arith.subf %27, %28 : vector<8x32xf32>
    %30 = vector.extract_strided_slice %22 {offsets = [0, 96], sizes = [8, 32], strides = [1, 1]} : vector<8x128xf32> to vector<8x32xf32>
    %31 = arith.mulf %24, %12 : vector<8x32xf32>
    %32 = arith.mulf %23, %29 : vector<8x32xf32>
    %33 = arith.addf %31, %32 : vector<8x32xf32>
    %34 = math.tanh %33 : vector<8x32xf32>
    %35 = arith.mulf %30, %34 : vector<8x32xf32>
    %36 = arith.truncf %35 : vector<8x32xf32> to vector<8x32xbf16>
    %c0_16 = arith.constant 0 : index
    %c0_17 = arith.constant 0 : index
    %37 = vector.load %arg4[%c0_16, %c0_17] : memref<32x128xbf16, #tpu.memory_space<vmem>>, vector<32x128xbf16>
    %cst_18 = arith.constant dense<0.000000e+00> : vector<8x128xf32>
    %38 = tpu.matmul %36, %37, %cst_18 {dimension_numbers = #tpu.dot_dimension_numbers<[1], [0], [0], [1], [0, 0, 1, 1], [], []>} : vector<8x32xbf16>, vector<32x128xbf16>, vector<8x128xf32> -> vector<8x128xf32>
    %39 = arith.truncf %12 : vector<8x32xf32> to vector<8x32xbf16>
    %c0_19 = arith.constant 0 : index
    %c0_20 = arith.constant 0 : index
    %40 = vector.load %arg5[%c0_19, %c0_20] : memref<32x128xbf16, #tpu.memory_space<vmem>>, vector<32x128xbf16>
    %cst_21 = arith.constant dense<0.000000e+00> : vector<8x128xf32>
    %41 = tpu.matmul %39, %40, %cst_21 {dimension_numbers = #tpu.dot_dimension_numbers<[1], [0], [0], [1], [0, 0, 1, 1], [], []>} : vector<8x32xbf16>, vector<32x128xbf16>, vector<8x128xf32> -> vector<8x128xf32>
    %42 = arith.addf %38, %41 : vector<8x128xf32>
    %43 = arith.addf %42, %8 : vector<8x128xf32>
    %44 = arith.negf %43 : vector<8x128xf32>
    %45 = math.exp %44 : vector<8x128xf32>
    %cst_22 = arith.constant 1.000000e+00 : f32
    %46 = vector.broadcast %cst_22 : f32 to vector<8x128xf32>
    %47 = arith.addf %46, %45 : vector<8x128xf32>
    %48 = arith.divf %46, %47 : vector<8x128xf32>
    %49 = vector.extract_strided_slice %48 {offsets = [0, 0], sizes = [8, 32], strides = [1, 1]} : vector<8x128xf32> to vector<8x32xf32>
    %50 = vector.extract_strided_slice %48 {offsets = [0, 32], sizes = [8, 32], strides = [1, 1]} : vector<8x128xf32> to vector<8x32xf32>
    %51 = vector.extract_strided_slice %48 {offsets = [0, 64], sizes = [8, 32], strides = [1, 1]} : vector<8x128xf32> to vector<8x32xf32>
    %cst_23 = arith.constant 2.000000e+00 : f32
    %52 = vector.broadcast %cst_23 : f32 to vector<8x32xf32>
    %53 = arith.mulf %52, %51 : vector<8x32xf32>
    %cst_24 = arith.constant 1.000000e+00 : f32
    %54 = vector.broadcast %cst_24 : f32 to vector<8x32xf32>
    %55 = arith.subf %53, %54 : vector<8x32xf32>
    %56 = vector.extract_strided_slice %48 {offsets = [0, 96], sizes = [8, 32], strides = [1, 1]} : vector<8x128xf32> to vector<8x32xf32>
    %57 = arith.mulf %50, %12 : vector<8x32xf32>
    %58 = arith.mulf %49, %55 : vector<8x32xf32>
    %59 = arith.addf %57, %58 : vector<8x32xf32>
    %60 = math.tanh %59 : vector<8x32xf32>
    %61 = arith.mulf %56, %60 : vector<8x32xf32>
    %62 = arith.truncf %61 : vector<8x32xf32> to vector<8x32xbf16>
    %c0_25 = arith.constant 0 : index
    %c0_26 = arith.constant 0 : index
    %63 = vector.load %arg6[%c0_25, %c0_26] : memref<32x128xbf16, #tpu.memory_space<vmem>>, vector<32x128xbf16>
    %cst_27 = arith.constant dense<0.000000e+00> : vector<8x128xf32>
    %64 = tpu.matmul %62, %63, %cst_27 {dimension_numbers = #tpu.dot_dimension_numbers<[1], [0], [0], [1], [0, 0, 1, 1], [], []>} : vector<8x32xbf16>, vector<32x128xbf16>, vector<8x128xf32> -> vector<8x128xf32>
    %65 = arith.truncf %12 : vector<8x32xf32> to vector<8x32xbf16>
    %c0_28 = arith.constant 0 : index
    %c0_29 = arith.constant 0 : index
    %66 = vector.load %arg7[%c0_28, %c0_29] : memref<32x128xbf16, #tpu.memory_space<vmem>>, vector<32x128xbf16>
    %cst_30 = arith.constant dense<0.000000e+00> : vector<8x128xf32>
    %67 = tpu.matmul %65, %66, %cst_30 {dimension_numbers = #tpu.dot_dimension_numbers<[1], [0], [0], [1], [0, 0, 1, 1], [], []>} : vector<8x32xbf16>, vector<32x128xbf16>, vector<8x128xf32> -> vector<8x128xf32>
    %68 = arith.addf %64, %67 : vector<8x128xf32>
    %69 = arith.addf %68, %11 : vector<8x128xf32>
    %70 = arith.negf %69 : vector<8x128xf32>
    %71 = math.exp %70 : vector<8x128xf32>
    %cst_31 = arith.constant 1.000000e+00 : f32
    %72 = vector.broadcast %cst_31 : f32 to vector<8x128xf32>
    %73 = arith.addf %72, %71 : vector<8x128xf32>
    %74 = arith.divf %72, %73 : vector<8x128xf32>
    %75 = vector.extract_strided_slice %74 {offsets = [0, 0], sizes = [8, 32], strides = [1, 1]} : vector<8x128xf32> to vector<8x32xf32>
    %76 = vector.extract_strided_slice %74 {offsets = [0, 32], sizes = [8, 32], strides = [1, 1]} : vector<8x128xf32> to vector<8x32xf32>
    %77 = vector.extract_strided_slice %74 {offsets = [0, 64], sizes = [8, 32], strides = [1, 1]} : vector<8x128xf32> to vector<8x32xf32>
    %cst_32 = arith.constant 2.000000e+00 : f32
    %78 = vector.broadcast %cst_32 : f32 to vector<8x32xf32>
    %79 = arith.mulf %78, %77 : vector<8x32xf32>
    %cst_33 = arith.constant 1.000000e+00 : f32
    %80 = vector.broadcast %cst_33 : f32 to vector<8x32xf32>
    %81 = arith.subf %79, %80 : vector<8x32xf32>
    %82 = vector.extract_strided_slice %74 {offsets = [0, 96], sizes = [8, 32], strides = [1, 1]} : vector<8x128xf32> to vector<8x32xf32>
    %83 = arith.mulf %76, %12 : vector<8x32xf32>
    %84 = arith.mulf %75, %81 : vector<8x32xf32>
    %85 = arith.addf %83, %84 : vector<8x32xf32>
    %86 = math.tanh %85 : vector<8x32xf32>
    %87 = arith.mulf %82, %86 : vector<8x32xf32>
    %88 = vector.extract_strided_slice %5 {offsets = [8, 0], sizes = [8, 128], strides = [1, 1]} : vector<64x128xf32> to vector<8x128xf32>
    %89 = arith.truncf %35 : vector<8x32xf32> to vector<8x32xbf16>
    %c0_34 = arith.constant 0 : index
    %c0_35 = arith.constant 0 : index
    %90 = vector.load %arg3[%c0_34, %c0_35] : memref<32x128xbf16, #tpu.memory_space<vmem>>, vector<32x128xbf16>
    %cst_36 = arith.constant dense<0.000000e+00> : vector<8x128xf32>
    %91 = tpu.matmul %89, %90, %cst_36 {dimension_numbers = #tpu.dot_dimension_numbers<[1], [0], [0], [1], [0, 0, 1, 1], [], []>} : vector<8x32xbf16>, vector<32x128xbf16>, vector<8x128xf32> -> vector<8x128xf32>
    %92 = arith.addf %88, %91 : vector<8x128xf32>
    %93 = arith.negf %92 : vector<8x128xf32>
    %94 = math.exp %93 : vector<8x128xf32>
    %cst_37 = arith.constant 1.000000e+00 : f32
    %95 = vector.broadcast %cst_37 : f32 to vector<8x128xf32>
    %96 = arith.addf %95, %94 : vector<8x128xf32>
    %97 = arith.divf %95, %96 : vector<8x128xf32>
    %98 = vector.extract_strided_slice %97 {offsets = [0, 0], sizes = [8, 32], strides = [1, 1]} : vector<8x128xf32> to vector<8x32xf32>
    %99 = vector.extract_strided_slice %97 {offsets = [0, 32], sizes = [8, 32], strides = [1, 1]} : vector<8x128xf32> to vector<8x32xf32>
    %100 = vector.extract_strided_slice %97 {offsets = [0, 64], sizes = [8, 32], strides = [1, 1]} : vector<8x128xf32> to vector<8x32xf32>
    %cst_38 = arith.constant 2.000000e+00 : f32
    %101 = vector.broadcast %cst_38 : f32 to vector<8x32xf32>
    %102 = arith.mulf %101, %100 : vector<8x32xf32>
    %cst_39 = arith.constant 1.000000e+00 : f32
    %103 = vector.broadcast %cst_39 : f32 to vector<8x32xf32>
    %104 = arith.subf %102, %103 : vector<8x32xf32>
    %105 = vector.extract_strided_slice %97 {offsets = [0, 96], sizes = [8, 32], strides = [1, 1]} : vector<8x128xf32> to vector<8x32xf32>
    %106 = arith.mulf %99, %33 : vector<8x32xf32>
    %107 = arith.mulf %98, %104 : vector<8x32xf32>
    %108 = arith.addf %106, %107 : vector<8x32xf32>
    %109 = math.tanh %108 : vector<8x32xf32>
    %110 = arith.mulf %105, %109 : vector<8x32xf32>
    %111 = arith.truncf %110 : vector<8x32xf32> to vector<8x32xbf16>
    %c0_40 = arith.constant 0 : index
    %c0_41 = arith.constant 0 : index
    %112 = vector.load %arg4[%c0_40, %c0_41] : memref<32x128xbf16, #tpu.memory_space<vmem>>, vector<32x128xbf16>
    %cst_42 = arith.constant dense<0.000000e+00> : vector<8x128xf32>
    %113 = tpu.matmul %111, %112, %cst_42 {dimension_numbers = #tpu.dot_dimension_numbers<[1], [0], [0], [1], [0, 0, 1, 1], [], []>} : vector<8x32xbf16>, vector<32x128xbf16>, vector<8x128xf32> -> vector<8x128xf32>
    %114 = arith.truncf %61 : vector<8x32xf32> to vector<8x32xbf16>
    %c0_43 = arith.constant 0 : index
    %c0_44 = arith.constant 0 : index
    %115 = vector.load %arg5[%c0_43, %c0_44] : memref<32x128xbf16, #tpu.memory_space<vmem>>, vector<32x128xbf16>
    %cst_45 = arith.constant dense<0.000000e+00> : vector<8x128xf32>
    %116 = tpu.matmul %114, %115, %cst_45 {dimension_numbers = #tpu.dot_dimension_numbers<[1], [0], [0], [1], [0, 0, 1, 1], [], []>} : vector<8x32xbf16>, vector<32x128xbf16>, vector<8x128xf32> -> vector<8x128xf32>
    %117 = arith.addf %113, %116 : vector<8x128xf32>
    %118 = arith.addf %117, %8 : vector<8x128xf32>
    %119 = arith.negf %118 : vector<8x128xf32>
    %120 = math.exp %119 : vector<8x128xf32>
    %cst_46 = arith.constant 1.000000e+00 : f32
    %121 = vector.broadcast %cst_46 : f32 to vector<8x128xf32>
    %122 = arith.addf %121, %120 : vector<8x128xf32>
    %123 = arith.divf %121, %122 : vector<8x128xf32>
    %124 = vector.extract_strided_slice %123 {offsets = [0, 0], sizes = [8, 32], strides = [1, 1]} : vector<8x128xf32> to vector<8x32xf32>
    %125 = vector.extract_strided_slice %123 {offsets = [0, 32], sizes = [8, 32], strides = [1, 1]} : vector<8x128xf32> to vector<8x32xf32>
    %126 = vector.extract_strided_slice %123 {offsets = [0, 64], sizes = [8, 32], strides = [1, 1]} : vector<8x128xf32> to vector<8x32xf32>
    %cst_47 = arith.constant 2.000000e+00 : f32
    %127 = vector.broadcast %cst_47 : f32 to vector<8x32xf32>
    %128 = arith.mulf %127, %126 : vector<8x32xf32>
    %cst_48 = arith.constant 1.000000e+00 : f32
    %129 = vector.broadcast %cst_48 : f32 to vector<8x32xf32>
    %130 = arith.subf %128, %129 : vector<8x32xf32>
    %131 = vector.extract_strided_slice %123 {offsets = [0, 96], sizes = [8, 32], strides = [1, 1]} : vector<8x128xf32> to vector<8x32xf32>
    %132 = arith.mulf %125, %59 : vector<8x32xf32>
    %133 = arith.mulf %124, %130 : vector<8x32xf32>
    %134 = arith.addf %132, %133 : vector<8x32xf32>
    %135 = math.tanh %134 : vector<8x32xf32>
    %136 = arith.mulf %131, %135 : vector<8x32xf32>
    %137 = arith.truncf %136 : vector<8x32xf32> to vector<8x32xbf16>
    %c0_49 = arith.constant 0 : index
    %c0_50 = arith.constant 0 : index
    %138 = vector.load %arg6[%c0_49, %c0_50] : memref<32x128xbf16, #tpu.memory_space<vmem>>, vector<32x128xbf16>
    %cst_51 = arith.constant dense<0.000000e+00> : vector<8x128xf32>
    %139 = tpu.matmul %137, %138, %cst_51 {dimension_numbers = #tpu.dot_dimension_numbers<[1], [0], [0], [1], [0, 0, 1, 1], [], []>} : vector<8x32xbf16>, vector<32x128xbf16>, vector<8x128xf32> -> vector<8x128xf32>
    %140 = arith.truncf %87 : vector<8x32xf32> to vector<8x32xbf16>
    %c0_52 = arith.constant 0 : index
    %c0_53 = arith.constant 0 : index
    %141 = vector.load %arg7[%c0_52, %c0_53] : memref<32x128xbf16, #tpu.memory_space<vmem>>, vector<32x128xbf16>
    %cst_54 = arith.constant dense<0.000000e+00> : vector<8x128xf32>
    %142 = tpu.matmul %140, %141, %cst_54 {dimension_numbers = #tpu.dot_dimension_numbers<[1], [0], [0], [1], [0, 0, 1, 1], [], []>} : vector<8x32xbf16>, vector<32x128xbf16>, vector<8x128xf32> -> vector<8x128xf32>
    %143 = arith.addf %139, %142 : vector<8x128xf32>
    %144 = arith.addf %143, %11 : vector<8x128xf32>
    %145 = arith.negf %144 : vector<8x128xf32>
    %146 = math.exp %145 : vector<8x128xf32>
    %cst_55 = arith.constant 1.000000e+00 : f32
    %147 = vector.broadcast %cst_55 : f32 to vector<8x128xf32>
    %148 = arith.addf %147, %146 : vector<8x128xf32>
    %149 = arith.divf %147, %148 : vector<8x128xf32>
    %150 = vector.extract_strided_slice %149 {offsets = [0, 0], sizes = [8, 32], strides = [1, 1]} : vector<8x128xf32> to vector<8x32xf32>
    %151 = vector.extract_strided_slice %149 {offsets = [0, 32], sizes = [8, 32], strides = [1, 1]} : vector<8x128xf32> to vector<8x32xf32>
    %152 = vector.extract_strided_slice %149 {offsets = [0, 64], sizes = [8, 32], strides = [1, 1]} : vector<8x128xf32> to vector<8x32xf32>
    %cst_56 = arith.constant 2.000000e+00 : f32
    %153 = vector.broadcast %cst_56 : f32 to vector<8x32xf32>
    %154 = arith.mulf %153, %152 : vector<8x32xf32>
    %cst_57 = arith.constant 1.000000e+00 : f32
    %155 = vector.broadcast %cst_57 : f32 to vector<8x32xf32>
    %156 = arith.subf %154, %155 : vector<8x32xf32>
    %157 = vector.extract_strided_slice %149 {offsets = [0, 96], sizes = [8, 32], strides = [1, 1]} : vector<8x128xf32> to vector<8x32xf32>
    %158 = arith.mulf %151, %85 : vector<8x32xf32>
    %159 = arith.mulf %150, %156 : vector<8x32xf32>
    %160 = arith.addf %158, %159 : vector<8x32xf32>
    %161 = math.tanh %160 : vector<8x32xf32>
    %162 = arith.mulf %157, %161 : vector<8x32xf32>
    %163 = vector.extract_strided_slice %5 {offsets = [16, 0], sizes = [8, 128], strides = [1, 1]} : vector<64x128xf32> to vector<8x128xf32>
    %164 = arith.truncf %110 : vector<8x32xf32> to vector<8x32xbf16>
    %c0_58 = arith.constant 0 : index
    %c0_59 = arith.constant 0 : index
    %165 = vector.load %arg3[%c0_58, %c0_59] : memref<32x128xbf16, #tpu.memory_space<vmem>>, vector<32x128xbf16>
    %cst_60 = arith.constant dense<0.000000e+00> : vector<8x128xf32>
    %166 = tpu.matmul %164, %165, %cst_60 {dimension_numbers = #tpu.dot_dimension_numbers<[1], [0], [0], [1], [0, 0, 1, 1], [], []>} : vector<8x32xbf16>, vector<32x128xbf16>, vector<8x128xf32> -> vector<8x128xf32>
    %167 = arith.addf %163, %166 : vector<8x128xf32>
    %168 = arith.negf %167 : vector<8x128xf32>
    %169 = math.exp %168 : vector<8x128xf32>
    %cst_61 = arith.constant 1.000000e+00 : f32
    %170 = vector.broadcast %cst_61 : f32 to vector<8x128xf32>
    %171 = arith.addf %170, %169 : vector<8x128xf32>
    %172 = arith.divf %170, %171 : vector<8x128xf32>
    %173 = vector.extract_strided_slice %172 {offsets = [0, 0], sizes = [8, 32], strides = [1, 1]} : vector<8x128xf32> to vector<8x32xf32>
    %174 = vector.extract_strided_slice %172 {offsets = [0, 32], sizes = [8, 32], strides = [1, 1]} : vector<8x128xf32> to vector<8x32xf32>
    %175 = vector.extract_strided_slice %172 {offsets = [0, 64], sizes = [8, 32], strides = [1, 1]} : vector<8x128xf32> to vector<8x32xf32>
    %cst_62 = arith.constant 2.000000e+00 : f32
    %176 = vector.broadcast %cst_62 : f32 to vector<8x32xf32>
    %177 = arith.mulf %176, %175 : vector<8x32xf32>
    %cst_63 = arith.constant 1.000000e+00 : f32
    %178 = vector.broadcast %cst_63 : f32 to vector<8x32xf32>
    %179 = arith.subf %177, %178 : vector<8x32xf32>
    %180 = vector.extract_strided_slice %172 {offsets = [0, 96], sizes = [8, 32], strides = [1, 1]} : vector<8x128xf32> to vector<8x32xf32>
    %181 = arith.mulf %174, %108 : vector<8x32xf32>
    %182 = arith.mulf %173, %179 : vector<8x32xf32>
    %183 = arith.addf %181, %182 : vector<8x32xf32>
    %184 = math.tanh %183 : vector<8x32xf32>
    %185 = arith.mulf %180, %184 : vector<8x32xf32>
    %186 = arith.truncf %185 : vector<8x32xf32> to vector<8x32xbf16>
    %c0_64 = arith.constant 0 : index
    %c0_65 = arith.constant 0 : index
    %187 = vector.load %arg4[%c0_64, %c0_65] : memref<32x128xbf16, #tpu.memory_space<vmem>>, vector<32x128xbf16>
    %cst_66 = arith.constant dense<0.000000e+00> : vector<8x128xf32>
    %188 = tpu.matmul %186, %187, %cst_66 {dimension_numbers = #tpu.dot_dimension_numbers<[1], [0], [0], [1], [0, 0, 1, 1], [], []>} : vector<8x32xbf16>, vector<32x128xbf16>, vector<8x128xf32> -> vector<8x128xf32>
    %189 = arith.truncf %136 : vector<8x32xf32> to vector<8x32xbf16>
    %c0_67 = arith.constant 0 : index
    %c0_68 = arith.constant 0 : index
    %190 = vector.load %arg5[%c0_67, %c0_68] : memref<32x128xbf16, #tpu.memory_space<vmem>>, vector<32x128xbf16>
    %cst_69 = arith.constant dense<0.000000e+00> : vector<8x128xf32>
    %191 = tpu.matmul %189, %190, %cst_69 {dimension_numbers = #tpu.dot_dimension_numbers<[1], [0], [0], [1], [0, 0, 1, 1], [], []>} : vector<8x32xbf16>, vector<32x128xbf16>, vector<8x128xf32> -> vector<8x128xf32>
    %192 = arith.addf %188, %191 : vector<8x128xf32>
    %193 = arith.addf %192, %8 : vector<8x128xf32>
    %194 = arith.negf %193 : vector<8x128xf32>
    %195 = math.exp %194 : vector<8x128xf32>
    %cst_70 = arith.constant 1.000000e+00 : f32
    %196 = vector.broadcast %cst_70 : f32 to vector<8x128xf32>
    %197 = arith.addf %196, %195 : vector<8x128xf32>
    %198 = arith.divf %196, %197 : vector<8x128xf32>
    %199 = vector.extract_strided_slice %198 {offsets = [0, 0], sizes = [8, 32], strides = [1, 1]} : vector<8x128xf32> to vector<8x32xf32>
    %200 = vector.extract_strided_slice %198 {offsets = [0, 32], sizes = [8, 32], strides = [1, 1]} : vector<8x128xf32> to vector<8x32xf32>
    %201 = vector.extract_strided_slice %198 {offsets = [0, 64], sizes = [8, 32], strides = [1, 1]} : vector<8x128xf32> to vector<8x32xf32>
    %cst_71 = arith.constant 2.000000e+00 : f32
    %202 = vector.broadcast %cst_71 : f32 to vector<8x32xf32>
    %203 = arith.mulf %202, %201 : vector<8x32xf32>
    %cst_72 = arith.constant 1.000000e+00 : f32
    %204 = vector.broadcast %cst_72 : f32 to vector<8x32xf32>
    %205 = arith.subf %203, %204 : vector<8x32xf32>
    %206 = vector.extract_strided_slice %198 {offsets = [0, 96], sizes = [8, 32], strides = [1, 1]} : vector<8x128xf32> to vector<8x32xf32>
    %207 = arith.mulf %200, %134 : vector<8x32xf32>
    %208 = arith.mulf %199, %205 : vector<8x32xf32>
    %209 = arith.addf %207, %208 : vector<8x32xf32>
    %210 = math.tanh %209 : vector<8x32xf32>
    %211 = arith.mulf %206, %210 : vector<8x32xf32>
    %212 = arith.truncf %211 : vector<8x32xf32> to vector<8x32xbf16>
    %c0_73 = arith.constant 0 : index
    %c0_74 = arith.constant 0 : index
    %213 = vector.load %arg6[%c0_73, %c0_74] : memref<32x128xbf16, #tpu.memory_space<vmem>>, vector<32x128xbf16>
    %cst_75 = arith.constant dense<0.000000e+00> : vector<8x128xf32>
    %214 = tpu.matmul %212, %213, %cst_75 {dimension_numbers = #tpu.dot_dimension_numbers<[1], [0], [0], [1], [0, 0, 1, 1], [], []>} : vector<8x32xbf16>, vector<32x128xbf16>, vector<8x128xf32> -> vector<8x128xf32>
    %215 = arith.truncf %162 : vector<8x32xf32> to vector<8x32xbf16>
    %c0_76 = arith.constant 0 : index
    %c0_77 = arith.constant 0 : index
    %216 = vector.load %arg7[%c0_76, %c0_77] : memref<32x128xbf16, #tpu.memory_space<vmem>>, vector<32x128xbf16>
    %cst_78 = arith.constant dense<0.000000e+00> : vector<8x128xf32>
    %217 = tpu.matmul %215, %216, %cst_78 {dimension_numbers = #tpu.dot_dimension_numbers<[1], [0], [0], [1], [0, 0, 1, 1], [], []>} : vector<8x32xbf16>, vector<32x128xbf16>, vector<8x128xf32> -> vector<8x128xf32>
    %218 = arith.addf %214, %217 : vector<8x128xf32>
    %219 = arith.addf %218, %11 : vector<8x128xf32>
    %220 = arith.negf %219 : vector<8x128xf32>
    %221 = math.exp %220 : vector<8x128xf32>
    %cst_79 = arith.constant 1.000000e+00 : f32
    %222 = vector.broadcast %cst_79 : f32 to vector<8x128xf32>
    %223 = arith.addf %222, %221 : vector<8x128xf32>
    %224 = arith.divf %222, %223 : vector<8x128xf32>
    %225 = vector.extract_strided_slice %224 {offsets = [0, 0], sizes = [8, 32], strides = [1, 1]} : vector<8x128xf32> to vector<8x32xf32>
    %226 = vector.extract_strided_slice %224 {offsets = [0, 32], sizes = [8, 32], strides = [1, 1]} : vector<8x128xf32> to vector<8x32xf32>
    %227 = vector.extract_strided_slice %224 {offsets = [0, 64], sizes = [8, 32], strides = [1, 1]} : vector<8x128xf32> to vector<8x32xf32>
    %cst_80 = arith.constant 2.000000e+00 : f32
    %228 = vector.broadcast %cst_80 : f32 to vector<8x32xf32>
    %229 = arith.mulf %228, %227 : vector<8x32xf32>
    %cst_81 = arith.constant 1.000000e+00 : f32
    %230 = vector.broadcast %cst_81 : f32 to vector<8x32xf32>
    %231 = arith.subf %229, %230 : vector<8x32xf32>
    %232 = vector.extract_strided_slice %224 {offsets = [0, 96], sizes = [8, 32], strides = [1, 1]} : vector<8x128xf32> to vector<8x32xf32>
    %233 = arith.mulf %226, %160 : vector<8x32xf32>
    %234 = arith.mulf %225, %231 : vector<8x32xf32>
    %235 = arith.addf %233, %234 : vector<8x32xf32>
    %236 = math.tanh %235 : vector<8x32xf32>
    %237 = arith.mulf %232, %236 : vector<8x32xf32>
    %238 = vector.extract_strided_slice %5 {offsets = [24, 0], sizes = [8, 128], strides = [1, 1]} : vector<64x128xf32> to vector<8x128xf32>
    %239 = arith.truncf %185 : vector<8x32xf32> to vector<8x32xbf16>
    %c0_82 = arith.constant 0 : index
    %c0_83 = arith.constant 0 : index
    %240 = vector.load %arg3[%c0_82, %c0_83] : memref<32x128xbf16, #tpu.memory_space<vmem>>, vector<32x128xbf16>
    %cst_84 = arith.constant dense<0.000000e+00> : vector<8x128xf32>
    %241 = tpu.matmul %239, %240, %cst_84 {dimension_numbers = #tpu.dot_dimension_numbers<[1], [0], [0], [1], [0, 0, 1, 1], [], []>} : vector<8x32xbf16>, vector<32x128xbf16>, vector<8x128xf32> -> vector<8x128xf32>
    %242 = arith.addf %238, %241 : vector<8x128xf32>
    %243 = arith.negf %242 : vector<8x128xf32>
    %244 = math.exp %243 : vector<8x128xf32>
    %cst_85 = arith.constant 1.000000e+00 : f32
    %245 = vector.broadcast %cst_85 : f32 to vector<8x128xf32>
    %246 = arith.addf %245, %244 : vector<8x128xf32>
    %247 = arith.divf %245, %246 : vector<8x128xf32>
    %248 = vector.extract_strided_slice %247 {offsets = [0, 0], sizes = [8, 32], strides = [1, 1]} : vector<8x128xf32> to vector<8x32xf32>
    %249 = vector.extract_strided_slice %247 {offsets = [0, 32], sizes = [8, 32], strides = [1, 1]} : vector<8x128xf32> to vector<8x32xf32>
    %250 = vector.extract_strided_slice %247 {offsets = [0, 64], sizes = [8, 32], strides = [1, 1]} : vector<8x128xf32> to vector<8x32xf32>
    %cst_86 = arith.constant 2.000000e+00 : f32
    %251 = vector.broadcast %cst_86 : f32 to vector<8x32xf32>
    %252 = arith.mulf %251, %250 : vector<8x32xf32>
    %cst_87 = arith.constant 1.000000e+00 : f32
    %253 = vector.broadcast %cst_87 : f32 to vector<8x32xf32>
    %254 = arith.subf %252, %253 : vector<8x32xf32>
    %255 = vector.extract_strided_slice %247 {offsets = [0, 96], sizes = [8, 32], strides = [1, 1]} : vector<8x128xf32> to vector<8x32xf32>
    %256 = arith.mulf %249, %183 : vector<8x32xf32>
    %257 = arith.mulf %248, %254 : vector<8x32xf32>
    %258 = arith.addf %256, %257 : vector<8x32xf32>
    %259 = math.tanh %258 : vector<8x32xf32>
    %260 = arith.mulf %255, %259 : vector<8x32xf32>
    %261 = arith.truncf %260 : vector<8x32xf32> to vector<8x32xbf16>
    %c0_88 = arith.constant 0 : index
    %c0_89 = arith.constant 0 : index
    %262 = vector.load %arg4[%c0_88, %c0_89] : memref<32x128xbf16, #tpu.memory_space<vmem>>, vector<32x128xbf16>
    %cst_90 = arith.constant dense<0.000000e+00> : vector<8x128xf32>
    %263 = tpu.matmul %261, %262, %cst_90 {dimension_numbers = #tpu.dot_dimension_numbers<[1], [0], [0], [1], [0, 0, 1, 1], [], []>} : vector<8x32xbf16>, vector<32x128xbf16>, vector<8x128xf32> -> vector<8x128xf32>
    %264 = arith.truncf %211 : vector<8x32xf32> to vector<8x32xbf16>
    %c0_91 = arith.constant 0 : index
    %c0_92 = arith.constant 0 : index
    %265 = vector.load %arg5[%c0_91, %c0_92] : memref<32x128xbf16, #tpu.memory_space<vmem>>, vector<32x128xbf16>
    %cst_93 = arith.constant dense<0.000000e+00> : vector<8x128xf32>
    %266 = tpu.matmul %264, %265, %cst_93 {dimension_numbers = #tpu.dot_dimension_numbers<[1], [0], [0], [1], [0, 0, 1, 1], [], []>} : vector<8x32xbf16>, vector<32x128xbf16>, vector<8x128xf32> -> vector<8x128xf32>
    %267 = arith.addf %263, %266 : vector<8x128xf32>
    %268 = arith.addf %267, %8 : vector<8x128xf32>
    %269 = arith.negf %268 : vector<8x128xf32>
    %270 = math.exp %269 : vector<8x128xf32>
    %cst_94 = arith.constant 1.000000e+00 : f32
    %271 = vector.broadcast %cst_94 : f32 to vector<8x128xf32>
    %272 = arith.addf %271, %270 : vector<8x128xf32>
    %273 = arith.divf %271, %272 : vector<8x128xf32>
    %274 = vector.extract_strided_slice %273 {offsets = [0, 0], sizes = [8, 32], strides = [1, 1]} : vector<8x128xf32> to vector<8x32xf32>
    %275 = vector.extract_strided_slice %273 {offsets = [0, 32], sizes = [8, 32], strides = [1, 1]} : vector<8x128xf32> to vector<8x32xf32>
    %276 = vector.extract_strided_slice %273 {offsets = [0, 64], sizes = [8, 32], strides = [1, 1]} : vector<8x128xf32> to vector<8x32xf32>
    %cst_95 = arith.constant 2.000000e+00 : f32
    %277 = vector.broadcast %cst_95 : f32 to vector<8x32xf32>
    %278 = arith.mulf %277, %276 : vector<8x32xf32>
    %cst_96 = arith.constant 1.000000e+00 : f32
    %279 = vector.broadcast %cst_96 : f32 to vector<8x32xf32>
    %280 = arith.subf %278, %279 : vector<8x32xf32>
    %281 = vector.extract_strided_slice %273 {offsets = [0, 96], sizes = [8, 32], strides = [1, 1]} : vector<8x128xf32> to vector<8x32xf32>
    %282 = arith.mulf %275, %209 : vector<8x32xf32>
    %283 = arith.mulf %274, %280 : vector<8x32xf32>
    %284 = arith.addf %282, %283 : vector<8x32xf32>
    %285 = math.tanh %284 : vector<8x32xf32>
    %286 = arith.mulf %281, %285 : vector<8x32xf32>
    %287 = arith.truncf %286 : vector<8x32xf32> to vector<8x32xbf16>
    %c0_97 = arith.constant 0 : index
    %c0_98 = arith.constant 0 : index
    %288 = vector.load %arg6[%c0_97, %c0_98] : memref<32x128xbf16, #tpu.memory_space<vmem>>, vector<32x128xbf16>
    %cst_99 = arith.constant dense<0.000000e+00> : vector<8x128xf32>
    %289 = tpu.matmul %287, %288, %cst_99 {dimension_numbers = #tpu.dot_dimension_numbers<[1], [0], [0], [1], [0, 0, 1, 1], [], []>} : vector<8x32xbf16>, vector<32x128xbf16>, vector<8x128xf32> -> vector<8x128xf32>
    %290 = arith.truncf %237 : vector<8x32xf32> to vector<8x32xbf16>
    %c0_100 = arith.constant 0 : index
    %c0_101 = arith.constant 0 : index
    %291 = vector.load %arg7[%c0_100, %c0_101] : memref<32x128xbf16, #tpu.memory_space<vmem>>, vector<32x128xbf16>
    %cst_102 = arith.constant dense<0.000000e+00> : vector<8x128xf32>
    %292 = tpu.matmul %290, %291, %cst_102 {dimension_numbers = #tpu.dot_dimension_numbers<[1], [0], [0], [1], [0, 0, 1, 1], [], []>} : vector<8x32xbf16>, vector<32x128xbf16>, vector<8x128xf32> -> vector<8x128xf32>
    %293 = arith.addf %289, %292 : vector<8x128xf32>
    %294 = arith.addf %293, %11 : vector<8x128xf32>
    %295 = arith.negf %294 : vector<8x128xf32>
    %296 = math.exp %295 : vector<8x128xf32>
    %cst_103 = arith.constant 1.000000e+00 : f32
    %297 = vector.broadcast %cst_103 : f32 to vector<8x128xf32>
    %298 = arith.addf %297, %296 : vector<8x128xf32>
    %299 = arith.divf %297, %298 : vector<8x128xf32>
    %300 = vector.extract_strided_slice %299 {offsets = [0, 0], sizes = [8, 32], strides = [1, 1]} : vector<8x128xf32> to vector<8x32xf32>
    %301 = vector.extract_strided_slice %299 {offsets = [0, 32], sizes = [8, 32], strides = [1, 1]} : vector<8x128xf32> to vector<8x32xf32>
    %302 = vector.extract_strided_slice %299 {offsets = [0, 64], sizes = [8, 32], strides = [1, 1]} : vector<8x128xf32> to vector<8x32xf32>
    %cst_104 = arith.constant 2.000000e+00 : f32
    %303 = vector.broadcast %cst_104 : f32 to vector<8x32xf32>
    %304 = arith.mulf %303, %302 : vector<8x32xf32>
    %cst_105 = arith.constant 1.000000e+00 : f32
    %305 = vector.broadcast %cst_105 : f32 to vector<8x32xf32>
    %306 = arith.subf %304, %305 : vector<8x32xf32>
    %307 = vector.extract_strided_slice %299 {offsets = [0, 96], sizes = [8, 32], strides = [1, 1]} : vector<8x128xf32> to vector<8x32xf32>
    %308 = arith.mulf %301, %235 : vector<8x32xf32>
    %309 = arith.mulf %300, %306 : vector<8x32xf32>
    %310 = arith.addf %308, %309 : vector<8x32xf32>
    %311 = math.tanh %310 : vector<8x32xf32>
    %312 = arith.mulf %307, %311 : vector<8x32xf32>
    %313 = vector.extract_strided_slice %5 {offsets = [32, 0], sizes = [8, 128], strides = [1, 1]} : vector<64x128xf32> to vector<8x128xf32>
    %314 = arith.truncf %260 : vector<8x32xf32> to vector<8x32xbf16>
    %c0_106 = arith.constant 0 : index
    %c0_107 = arith.constant 0 : index
    %315 = vector.load %arg3[%c0_106, %c0_107] : memref<32x128xbf16, #tpu.memory_space<vmem>>, vector<32x128xbf16>
    %cst_108 = arith.constant dense<0.000000e+00> : vector<8x128xf32>
    %316 = tpu.matmul %314, %315, %cst_108 {dimension_numbers = #tpu.dot_dimension_numbers<[1], [0], [0], [1], [0, 0, 1, 1], [], []>} : vector<8x32xbf16>, vector<32x128xbf16>, vector<8x128xf32> -> vector<8x128xf32>
    %317 = arith.addf %313, %316 : vector<8x128xf32>
    %318 = arith.negf %317 : vector<8x128xf32>
    %319 = math.exp %318 : vector<8x128xf32>
    %cst_109 = arith.constant 1.000000e+00 : f32
    %320 = vector.broadcast %cst_109 : f32 to vector<8x128xf32>
    %321 = arith.addf %320, %319 : vector<8x128xf32>
    %322 = arith.divf %320, %321 : vector<8x128xf32>
    %323 = vector.extract_strided_slice %322 {offsets = [0, 0], sizes = [8, 32], strides = [1, 1]} : vector<8x128xf32> to vector<8x32xf32>
    %324 = vector.extract_strided_slice %322 {offsets = [0, 32], sizes = [8, 32], strides = [1, 1]} : vector<8x128xf32> to vector<8x32xf32>
    %325 = vector.extract_strided_slice %322 {offsets = [0, 64], sizes = [8, 32], strides = [1, 1]} : vector<8x128xf32> to vector<8x32xf32>
    %cst_110 = arith.constant 2.000000e+00 : f32
    %326 = vector.broadcast %cst_110 : f32 to vector<8x32xf32>
    %327 = arith.mulf %326, %325 : vector<8x32xf32>
    %cst_111 = arith.constant 1.000000e+00 : f32
    %328 = vector.broadcast %cst_111 : f32 to vector<8x32xf32>
    %329 = arith.subf %327, %328 : vector<8x32xf32>
    %330 = vector.extract_strided_slice %322 {offsets = [0, 96], sizes = [8, 32], strides = [1, 1]} : vector<8x128xf32> to vector<8x32xf32>
    %331 = arith.mulf %324, %258 : vector<8x32xf32>
    %332 = arith.mulf %323, %329 : vector<8x32xf32>
    %333 = arith.addf %331, %332 : vector<8x32xf32>
    %334 = math.tanh %333 : vector<8x32xf32>
    %335 = arith.mulf %330, %334 : vector<8x32xf32>
    %336 = arith.truncf %335 : vector<8x32xf32> to vector<8x32xbf16>
    %c0_112 = arith.constant 0 : index
    %c0_113 = arith.constant 0 : index
    %337 = vector.load %arg4[%c0_112, %c0_113] : memref<32x128xbf16, #tpu.memory_space<vmem>>, vector<32x128xbf16>
    %cst_114 = arith.constant dense<0.000000e+00> : vector<8x128xf32>
    %338 = tpu.matmul %336, %337, %cst_114 {dimension_numbers = #tpu.dot_dimension_numbers<[1], [0], [0], [1], [0, 0, 1, 1], [], []>} : vector<8x32xbf16>, vector<32x128xbf16>, vector<8x128xf32> -> vector<8x128xf32>
    %339 = arith.truncf %286 : vector<8x32xf32> to vector<8x32xbf16>
    %c0_115 = arith.constant 0 : index
    %c0_116 = arith.constant 0 : index
    %340 = vector.load %arg5[%c0_115, %c0_116] : memref<32x128xbf16, #tpu.memory_space<vmem>>, vector<32x128xbf16>
    %cst_117 = arith.constant dense<0.000000e+00> : vector<8x128xf32>
    %341 = tpu.matmul %339, %340, %cst_117 {dimension_numbers = #tpu.dot_dimension_numbers<[1], [0], [0], [1], [0, 0, 1, 1], [], []>} : vector<8x32xbf16>, vector<32x128xbf16>, vector<8x128xf32> -> vector<8x128xf32>
    %342 = arith.addf %338, %341 : vector<8x128xf32>
    %343 = arith.addf %342, %8 : vector<8x128xf32>
    %344 = arith.negf %343 : vector<8x128xf32>
    %345 = math.exp %344 : vector<8x128xf32>
    %cst_118 = arith.constant 1.000000e+00 : f32
    %346 = vector.broadcast %cst_118 : f32 to vector<8x128xf32>
    %347 = arith.addf %346, %345 : vector<8x128xf32>
    %348 = arith.divf %346, %347 : vector<8x128xf32>
    %349 = vector.extract_strided_slice %348 {offsets = [0, 0], sizes = [8, 32], strides = [1, 1]} : vector<8x128xf32> to vector<8x32xf32>
    %350 = vector.extract_strided_slice %348 {offsets = [0, 32], sizes = [8, 32], strides = [1, 1]} : vector<8x128xf32> to vector<8x32xf32>
    %351 = vector.extract_strided_slice %348 {offsets = [0, 64], sizes = [8, 32], strides = [1, 1]} : vector<8x128xf32> to vector<8x32xf32>
    %cst_119 = arith.constant 2.000000e+00 : f32
    %352 = vector.broadcast %cst_119 : f32 to vector<8x32xf32>
    %353 = arith.mulf %352, %351 : vector<8x32xf32>
    %cst_120 = arith.constant 1.000000e+00 : f32
    %354 = vector.broadcast %cst_120 : f32 to vector<8x32xf32>
    %355 = arith.subf %353, %354 : vector<8x32xf32>
    %356 = vector.extract_strided_slice %348 {offsets = [0, 96], sizes = [8, 32], strides = [1, 1]} : vector<8x128xf32> to vector<8x32xf32>
    %357 = arith.mulf %350, %284 : vector<8x32xf32>
    %358 = arith.mulf %349, %355 : vector<8x32xf32>
    %359 = arith.addf %357, %358 : vector<8x32xf32>
    %360 = math.tanh %359 : vector<8x32xf32>
    %361 = arith.mulf %356, %360 : vector<8x32xf32>
    %362 = arith.truncf %361 : vector<8x32xf32> to vector<8x32xbf16>
    %c0_121 = arith.constant 0 : index
    %c0_122 = arith.constant 0 : index
    %363 = vector.load %arg6[%c0_121, %c0_122] : memref<32x128xbf16, #tpu.memory_space<vmem>>, vector<32x128xbf16>
    %cst_123 = arith.constant dense<0.000000e+00> : vector<8x128xf32>
    %364 = tpu.matmul %362, %363, %cst_123 {dimension_numbers = #tpu.dot_dimension_numbers<[1], [0], [0], [1], [0, 0, 1, 1], [], []>} : vector<8x32xbf16>, vector<32x128xbf16>, vector<8x128xf32> -> vector<8x128xf32>
    %365 = arith.truncf %312 : vector<8x32xf32> to vector<8x32xbf16>
    %c0_124 = arith.constant 0 : index
    %c0_125 = arith.constant 0 : index
    %366 = vector.load %arg7[%c0_124, %c0_125] : memref<32x128xbf16, #tpu.memory_space<vmem>>, vector<32x128xbf16>
    %cst_126 = arith.constant dense<0.000000e+00> : vector<8x128xf32>
    %367 = tpu.matmul %365, %366, %cst_126 {dimension_numbers = #tpu.dot_dimension_numbers<[1], [0], [0], [1], [0, 0, 1, 1], [], []>} : vector<8x32xbf16>, vector<32x128xbf16>, vector<8x128xf32> -> vector<8x128xf32>
    %368 = arith.addf %364, %367 : vector<8x128xf32>
    %369 = arith.addf %368, %11 : vector<8x128xf32>
    %370 = arith.negf %369 : vector<8x128xf32>
    %371 = math.exp %370 : vector<8x128xf32>
    %cst_127 = arith.constant 1.000000e+00 : f32
    %372 = vector.broadcast %cst_127 : f32 to vector<8x128xf32>
    %373 = arith.addf %372, %371 : vector<8x128xf32>
    %374 = arith.divf %372, %373 : vector<8x128xf32>
    %375 = vector.extract_strided_slice %374 {offsets = [0, 0], sizes = [8, 32], strides = [1, 1]} : vector<8x128xf32> to vector<8x32xf32>
    %376 = vector.extract_strided_slice %374 {offsets = [0, 32], sizes = [8, 32], strides = [1, 1]} : vector<8x128xf32> to vector<8x32xf32>
    %377 = vector.extract_strided_slice %374 {offsets = [0, 64], sizes = [8, 32], strides = [1, 1]} : vector<8x128xf32> to vector<8x32xf32>
    %cst_128 = arith.constant 2.000000e+00 : f32
    %378 = vector.broadcast %cst_128 : f32 to vector<8x32xf32>
    %379 = arith.mulf %378, %377 : vector<8x32xf32>
    %cst_129 = arith.constant 1.000000e+00 : f32
    %380 = vector.broadcast %cst_129 : f32 to vector<8x32xf32>
    %381 = arith.subf %379, %380 : vector<8x32xf32>
    %382 = vector.extract_strided_slice %374 {offsets = [0, 96], sizes = [8, 32], strides = [1, 1]} : vector<8x128xf32> to vector<8x32xf32>
    %383 = arith.mulf %376, %310 : vector<8x32xf32>
    %384 = arith.mulf %375, %381 : vector<8x32xf32>
    %385 = arith.addf %383, %384 : vector<8x32xf32>
    %386 = math.tanh %385 : vector<8x32xf32>
    %387 = arith.mulf %382, %386 : vector<8x32xf32>
    %388 = vector.extract_strided_slice %5 {offsets = [40, 0], sizes = [8, 128], strides = [1, 1]} : vector<64x128xf32> to vector<8x128xf32>
    %389 = arith.truncf %335 : vector<8x32xf32> to vector<8x32xbf16>
    %c0_130 = arith.constant 0 : index
    %c0_131 = arith.constant 0 : index
    %390 = vector.load %arg3[%c0_130, %c0_131] : memref<32x128xbf16, #tpu.memory_space<vmem>>, vector<32x128xbf16>
    %cst_132 = arith.constant dense<0.000000e+00> : vector<8x128xf32>
    %391 = tpu.matmul %389, %390, %cst_132 {dimension_numbers = #tpu.dot_dimension_numbers<[1], [0], [0], [1], [0, 0, 1, 1], [], []>} : vector<8x32xbf16>, vector<32x128xbf16>, vector<8x128xf32> -> vector<8x128xf32>
    %392 = arith.addf %388, %391 : vector<8x128xf32>
    %393 = arith.negf %392 : vector<8x128xf32>
    %394 = math.exp %393 : vector<8x128xf32>
    %cst_133 = arith.constant 1.000000e+00 : f32
    %395 = vector.broadcast %cst_133 : f32 to vector<8x128xf32>
    %396 = arith.addf %395, %394 : vector<8x128xf32>
    %397 = arith.divf %395, %396 : vector<8x128xf32>
    %398 = vector.extract_strided_slice %397 {offsets = [0, 0], sizes = [8, 32], strides = [1, 1]} : vector<8x128xf32> to vector<8x32xf32>
    %399 = vector.extract_strided_slice %397 {offsets = [0, 32], sizes = [8, 32], strides = [1, 1]} : vector<8x128xf32> to vector<8x32xf32>
    %400 = vector.extract_strided_slice %397 {offsets = [0, 64], sizes = [8, 32], strides = [1, 1]} : vector<8x128xf32> to vector<8x32xf32>
    %cst_134 = arith.constant 2.000000e+00 : f32
    %401 = vector.broadcast %cst_134 : f32 to vector<8x32xf32>
    %402 = arith.mulf %401, %400 : vector<8x32xf32>
    %cst_135 = arith.constant 1.000000e+00 : f32
    %403 = vector.broadcast %cst_135 : f32 to vector<8x32xf32>
    %404 = arith.subf %402, %403 : vector<8x32xf32>
    %405 = vector.extract_strided_slice %397 {offsets = [0, 96], sizes = [8, 32], strides = [1, 1]} : vector<8x128xf32> to vector<8x32xf32>
    %406 = arith.mulf %399, %333 : vector<8x32xf32>
    %407 = arith.mulf %398, %404 : vector<8x32xf32>
    %408 = arith.addf %406, %407 : vector<8x32xf32>
    %409 = math.tanh %408 : vector<8x32xf32>
    %410 = arith.mulf %405, %409 : vector<8x32xf32>
    %411 = arith.truncf %410 : vector<8x32xf32> to vector<8x32xbf16>
    %c0_136 = arith.constant 0 : index
    %c0_137 = arith.constant 0 : index
    %412 = vector.load %arg4[%c0_136, %c0_137] : memref<32x128xbf16, #tpu.memory_space<vmem>>, vector<32x128xbf16>
    %cst_138 = arith.constant dense<0.000000e+00> : vector<8x128xf32>
    %413 = tpu.matmul %411, %412, %cst_138 {dimension_numbers = #tpu.dot_dimension_numbers<[1], [0], [0], [1], [0, 0, 1, 1], [], []>} : vector<8x32xbf16>, vector<32x128xbf16>, vector<8x128xf32> -> vector<8x128xf32>
    %414 = arith.truncf %361 : vector<8x32xf32> to vector<8x32xbf16>
    %c0_139 = arith.constant 0 : index
    %c0_140 = arith.constant 0 : index
    %415 = vector.load %arg5[%c0_139, %c0_140] : memref<32x128xbf16, #tpu.memory_space<vmem>>, vector<32x128xbf16>
    %cst_141 = arith.constant dense<0.000000e+00> : vector<8x128xf32>
    %416 = tpu.matmul %414, %415, %cst_141 {dimension_numbers = #tpu.dot_dimension_numbers<[1], [0], [0], [1], [0, 0, 1, 1], [], []>} : vector<8x32xbf16>, vector<32x128xbf16>, vector<8x128xf32> -> vector<8x128xf32>
    %417 = arith.addf %413, %416 : vector<8x128xf32>
    %418 = arith.addf %417, %8 : vector<8x128xf32>
    %419 = arith.negf %418 : vector<8x128xf32>
    %420 = math.exp %419 : vector<8x128xf32>
    %cst_142 = arith.constant 1.000000e+00 : f32
    %421 = vector.broadcast %cst_142 : f32 to vector<8x128xf32>
    %422 = arith.addf %421, %420 : vector<8x128xf32>
    %423 = arith.divf %421, %422 : vector<8x128xf32>
    %424 = vector.extract_strided_slice %423 {offsets = [0, 0], sizes = [8, 32], strides = [1, 1]} : vector<8x128xf32> to vector<8x32xf32>
    %425 = vector.extract_strided_slice %423 {offsets = [0, 32], sizes = [8, 32], strides = [1, 1]} : vector<8x128xf32> to vector<8x32xf32>
    %426 = vector.extract_strided_slice %423 {offsets = [0, 64], sizes = [8, 32], strides = [1, 1]} : vector<8x128xf32> to vector<8x32xf32>
    %cst_143 = arith.constant 2.000000e+00 : f32
    %427 = vector.broadcast %cst_143 : f32 to vector<8x32xf32>
    %428 = arith.mulf %427, %426 : vector<8x32xf32>
    %cst_144 = arith.constant 1.000000e+00 : f32
    %429 = vector.broadcast %cst_144 : f32 to vector<8x32xf32>
    %430 = arith.subf %428, %429 : vector<8x32xf32>
    %431 = vector.extract_strided_slice %423 {offsets = [0, 96], sizes = [8, 32], strides = [1, 1]} : vector<8x128xf32> to vector<8x32xf32>
    %432 = arith.mulf %425, %359 : vector<8x32xf32>
    %433 = arith.mulf %424, %430 : vector<8x32xf32>
    %434 = arith.addf %432, %433 : vector<8x32xf32>
    %435 = math.tanh %434 : vector<8x32xf32>
    %436 = arith.mulf %431, %435 : vector<8x32xf32>
    %437 = arith.truncf %436 : vector<8x32xf32> to vector<8x32xbf16>
    %c0_145 = arith.constant 0 : index
    %c0_146 = arith.constant 0 : index
    %438 = vector.load %arg6[%c0_145, %c0_146] : memref<32x128xbf16, #tpu.memory_space<vmem>>, vector<32x128xbf16>
    %cst_147 = arith.constant dense<0.000000e+00> : vector<8x128xf32>
    %439 = tpu.matmul %437, %438, %cst_147 {dimension_numbers = #tpu.dot_dimension_numbers<[1], [0], [0], [1], [0, 0, 1, 1], [], []>} : vector<8x32xbf16>, vector<32x128xbf16>, vector<8x128xf32> -> vector<8x128xf32>
    %440 = arith.truncf %387 : vector<8x32xf32> to vector<8x32xbf16>
    %c0_148 = arith.constant 0 : index
    %c0_149 = arith.constant 0 : index
    %441 = vector.load %arg7[%c0_148, %c0_149] : memref<32x128xbf16, #tpu.memory_space<vmem>>, vector<32x128xbf16>
    %cst_150 = arith.constant dense<0.000000e+00> : vector<8x128xf32>
    %442 = tpu.matmul %440, %441, %cst_150 {dimension_numbers = #tpu.dot_dimension_numbers<[1], [0], [0], [1], [0, 0, 1, 1], [], []>} : vector<8x32xbf16>, vector<32x128xbf16>, vector<8x128xf32> -> vector<8x128xf32>
    %443 = arith.addf %439, %442 : vector<8x128xf32>
    %444 = arith.addf %443, %11 : vector<8x128xf32>
    %445 = arith.negf %444 : vector<8x128xf32>
    %446 = math.exp %445 : vector<8x128xf32>
    %cst_151 = arith.constant 1.000000e+00 : f32
    %447 = vector.broadcast %cst_151 : f32 to vector<8x128xf32>
    %448 = arith.addf %447, %446 : vector<8x128xf32>
    %449 = arith.divf %447, %448 : vector<8x128xf32>
    %450 = vector.extract_strided_slice %449 {offsets = [0, 0], sizes = [8, 32], strides = [1, 1]} : vector<8x128xf32> to vector<8x32xf32>
    %451 = vector.extract_strided_slice %449 {offsets = [0, 32], sizes = [8, 32], strides = [1, 1]} : vector<8x128xf32> to vector<8x32xf32>
    %452 = vector.extract_strided_slice %449 {offsets = [0, 64], sizes = [8, 32], strides = [1, 1]} : vector<8x128xf32> to vector<8x32xf32>
    %cst_152 = arith.constant 2.000000e+00 : f32
    %453 = vector.broadcast %cst_152 : f32 to vector<8x32xf32>
    %454 = arith.mulf %453, %452 : vector<8x32xf32>
    %cst_153 = arith.constant 1.000000e+00 : f32
    %455 = vector.broadcast %cst_153 : f32 to vector<8x32xf32>
    %456 = arith.subf %454, %455 : vector<8x32xf32>
    %457 = vector.extract_strided_slice %449 {offsets = [0, 96], sizes = [8, 32], strides = [1, 1]} : vector<8x128xf32> to vector<8x32xf32>
    %458 = arith.mulf %451, %385 : vector<8x32xf32>
    %459 = arith.mulf %450, %456 : vector<8x32xf32>
    %460 = arith.addf %458, %459 : vector<8x32xf32>
    %461 = math.tanh %460 : vector<8x32xf32>
    %462 = arith.mulf %457, %461 : vector<8x32xf32>
    %463 = vector.extract_strided_slice %5 {offsets = [48, 0], sizes = [8, 128], strides = [1, 1]} : vector<64x128xf32> to vector<8x128xf32>
    %464 = arith.truncf %410 : vector<8x32xf32> to vector<8x32xbf16>
    %c0_154 = arith.constant 0 : index
    %c0_155 = arith.constant 0 : index
    %465 = vector.load %arg3[%c0_154, %c0_155] : memref<32x128xbf16, #tpu.memory_space<vmem>>, vector<32x128xbf16>
    %cst_156 = arith.constant dense<0.000000e+00> : vector<8x128xf32>
    %466 = tpu.matmul %464, %465, %cst_156 {dimension_numbers = #tpu.dot_dimension_numbers<[1], [0], [0], [1], [0, 0, 1, 1], [], []>} : vector<8x32xbf16>, vector<32x128xbf16>, vector<8x128xf32> -> vector<8x128xf32>
    %467 = arith.addf %463, %466 : vector<8x128xf32>
    %468 = arith.negf %467 : vector<8x128xf32>
    %469 = math.exp %468 : vector<8x128xf32>
    %cst_157 = arith.constant 1.000000e+00 : f32
    %470 = vector.broadcast %cst_157 : f32 to vector<8x128xf32>
    %471 = arith.addf %470, %469 : vector<8x128xf32>
    %472 = arith.divf %470, %471 : vector<8x128xf32>
    %473 = vector.extract_strided_slice %472 {offsets = [0, 0], sizes = [8, 32], strides = [1, 1]} : vector<8x128xf32> to vector<8x32xf32>
    %474 = vector.extract_strided_slice %472 {offsets = [0, 32], sizes = [8, 32], strides = [1, 1]} : vector<8x128xf32> to vector<8x32xf32>
    %475 = vector.extract_strided_slice %472 {offsets = [0, 64], sizes = [8, 32], strides = [1, 1]} : vector<8x128xf32> to vector<8x32xf32>
    %cst_158 = arith.constant 2.000000e+00 : f32
    %476 = vector.broadcast %cst_158 : f32 to vector<8x32xf32>
    %477 = arith.mulf %476, %475 : vector<8x32xf32>
    %cst_159 = arith.constant 1.000000e+00 : f32
    %478 = vector.broadcast %cst_159 : f32 to vector<8x32xf32>
    %479 = arith.subf %477, %478 : vector<8x32xf32>
    %480 = vector.extract_strided_slice %472 {offsets = [0, 96], sizes = [8, 32], strides = [1, 1]} : vector<8x128xf32> to vector<8x32xf32>
    %481 = arith.mulf %474, %408 : vector<8x32xf32>
    %482 = arith.mulf %473, %479 : vector<8x32xf32>
    %483 = arith.addf %481, %482 : vector<8x32xf32>
    %484 = math.tanh %483 : vector<8x32xf32>
    %485 = arith.mulf %480, %484 : vector<8x32xf32>
    %486 = arith.truncf %485 : vector<8x32xf32> to vector<8x32xbf16>
    %c0_160 = arith.constant 0 : index
    %c0_161 = arith.constant 0 : index
    %487 = vector.load %arg4[%c0_160, %c0_161] : memref<32x128xbf16, #tpu.memory_space<vmem>>, vector<32x128xbf16>
    %cst_162 = arith.constant dense<0.000000e+00> : vector<8x128xf32>
    %488 = tpu.matmul %486, %487, %cst_162 {dimension_numbers = #tpu.dot_dimension_numbers<[1], [0], [0], [1], [0, 0, 1, 1], [], []>} : vector<8x32xbf16>, vector<32x128xbf16>, vector<8x128xf32> -> vector<8x128xf32>
    %489 = arith.truncf %436 : vector<8x32xf32> to vector<8x32xbf16>
    %c0_163 = arith.constant 0 : index
    %c0_164 = arith.constant 0 : index
    %490 = vector.load %arg5[%c0_163, %c0_164] : memref<32x128xbf16, #tpu.memory_space<vmem>>, vector<32x128xbf16>
    %cst_165 = arith.constant dense<0.000000e+00> : vector<8x128xf32>
    %491 = tpu.matmul %489, %490, %cst_165 {dimension_numbers = #tpu.dot_dimension_numbers<[1], [0], [0], [1], [0, 0, 1, 1], [], []>} : vector<8x32xbf16>, vector<32x128xbf16>, vector<8x128xf32> -> vector<8x128xf32>
    %492 = arith.addf %488, %491 : vector<8x128xf32>
    %493 = arith.addf %492, %8 : vector<8x128xf32>
    %494 = arith.negf %493 : vector<8x128xf32>
    %495 = math.exp %494 : vector<8x128xf32>
    %cst_166 = arith.constant 1.000000e+00 : f32
    %496 = vector.broadcast %cst_166 : f32 to vector<8x128xf32>
    %497 = arith.addf %496, %495 : vector<8x128xf32>
    %498 = arith.divf %496, %497 : vector<8x128xf32>
    %499 = vector.extract_strided_slice %498 {offsets = [0, 0], sizes = [8, 32], strides = [1, 1]} : vector<8x128xf32> to vector<8x32xf32>
    %500 = vector.extract_strided_slice %498 {offsets = [0, 32], sizes = [8, 32], strides = [1, 1]} : vector<8x128xf32> to vector<8x32xf32>
    %501 = vector.extract_strided_slice %498 {offsets = [0, 64], sizes = [8, 32], strides = [1, 1]} : vector<8x128xf32> to vector<8x32xf32>
    %cst_167 = arith.constant 2.000000e+00 : f32
    %502 = vector.broadcast %cst_167 : f32 to vector<8x32xf32>
    %503 = arith.mulf %502, %501 : vector<8x32xf32>
    %cst_168 = arith.constant 1.000000e+00 : f32
    %504 = vector.broadcast %cst_168 : f32 to vector<8x32xf32>
    %505 = arith.subf %503, %504 : vector<8x32xf32>
    %506 = vector.extract_strided_slice %498 {offsets = [0, 96], sizes = [8, 32], strides = [1, 1]} : vector<8x128xf32> to vector<8x32xf32>
    %507 = arith.mulf %500, %434 : vector<8x32xf32>
    %508 = arith.mulf %499, %505 : vector<8x32xf32>
    %509 = arith.addf %507, %508 : vector<8x32xf32>
    %510 = math.tanh %509 : vector<8x32xf32>
    %511 = arith.mulf %506, %510 : vector<8x32xf32>
    %512 = arith.truncf %511 : vector<8x32xf32> to vector<8x32xbf16>
    %c0_169 = arith.constant 0 : index
    %c0_170 = arith.constant 0 : index
    %513 = vector.load %arg6[%c0_169, %c0_170] : memref<32x128xbf16, #tpu.memory_space<vmem>>, vector<32x128xbf16>
    %cst_171 = arith.constant dense<0.000000e+00> : vector<8x128xf32>
    %514 = tpu.matmul %512, %513, %cst_171 {dimension_numbers = #tpu.dot_dimension_numbers<[1], [0], [0], [1], [0, 0, 1, 1], [], []>} : vector<8x32xbf16>, vector<32x128xbf16>, vector<8x128xf32> -> vector<8x128xf32>
    %515 = arith.truncf %462 : vector<8x32xf32> to vector<8x32xbf16>
    %c0_172 = arith.constant 0 : index
    %c0_173 = arith.constant 0 : index
    %516 = vector.load %arg7[%c0_172, %c0_173] : memref<32x128xbf16, #tpu.memory_space<vmem>>, vector<32x128xbf16>
    %cst_174 = arith.constant dense<0.000000e+00> : vector<8x128xf32>
    %517 = tpu.matmul %515, %516, %cst_174 {dimension_numbers = #tpu.dot_dimension_numbers<[1], [0], [0], [1], [0, 0, 1, 1], [], []>} : vector<8x32xbf16>, vector<32x128xbf16>, vector<8x128xf32> -> vector<8x128xf32>
    %518 = arith.addf %514, %517 : vector<8x128xf32>
    %519 = arith.addf %518, %11 : vector<8x128xf32>
    %520 = arith.negf %519 : vector<8x128xf32>
    %521 = math.exp %520 : vector<8x128xf32>
    %cst_175 = arith.constant 1.000000e+00 : f32
    %522 = vector.broadcast %cst_175 : f32 to vector<8x128xf32>
    %523 = arith.addf %522, %521 : vector<8x128xf32>
    %524 = arith.divf %522, %523 : vector<8x128xf32>
    %525 = vector.extract_strided_slice %524 {offsets = [0, 0], sizes = [8, 32], strides = [1, 1]} : vector<8x128xf32> to vector<8x32xf32>
    %526 = vector.extract_strided_slice %524 {offsets = [0, 32], sizes = [8, 32], strides = [1, 1]} : vector<8x128xf32> to vector<8x32xf32>
    %527 = vector.extract_strided_slice %524 {offsets = [0, 64], sizes = [8, 32], strides = [1, 1]} : vector<8x128xf32> to vector<8x32xf32>
    %cst_176 = arith.constant 2.000000e+00 : f32
    %528 = vector.broadcast %cst_176 : f32 to vector<8x32xf32>
    %529 = arith.mulf %528, %527 : vector<8x32xf32>
    %cst_177 = arith.constant 1.000000e+00 : f32
    %530 = vector.broadcast %cst_177 : f32 to vector<8x32xf32>
    %531 = arith.subf %529, %530 : vector<8x32xf32>
    %532 = vector.extract_strided_slice %524 {offsets = [0, 96], sizes = [8, 32], strides = [1, 1]} : vector<8x128xf32> to vector<8x32xf32>
    %533 = arith.mulf %526, %460 : vector<8x32xf32>
    %534 = arith.mulf %525, %531 : vector<8x32xf32>
    %535 = arith.addf %533, %534 : vector<8x32xf32>
    %536 = math.tanh %535 : vector<8x32xf32>
    %537 = arith.mulf %532, %536 : vector<8x32xf32>
    %538 = vector.extract_strided_slice %5 {offsets = [56, 0], sizes = [8, 128], strides = [1, 1]} : vector<64x128xf32> to vector<8x128xf32>
    %539 = arith.truncf %485 : vector<8x32xf32> to vector<8x32xbf16>
    %c0_178 = arith.constant 0 : index
    %c0_179 = arith.constant 0 : index
    %540 = vector.load %arg3[%c0_178, %c0_179] : memref<32x128xbf16, #tpu.memory_space<vmem>>, vector<32x128xbf16>
    %cst_180 = arith.constant dense<0.000000e+00> : vector<8x128xf32>
    %541 = tpu.matmul %539, %540, %cst_180 {dimension_numbers = #tpu.dot_dimension_numbers<[1], [0], [0], [1], [0, 0, 1, 1], [], []>} : vector<8x32xbf16>, vector<32x128xbf16>, vector<8x128xf32> -> vector<8x128xf32>
    %542 = arith.addf %538, %541 : vector<8x128xf32>
    %543 = arith.negf %542 : vector<8x128xf32>
    %544 = math.exp %543 : vector<8x128xf32>
    %cst_181 = arith.constant 1.000000e+00 : f32
    %545 = vector.broadcast %cst_181 : f32 to vector<8x128xf32>
    %546 = arith.addf %545, %544 : vector<8x128xf32>
    %547 = arith.divf %545, %546 : vector<8x128xf32>
    %548 = vector.extract_strided_slice %547 {offsets = [0, 0], sizes = [8, 32], strides = [1, 1]} : vector<8x128xf32> to vector<8x32xf32>
    %549 = vector.extract_strided_slice %547 {offsets = [0, 32], sizes = [8, 32], strides = [1, 1]} : vector<8x128xf32> to vector<8x32xf32>
    %550 = vector.extract_strided_slice %547 {offsets = [0, 64], sizes = [8, 32], strides = [1, 1]} : vector<8x128xf32> to vector<8x32xf32>
    %cst_182 = arith.constant 2.000000e+00 : f32
    %551 = vector.broadcast %cst_182 : f32 to vector<8x32xf32>
    %552 = arith.mulf %551, %550 : vector<8x32xf32>
    %cst_183 = arith.constant 1.000000e+00 : f32
    %553 = vector.broadcast %cst_183 : f32 to vector<8x32xf32>
    %554 = arith.subf %552, %553 : vector<8x32xf32>
    %555 = vector.extract_strided_slice %547 {offsets = [0, 96], sizes = [8, 32], strides = [1, 1]} : vector<8x128xf32> to vector<8x32xf32>
    %556 = arith.mulf %549, %483 : vector<8x32xf32>
    %557 = arith.mulf %548, %554 : vector<8x32xf32>
    %558 = arith.addf %556, %557 : vector<8x32xf32>
    %559 = math.tanh %558 : vector<8x32xf32>
    %560 = arith.mulf %555, %559 : vector<8x32xf32>
    %561 = arith.truncf %560 : vector<8x32xf32> to vector<8x32xbf16>
    %c0_184 = arith.constant 0 : index
    %c0_185 = arith.constant 0 : index
    %562 = vector.load %arg4[%c0_184, %c0_185] : memref<32x128xbf16, #tpu.memory_space<vmem>>, vector<32x128xbf16>
    %cst_186 = arith.constant dense<0.000000e+00> : vector<8x128xf32>
    %563 = tpu.matmul %561, %562, %cst_186 {dimension_numbers = #tpu.dot_dimension_numbers<[1], [0], [0], [1], [0, 0, 1, 1], [], []>} : vector<8x32xbf16>, vector<32x128xbf16>, vector<8x128xf32> -> vector<8x128xf32>
    %564 = arith.truncf %511 : vector<8x32xf32> to vector<8x32xbf16>
    %c0_187 = arith.constant 0 : index
    %c0_188 = arith.constant 0 : index
    %565 = vector.load %arg5[%c0_187, %c0_188] : memref<32x128xbf16, #tpu.memory_space<vmem>>, vector<32x128xbf16>
    %cst_189 = arith.constant dense<0.000000e+00> : vector<8x128xf32>
    %566 = tpu.matmul %564, %565, %cst_189 {dimension_numbers = #tpu.dot_dimension_numbers<[1], [0], [0], [1], [0, 0, 1, 1], [], []>} : vector<8x32xbf16>, vector<32x128xbf16>, vector<8x128xf32> -> vector<8x128xf32>
    %567 = arith.addf %563, %566 : vector<8x128xf32>
    %568 = arith.addf %567, %8 : vector<8x128xf32>
    %569 = arith.negf %568 : vector<8x128xf32>
    %570 = math.exp %569 : vector<8x128xf32>
    %cst_190 = arith.constant 1.000000e+00 : f32
    %571 = vector.broadcast %cst_190 : f32 to vector<8x128xf32>
    %572 = arith.addf %571, %570 : vector<8x128xf32>
    %573 = arith.divf %571, %572 : vector<8x128xf32>
    %574 = vector.extract_strided_slice %573 {offsets = [0, 0], sizes = [8, 32], strides = [1, 1]} : vector<8x128xf32> to vector<8x32xf32>
    %575 = vector.extract_strided_slice %573 {offsets = [0, 32], sizes = [8, 32], strides = [1, 1]} : vector<8x128xf32> to vector<8x32xf32>
    %576 = vector.extract_strided_slice %573 {offsets = [0, 64], sizes = [8, 32], strides = [1, 1]} : vector<8x128xf32> to vector<8x32xf32>
    %cst_191 = arith.constant 2.000000e+00 : f32
    %577 = vector.broadcast %cst_191 : f32 to vector<8x32xf32>
    %578 = arith.mulf %577, %576 : vector<8x32xf32>
    %cst_192 = arith.constant 1.000000e+00 : f32
    %579 = vector.broadcast %cst_192 : f32 to vector<8x32xf32>
    %580 = arith.subf %578, %579 : vector<8x32xf32>
    %581 = vector.extract_strided_slice %573 {offsets = [0, 96], sizes = [8, 32], strides = [1, 1]} : vector<8x128xf32> to vector<8x32xf32>
    %582 = arith.mulf %575, %509 : vector<8x32xf32>
    %583 = arith.mulf %574, %580 : vector<8x32xf32>
    %584 = arith.addf %582, %583 : vector<8x32xf32>
    %585 = math.tanh %584 : vector<8x32xf32>
    %586 = arith.mulf %581, %585 : vector<8x32xf32>
    %587 = arith.truncf %586 : vector<8x32xf32> to vector<8x32xbf16>
    %c0_193 = arith.constant 0 : index
    %c0_194 = arith.constant 0 : index
    %588 = vector.load %arg6[%c0_193, %c0_194] : memref<32x128xbf16, #tpu.memory_space<vmem>>, vector<32x128xbf16>
    %cst_195 = arith.constant dense<0.000000e+00> : vector<8x128xf32>
    %589 = tpu.matmul %587, %588, %cst_195 {dimension_numbers = #tpu.dot_dimension_numbers<[1], [0], [0], [1], [0, 0, 1, 1], [], []>} : vector<8x32xbf16>, vector<32x128xbf16>, vector<8x128xf32> -> vector<8x128xf32>
    %590 = arith.truncf %537 : vector<8x32xf32> to vector<8x32xbf16>
    %c0_196 = arith.constant 0 : index
    %c0_197 = arith.constant 0 : index
    %591 = vector.load %arg7[%c0_196, %c0_197] : memref<32x128xbf16, #tpu.memory_space<vmem>>, vector<32x128xbf16>
    %cst_198 = arith.constant dense<0.000000e+00> : vector<8x128xf32>
    %592 = tpu.matmul %590, %591, %cst_198 {dimension_numbers = #tpu.dot_dimension_numbers<[1], [0], [0], [1], [0, 0, 1, 1], [], []>} : vector<8x32xbf16>, vector<32x128xbf16>, vector<8x128xf32> -> vector<8x128xf32>
    %593 = arith.addf %589, %592 : vector<8x128xf32>
    %594 = arith.addf %593, %11 : vector<8x128xf32>
    %595 = arith.negf %594 : vector<8x128xf32>
    %596 = math.exp %595 : vector<8x128xf32>
    %cst_199 = arith.constant 1.000000e+00 : f32
    %597 = vector.broadcast %cst_199 : f32 to vector<8x128xf32>
    %598 = arith.addf %597, %596 : vector<8x128xf32>
    %599 = arith.divf %597, %598 : vector<8x128xf32>
    %600 = vector.extract_strided_slice %599 {offsets = [0, 0], sizes = [8, 32], strides = [1, 1]} : vector<8x128xf32> to vector<8x32xf32>
    %601 = vector.extract_strided_slice %599 {offsets = [0, 32], sizes = [8, 32], strides = [1, 1]} : vector<8x128xf32> to vector<8x32xf32>
    %602 = vector.extract_strided_slice %599 {offsets = [0, 64], sizes = [8, 32], strides = [1, 1]} : vector<8x128xf32> to vector<8x32xf32>
    %cst_200 = arith.constant 2.000000e+00 : f32
    %603 = vector.broadcast %cst_200 : f32 to vector<8x32xf32>
    %604 = arith.mulf %603, %602 : vector<8x32xf32>
    %cst_201 = arith.constant 1.000000e+00 : f32
    %605 = vector.broadcast %cst_201 : f32 to vector<8x32xf32>
    %606 = arith.subf %604, %605 : vector<8x32xf32>
    %607 = vector.extract_strided_slice %599 {offsets = [0, 96], sizes = [8, 32], strides = [1, 1]} : vector<8x128xf32> to vector<8x32xf32>
    %608 = arith.mulf %601, %535 : vector<8x32xf32>
    %609 = arith.mulf %600, %606 : vector<8x32xf32>
    %610 = arith.addf %608, %609 : vector<8x32xf32>
    %611 = math.tanh %610 : vector<8x32xf32>
    %612 = arith.mulf %607, %611 : vector<8x32xf32>
    %613 = arith.truncf %612 : vector<8x32xf32> to vector<8x32xbf16>
    %c0_202 = arith.constant 0 : index
    %c0_203 = arith.constant 0 : index
    %614 = vector.load %arg11[%c0_202, %c0_203] : memref<32x128xbf16, #tpu.memory_space<vmem>>, vector<32x128xbf16>
    %cst_204 = arith.constant dense<0.000000e+00> : vector<8x128xf32>
    %615 = tpu.matmul %613, %614, %cst_204 {dimension_numbers = #tpu.dot_dimension_numbers<[1], [0], [0], [1], [0, 0, 1, 1], [], []>} : vector<8x32xbf16>, vector<32x128xbf16>, vector<8x128xf32> -> vector<8x128xf32>
    %c0_205 = arith.constant 0 : index
    %c0_206 = arith.constant 0 : index
    %616 = vector.load %arg12[%c0_205, %c0_206] : memref<1x128xf32, #tpu.memory_space<vmem>>, vector<1x128xf32>
    %617 = vector.broadcast %616 : vector<1x128xf32> to vector<8x128xf32>
    %618 = arith.addf %615, %617 : vector<8x128xf32>
    %c0_207 = arith.constant 0 : index
    %c0_208 = arith.constant 0 : index
    %619 = vector.load %arg13[%c0_207, %c0_208] : memref<8x128xf32, #tpu.memory_space<vmem>>, vector<8x128xf32>
    tpu.vector_store %arg13[%c0_207, %c0_208], %618 {strides = array<i32>} : memref<8x128xf32, #tpu.memory_space<vmem>>, vector<8x128xf32>,
    return
  }
  func.func @transform_0(%arg0: i32) -> (i32, i32) {
    %c0_i32 = arith.constant 0 : i32
    %c0_i32_0 = arith.constant 0 : i32
    %c0_i32_1 = arith.constant 0 : i32
    return %c0_i32, %c0_i32_0 : i32, i32
  }
  func.func @transform_1(%arg0: i32) -> (i32, i32) {
    %c0_i32 = arith.constant 0 : i32
    %c0_i32_0 = arith.constant 0 : i32
    %c0_i32_1 = arith.constant 0 : i32
    return %c0_i32, %c0_i32_0 : i32, i32
  }
  func.func @transform_2(%arg0: i32) -> (i32, i32) {
    %c0_i32 = arith.constant 0 : i32
    %c0_i32_0 = arith.constant 0 : i32
    %c0_i32_1 = arith.constant 0 : i32
    return %c0_i32, %c0_i32_0 : i32, i32
  }
  func.func @transform_3(%arg0: i32) -> (i32, i32) {
    %c0_i32 = arith.constant 0 : i32
    %c0_i32_0 = arith.constant 0 : i32
    %c0_i32_1 = arith.constant 0 : i32
    return %c0_i32, %c0_i32_0 : i32, i32
  }
  func.func @transform_4(%arg0: i32) -> (i32, i32) {
    %c0_i32 = arith.constant 0 : i32
    %c0_i32_0 = arith.constant 0 : i32
    %c0_i32_1 = arith.constant 0 : i32
    return %c0_i32, %c0_i32_0 : i32, i32
  }
  func.func @transform_5(%arg0: i32) -> (i32, i32) {
    %c0_i32 = arith.constant 0 : i32
    %c0_i32_0 = arith.constant 0 : i32
    %c0_i32_1 = arith.constant 0 : i32
    return %c0_i32, %c0_i32_0 : i32, i32
  }
  func.func @transform_6(%arg0: i32) -> (i32, i32) {
    %c0_i32 = arith.constant 0 : i32
    %c0_i32_0 = arith.constant 0 : i32
    %c0_i32_1 = arith.constant 0 : i32
    return %c0_i32, %c0_i32_0 : i32, i32
  }
  func.func @transform_7(%arg0: i32) -> (i32, i32) {
    %c0_i32 = arith.constant 0 : i32
    %c0_i32_0 = arith.constant 0 : i32
    %c0_i32_1 = arith.constant 0 : i32
    return %c0_i32, %c0_i32_0 : i32, i32
  }
  func.func @transform_8(%arg0: i32) -> (i32, i32) {
    %c0_i32 = arith.constant 0 : i32
    %c0_i32_0 = arith.constant 0 : i32
    %c0_i32_1 = arith.constant 0 : i32
    return %c0_i32, %c0_i32_0 : i32, i32
  }
  func.func @transform_9(%arg0: i32) -> (i32, i32) {
    %c0_i32 = arith.constant 0 : i32
    %c0_i32_0 = arith.constant 0 : i32
    %c0_i32_1 = arith.constant 0 : i32
    return %c0_i32, %c0_i32_0 : i32, i32
  }
  func.func @transform_10(%arg0: i32) -> (i32, i32) {
    %c0_i32 = arith.constant 0 : i32
    %c0_i32_0 = arith.constant 0 : i32
    %c0_i32_1 = arith.constant 0 : i32
    return %c0_i32, %c0_i32_0 : i32, i32
  }
  func.func @transform_11(%arg0: i32) -> (i32, i32) {
    %c0_i32 = arith.constant 0 : i32
    %c0_i32_0 = arith.constant 0 : i32
    %c0_i32_1 = arith.constant 0 : i32
    return %c0_i32, %c0_i32_0 : i32, i32
  }
  func.func @transform_12(%arg0: i32) -> (i32, i32) {
    %c0_i32 = arith.constant 0 : i32
    %c0_i32_0 = arith.constant 0 : i32
    %c0_i32_1 = arith.constant 0 : i32
    return %c0_i32, %c0_i32_0 : i32, i32
  }
}

</mosaic_0001>

<llo_original>
// kernel: tpu_custom_call.1
$region0: #{tpu_custom_call.1}
  #allocation0 [shape = 'u32[]', space=smem, size = 0x4, offset = 0x4, fixed_abs, tag = 'smem constant byte address 0x4 - core index']
  #allocation1 [shape = 'u32[144,128]{1,0:T(1,128)}', space=vmem, size = 0x12000, scoped, tag = 'internal scratch']
  %s0 = inlined_call_operand.vmem [shape: bf16[64,16], index: 0, kind: input, shape index: {}]
  %s1 = inlined_call_operand.hbm [shape: bf16[16,128], index: 1, kind: input, shape index: {}]
  %s2 = inlined_call_operand.vmem [shape: bf16[32,128], index: 2, kind: input, shape index: {}]
  %s3 = inlined_call_operand.vmem [shape: bf16[32,128], index: 3, kind: input, shape index: {}]
  %s4 = inlined_call_operand.vmem [shape: bf16[32,128], index: 4, kind: input, shape index: {}]
  %s5 = inlined_call_operand.hbm [shape: bf16[32,128], index: 5, kind: input, shape index: {}]
  %s6 = inlined_call_operand.hbm [shape: bf16[32,128], index: 6, kind: input, shape index: {}]
  %s7 = inlined_call_operand.vmem [shape: f32[1,128], index: 7, kind: input, shape index: {}]
  %s8 = inlined_call_operand.vmem [shape: f32[1,128], index: 8, kind: input, shape index: {}]
  %s9 = inlined_call_operand.vmem [shape: f32[1,128], index: 9, kind: input, shape index: {}]
  %s10 = inlined_call_operand.vmem [shape: bf16[32,128], index: 10, kind: input, shape index: {}]
  %s11 = inlined_call_operand.vmem [shape: f32[1,128], index: 11, kind: input, shape index: {}]
  %s12 = inlined_call_operand.hbm [shape: f32[8,128], index: 12, kind: output, shape index: {}]
  %s13 = sld [smem:[#allocation0]]
  $region70: #{tpu_custom_call.1} parent=0
    _
  %s15 = ssub.s32 1, %s13
  %s16 = scalar_select 0, %s15, %s13
  $region1: #{tpu_custom_call.1} parent=0
    #allocation2 [shape = 'u8[4096]{0}', space=vmem, size = 0x1000, scoped, tag = 'input window, operand 1, single buffered']
    #allocation3 [shape = 's32[1]{0}', space=sflag, size = 0x4, scoped, tag = 'scoped memory for tpu_custom_call.1']
    #allocation4 [shape = 's32[1]{0}', space=sflag, size = 0x4, scoped, tag = 'scoped memory for tpu_custom_call.1']
    #allocation5 [shape = 'u8[8192]{0}', space=vmem, size = 0x2000, scoped, tag = 'input window, operand 5, single buffered']
    #allocation6 [shape = 's32[1]{0}', space=sflag, size = 0x4, scoped, tag = 'scoped memory for tpu_custom_call.1']
    #allocation7 [shape = 'u8[8192]{0}', space=vmem, size = 0x2000, scoped, tag = 'input window, operand 6, single buffered']
    #allocation8 [shape = 'u8[4096]{0}', space=vmem, size = 0x1000, scoped, tag = 'output window, operand 0, single buffered']
    %17 = vsyncpa [#allocation3], 0
    %18 = vsyncpa [#allocation6], 0
    %19 = vsyncpa [#allocation4], 0
    // Predicated region
    $region2: #{tpu_custom_call.1} parent=1 // pred_check
      _
    $region3: #{tpu_custom_call.1} parent=1 // pred_check_branch
      %21 = sbr.rel (0) target = $region5
    $region4: #{tpu_custom_call.1} parent=1 // pred_region
      _
    $region5: #{tpu_custom_call.1} parent=1 // pred_fallthru
      _
    // Predicated region
    $region6: #{tpu_custom_call.1} parent=1 // pred_check
      _
    $region7: #{tpu_custom_call.1} parent=1 // pred_check_branch
      %23 = sbr.rel (0) target = $region9
    $region8: #{tpu_custom_call.1} parent=1 // pred_region
      %s25 = ssub.s32 128, 128
      %26 = vsyncadd [#allocation3], %s25
      %s27 = sshll.u32 [#allocation2], 4
      %s28 = int_to_ptr.vmem [resolvable:$true] %s27
      %33 = dma.hbm_to_vmem [thread:$0]  %s1, 128, %s28, [#allocation3], 64, 64, 4
    $region9: #{tpu_custom_call.1} parent=1 // pred_fallthru
      _
    // Predicated region
    $region10: #{tpu_custom_call.1} parent=1 // pred_check
      _
    $region11: #{tpu_custom_call.1} parent=1 // pred_check_branch
      %35 = sbr.rel (0) target = $region13
    $region12: #{tpu_custom_call.1} parent=1 // pred_region
      _
    $region13: #{tpu_custom_call.1} parent=1 // pred_fallthru
      _
    // Predicated region
    $region14: #{tpu_custom_call.1} parent=1 // pred_check
      _
    $region15: #{tpu_custom_call.1} parent=1 // pred_check_branch
      %37 = sbr.rel (0) target = $region17
    $region16: #{tpu_custom_call.1} parent=1 // pred_region
      _
    $region17: #{tpu_custom_call.1} parent=1 // pred_fallthru
      _
    // Predicated region
    $region18: #{tpu_custom_call.1} parent=1 // pred_check
      _
    $region19: #{tpu_custom_call.1} parent=1 // pred_check_branch
      %39 = sbr.rel (0) target = $region21
    $region20: #{tpu_custom_call.1} parent=1 // pred_region
      _
    $region21: #{tpu_custom_call.1} parent=1 // pred_fallthru
      _
    // Predicated region
    $region22: #{tpu_custom_call.1} parent=1 // pred_check
      _
    $region23: #{tpu_custom_call.1} parent=1 // pred_check_branch
      %41 = sbr.rel (0) target = $region25
    $region24: #{tpu_custom_call.1} parent=1 // pred_region
      %s43 = ssub.s32 256, 256
      %44 = vsyncadd [#allocation6], %s43
      %s45 = sshll.u32 [#allocation5], 4
      %s46 = int_to_ptr.vmem [resolvable:$true] %s45
      %51 = dma.hbm_to_vmem [thread:$0]  %s5, 256, %s46, [#allocation6], 64, 64, 4
    $region25: #{tpu_custom_call.1} parent=1 // pred_fallthru
      _
    // Predicated region
    $region26: #{tpu_custom_call.1} parent=1 // pred_check
      _
    $region27: #{tpu_custom_call.1} parent=1 // pred_check_branch
      %53 = sbr.rel (0) target = $region29
    $region28: #{tpu_custom_call.1} parent=1 // pred_region
      %s55 = ssub.s32 256, 256
      %56 = vsyncadd [#allocation6], %s55
      %s57 = sshll.u32 [#allocation7], 4
      %s58 = int_to_ptr.vmem [resolvable:$true] %s57
      %63 = dma.hbm_to_vmem [thread:$0]  %s6, 256, %s58, [#allocation6], 64, 64, 4
    $region29: #{tpu_custom_call.1} parent=1 // pred_fallthru
      _
    // Predicated region
    $region30: #{tpu_custom_call.1} parent=1 // pred_check
      _
    $region31: #{tpu_custom_call.1} parent=1 // pred_check_branch
      %65 = sbr.rel (0) target = $region33
    $region32: #{tpu_custom_call.1} parent=1 // pred_region
      _
    $region33: #{tpu_custom_call.1} parent=1 // pred_fallthru
      _
    // Predicated region
    $region34: #{tpu_custom_call.1} parent=1 // pred_check
      _
    $region35: #{tpu_custom_call.1} parent=1 // pred_check_branch
      %67 = sbr.rel (0) target = $region37
    $region36: #{tpu_custom_call.1} parent=1 // pred_region
      _
    $region37: #{tpu_custom_call.1} parent=1 // pred_fallthru
      _
    // Predicated region
    $region38: #{tpu_custom_call.1} parent=1 // pred_check
      _
    $region39: #{tpu_custom_call.1} parent=1 // pred_check_branch
      %69 = sbr.rel (0) target = $region41
    $region40: #{tpu_custom_call.1} parent=1 // pred_region
      _
    $region41: #{tpu_custom_call.1} parent=1 // pred_fallthru
      _
    // Predicated region
    $region42: #{tpu_custom_call.1} parent=1 // pred_check
      _
    $region43: #{tpu_custom_call.1} parent=1 // pred_check_branch
      %71 = sbr.rel (0) target = $region45
    $region44: #{tpu_custom_call.1} parent=1 // pred_region
      _
    $region45: #{tpu_custom_call.1} parent=1 // pred_fallthru
      _
    // Predicated region
    $region46: #{tpu_custom_call.1} parent=1 // pred_check
      _
    $region47: #{tpu_custom_call.1} parent=1 // pred_check_branch
      %73 = sbr.rel (0) target = $region49
    $region48: #{tpu_custom_call.1} parent=1 // pred_region
      _
    $region49: #{tpu_custom_call.1} parent=1 // pred_fallthru
      _
    // Predicated region
    $region50: #{tpu_custom_call.1} parent=1 // pred_check
      _
    $region51: #{tpu_custom_call.1} parent=1 // pred_check_branch
      %75 = sbr.rel (0) target = $region53
    $region52: #{tpu_custom_call.1} parent=1 // pred_region
      %76 = dma.done [#allocation3], 128
    $region53: #{tpu_custom_call.1} parent=1 // pred_fallthru
      _
    // Predicated region
    $region54: #{tpu_custom_call.1} parent=1 // pred_check
      _
    $region55: #{tpu_custom_call.1} parent=1 // pred_check_branch
      %78 = sbr.rel (0) target = $region57
    $region56: #{tpu_custom_call.1} parent=1 // pred_region
      %79 = dma.done [#allocation6], 256
    $region57: #{tpu_custom_call.1} parent=1 // pred_fallthru
      _
    // Predicated region
    $region58: #{tpu_custom_call.1} parent=1 // pred_check
      _
    $region59: #{tpu_custom_call.1} parent=1 // pred_check_branch
      %81 = sbr.rel (0) target = $region61
    $region60: #{tpu_custom_call.1} parent=1 // pred_region
      %82 = dma.done [#allocation6], 256
    $region61: #{tpu_custom_call.1} parent=1 // pred_fallthru
      _
    %v84 = vld [vmem:[%s0] sm:$0xf]
    %v85 = vld [vmem:[%s0 + $0x4] sm:$0xf]
    %v86 = vld [vmem:[%s0 + $0x8] sm:$0xf]
    %v87 = vld [vmem:[%s0 + $0xc] sm:$0xf]
    %v88 = vld [vmem:[%s0 + $0x10] sm:$0xf]
    %v89 = vld [vmem:[%s0 + $0x14] sm:$0xf]
    %v90 = vld [vmem:[%s0 + $0x18] sm:$0xf]
    %v91 = vld [vmem:[%s0 + $0x1c] sm:$0xf]
    %v92 = vld [vmem:[#allocation2] sm:$0xf]
    %v93 = vld [vmem:[#allocation2 + $0x4] sm:$0xf]
    %v94 = vld [vmem:[%s7] sm:$0x1]
    %v96 = vlaneseq
    %v97 = vshrl.u32 %v96, 7
    %v98 = vsub.s32 0, %v97
    %v99 = vrot.slane %v94, %v98
    %v109 = vunpack.c.l.b16 %v84
    %v110 = vunpack.c.l.b16 %v85
    %v111 = vunpack.c.l.b16 %v86
    %v112 = vunpack.c.l.b16 %v87
    %v113 = vunpack.c.l.b16 %v88
    %v114 = vunpack.c.l.b16 %v89
    %v115 = vunpack.c.l.b16 %v90
    %v116 = vunpack.c.l.b16 %v91
    %v117 = vpack.c.b16 %v110, %v109
    %v118 = vpack.c.b16 %v112, %v111
    %v119 = vpack.c.b16 %v114, %v113
    %v120 = vpack.c.b16 %v116, %v115
    %v123 = vunpack.c.l.b16 %v92
    %v124 = vunpack.c.l.b16 %v93
    %v125 = vpack.c.b16 %v124, %v123
    %vm127 = vcmask 130048
    %v129 = vsel %vm127, %v117, 0
    %v132 = vsel %vm127, %v118, 0
    %v135 = vsel %vm127, %v119, 0
    %v138 = vsel %vm127, %v120, 0
    %140 = vmatprep.subr.bf16.mxu0 0
    %141 = vmatpush1.bf16.msra.mxu0 %v125
    %142 = vmatprep.subr.bf16.mxu0 0
    %143 = vmatpush1.bf16.msra.mxu0 0
    %144 = vmatprep.subr.bf16.mxu0 0
    %145 = vmatpush1.bf16.msra.mxu0 0
    %146 = vmatprep.subr.bf16.mxu0 0
    %147 = vmatpush1.bf16.msra.mxu0 0
    %148 = vmatprep.subr.bf16.mxu0 0
    %149 = vmatpush1.bf16.msra.mxu0 0
    %150 = vmatprep.subr.bf16.mxu0 0
    %151 = vmatpush1.bf16.msra.mxu0 0
    %152 = vmatprep.subr.bf16.mxu0 0
    %153 = vmatpush1.bf16.msra.mxu0 0
    %154 = vmatprep.subr.bf16.mxu0 0
    %155 = vmatpush1.bf16.msra.mxu0 0
    %156 = vmatprep.subr.bf16.mxu0 0
    %157 = vmatpush1.bf16.msra.mxu0 0
    %158 = vmatprep.subr.bf16.mxu0 0
    %159 = vmatpush1.bf16.msra.mxu0 0
    %160 = vmatprep.subr.bf16.mxu0 0
    %161 = vmatpush1.bf16.msra.mxu0 0
    %162 = vmatprep.subr.bf16.mxu0 0
    %163 = vmatpush1.bf16.msra.mxu0 0
    %164 = vmatprep.subr.bf16.mxu0 0
    %165 = vmatpush1.bf16.msra.mxu0 0
    %166 = vmatprep.subr.bf16.mxu0 0
    %167 = vmatpush1.bf16.msra.mxu0 0
    %168 = vmatprep.subr.bf16.mxu0 0
    %169 = vmatpush1.bf16.msra.mxu0 0
    %170 = vmatprep.subr.bf16.mxu0 0
    %171 = vmatpush1.bf16.msra.mxu0 0
    %172 = vmatprep.mubr.bf16.mxu0 0
    %173 = vmatmul.mubr.bf16.gmra.mrb[0].mxu0 %v129
    %v174 = vpop.f32.mrb[0].mxu0
    %v175 = vadd.f32 %v99, %v174
    %v176 = vpop.f32.mrb[0].mxu0
    %v177 = vpop.f32.mrb[0].mxu0
    %v178 = vadd.f32 %v99, %v177
    %v179 = vpop.f32.mrb[0].mxu0
    %180 = vmatprep.mubr.bf16.mxu0 0
    %181 = vmatmul.mubr.bf16.gmra.mrb[0].mxu0 %v132
    %v182 = vpop.f32.mrb[0].mxu0
    %v183 = vadd.f32 %v99, %v182
    %v184 = vpop.f32.mrb[0].mxu0
    %v185 = vpop.f32.mrb[0].mxu0
    %v186 = vadd.f32 %v99, %v185
    %v187 = vpop.f32.mrb[0].mxu0
    %188 = vmatprep.mubr.bf16.mxu0 0
    %189 = vmatmul.mubr.bf16.gmra.mrb[0].mxu0 %v135
    %v190 = vpop.f32.mrb[0].mxu0
    %v191 = vadd.f32 %v99, %v190
    %v192 = vpop.f32.mrb[0].mxu0
    %v193 = vpop.f32.mrb[0].mxu0
    %v194 = vadd.f32 %v99, %v193
    %v195 = vpop.f32.mrb[0].mxu0
    %196 = vmatprep.mubr.bf16.mxu0 0
    %197 = vmatmul.mubr.bf16.gmra.mrb[0].mxu0 %v138
    %v198 = vpop.f32.mrb[0].mxu0
    %v199 = vadd.f32 %v99, %v198
    %v200 = vpop.f32.mrb[0].mxu0
    %v201 = vpop.f32.mrb[0].mxu0
    %v202 = vadd.f32 %v99, %v201
    %v203 = vpop.f32.mrb[0].mxu0
    %204 = vdwg.mxu0
    %v205 = vld [vmem:[%s8] sm:$0x1]
    %v207 = vlaneseq
    %v208 = vshrl.u32 %v207, 7
    %v209 = vsub.s32 0, %v208
    %v210 = vrot.slane %v205, %v209
    %v212 = vld [vmem:[%s9] sm:$0x1]
    %v214 = vlaneseq
    %v215 = vshrl.u32 %v214, 7
    %v216 = vsub.s32 0, %v215
    %v217 = vrot.slane %v212, %v216
    %v219 = vld [vmem:[%s2] sm:$0xf]
    %v220 = vld [vmem:[%s2 + $0x4] sm:$0xf]
    %v221 = vld [vmem:[%s2 + $0x8] sm:$0xf]
    %v222 = vld [vmem:[%s2 + $0xc] sm:$0xf]
    %v227 = vunpack.c.l.b16 %v219
    %v228 = vunpack.c.l.b16 %v220
    %v229 = vunpack.c.l.b16 %v221
    %v230 = vunpack.c.l.b16 %v222
    %v231 = vpack.c.b16 %v228, %v227
    %v232 = vpack.c.b16 %v230, %v229
    %vm235 = vcmask 261120
    %v237 = vsel %vm235, 0, 0
    %239 = vmatprep.subr.bf16.mxu0 0
    %240 = vmatpush1.bf16.msra.mxu0 %v231
    %241 = vmatprep.subr.bf16.mxu0 0
    %242 = vmatpush1.bf16.msra.mxu0 %v232
    %243 = vmatprep.subr.bf16.mxu0 0
    %244 = vmatpush1.bf16.msra.mxu0 0
    %245 = vmatprep.subr.bf16.mxu0 0
    %246 = vmatpush1.bf16.msra.mxu0 0
    %247 = vmatprep.subr.bf16.mxu0 0
    %248 = vmatpush1.bf16.msra.mxu0 0
    %249 = vmatprep.subr.bf16.mxu0 0
    %250 = vmatpush1.bf16.msra.mxu0 0
    %251 = vmatprep.subr.bf16.mxu0 0
    %252 = vmatpush1.bf16.msra.mxu0 0
    %253 = vmatprep.subr.bf16.mxu0 0
    %254 = vmatpush1.bf16.msra.mxu0 0
    %255 = vmatprep.subr.bf16.mxu0 0
    %256 = vmatpush1.bf16.msra.mxu0 0
    %257 = vmatprep.subr.bf16.mxu0 0
    %258 = vmatpush1.bf16.msra.mxu0 0
    %259 = vmatprep.subr.bf16.mxu0 0
    %260 = vmatpush1.bf16.msra.mxu0 0
    %261 = vmatprep.subr.bf16.mxu0 0
    %262 = vmatpush1.bf16.msra.mxu0 0
    %263 = vmatprep.subr.bf16.mxu0 0
    %264 = vmatpush1.bf16.msra.mxu0 0
    %265 = vmatprep.subr.bf16.mxu0 0
    %266 = vmatpush1.bf16.msra.mxu0 0
    %267 = vmatprep.subr.bf16.mxu0 0
    %268 = vmatpush1.bf16.msra.mxu0 0
    %269 = vmatprep.subr.bf16.mxu0 0
    %270 = vmatpush1.bf16.msra.mxu0 0
    %271 = vmatprep.mubr.bf16.mxu0 0
    %272 = vmatmul.mubr.bf16.gmra.mrb[0].mxu0 %v237
    %v273 = vpop.f32.mrb[0].mxu0
    %v274 = vadd.f32 0.0, %v273
    %v275 = vpop.f32.mrb[0].mxu0
    %v276 = vpop.f32.mrb[0].mxu0
    %v277 = vpop.f32.mrb[0].mxu0
    %278 = vdwg.mxu0
    %v279 = vadd.f32 %v175, %v274
    %v280 = vxor.u32 %v279, 2147483648
    %v281 = vmul.f32 %v280, 1.442695
    %v282 = vpow.pop %v281
    %v283 = vadd.f32 %v282, 1.0
    %v284 = vrcp.pop %v283
    %v285 = vmul.f32 1.0, %v284
    %v286 = vmul.f32 %v285, 2.0
    %v287 = vsub.f32 %v286, 1.0
    %v288 = vmul.f32 %v285, 0.0
    %290 = vrot.lane.b32.xlu0 %v287, 64
    %v291 = vpop.permute.xlu0 %290
    %v293 = vmul.f32 %v285, %v291
    %295 = vrot.lane.b32.xlu0 %v293, 32
    %v296 = vpop.permute.xlu0 %295
    %v298 = vadd.f32 %v288, %v296
    %v299 = vtanh.pop %v298
    %301 = vrot.lane.b32.xlu0 %v299, 64
    %v302 = vpop.permute.xlu0 %301
    %v304 = vmul.f32 %v285, %v302
    %v305 = vpack.c.bf16 %v304, %v304
    %v306 = vld [vmem:[%s3] sm:$0xf]
    %v307 = vld [vmem:[%s3 + $0x4] sm:$0xf]
    %v308 = vld [vmem:[%s3 + $0x8] sm:$0xf]
    %v309 = vld [vmem:[%s3 + $0xc] sm:$0xf]
    %v310 = vld [vmem:[%s4] sm:$0xf]
    %v311 = vld [vmem:[%s4 + $0x4] sm:$0xf]
    %v312 = vld [vmem:[%s4 + $0x8] sm:$0xf]
    %v313 = vld [vmem:[%s4 + $0xc] sm:$0xf]
    %v318 = vunpack.c.l.b16 %v310
    %v319 = vunpack.c.l.b16 %v311
    %v320 = vunpack.c.l.b16 %v312
    %v321 = vunpack.c.l.b16 %v313
    %v322 = vpack.c.b16 %v319, %v318
    %v323 = vpack.c.b16 %v321, %v320
    %326 = vmatprep.subr.bf16.mxu0 0
    %327 = vmatpush1.bf16.msra.mxu0 %v322
    %328 = vmatprep.subr.bf16.mxu0 0
    %329 = vmatpush1.bf16.msra.mxu0 %v323
    %330 = vmatprep.subr.bf16.mxu0 0
    %331 = vmatpush1.bf16.msra.mxu0 0
    %332 = vmatprep.subr.bf16.mxu0 0
    %333 = vmatpush1.bf16.msra.mxu0 0
    %334 = vmatprep.subr.bf16.mxu0 0
    %335 = vmatpush1.bf16.msra.mxu0 0
    %336 = vmatprep.subr.bf16.mxu0 0
    %337 = vmatpush1.bf16.msra.mxu0 0
    %338 = vmatprep.subr.bf16.mxu0 0
    %339 = vmatpush1.bf16.msra.mxu0 0
    %340 = vmatprep.subr.bf16.mxu0 0
    %341 = vmatpush1.bf16.msra.mxu0 0
    %342 = vmatprep.subr.bf16.mxu0 0
    %343 = vmatpush1.bf16.msra.mxu0 0
    %344 = vmatprep.subr.bf16.mxu0 0
    %345 = vmatpush1.bf16.msra.mxu0 0
    %346 = vmatprep.subr.bf16.mxu0 0
    %347 = vmatpush1.bf16.msra.mxu0 0
    %348 = vmatprep.subr.bf16.mxu0 0
    %349 = vmatpush1.bf16.msra.mxu0 0
    %350 = vmatprep.subr.bf16.mxu0 0
    %351 = vmatpush1.bf16.msra.mxu0 0
    %352 = vmatprep.subr.bf16.mxu0 0
    %353 = vmatpush1.bf16.msra.mxu0 0
    %354 = vmatprep.subr.bf16.mxu0 0
    %355 = vmatpush1.bf16.msra.mxu0 0
    %356 = vmatprep.subr.bf16.mxu0 0
    %357 = vmatpush1.bf16.msra.mxu0 0
    %358 = vmatprep.mubr.bf16.mxu0 0
    %359 = vmatmul.mubr.bf16.gmra.mrb[0].mxu0 %v237
    %v360 = vpop.f32.mrb[0].mxu0
    %v361 = vadd.f32 0.0, %v360
    %v362 = vpop.f32.mrb[0].mxu0
    %v363 = vpop.f32.mrb[0].mxu0
    %v364 = vpop.f32.mrb[0].mxu0
    %365 = vdwg.mxu0
    %367 = vrot.lane.b32.xlu0 %v305, 32
    %v368 = vpop.permute.xlu0 %367
    %v373 = vunpack.c.l.b16 %v306
    %v374 = vunpack.c.l.b16 %v307
    %v375 = vunpack.c.l.b16 %v308
    %v376 = vunpack.c.l.b16 %v309
    %v377 = vpack.c.b16 %v374, %v373
    %v378 = vpack.c.b16 %v376, %v375
    %v382 = vsel %vm235, %v368, 0
    %384 = vmatprep.subr.bf16.mxu0 0
    %385 = vmatpush1.bf16.msra.mxu0 %v377
    %386 = vmatprep.subr.bf16.mxu0 0
    %387 = vmatpush1.bf16.msra.mxu0 %v378
    %388 = vmatprep.subr.bf16.mxu0 0
    %389 = vmatpush1.bf16.msra.mxu0 0
    %390 = vmatprep.subr.bf16.mxu0 0
    %391 = vmatpush1.bf16.msra.mxu0 0
    %392 = vmatprep.subr.bf16.mxu0 0
    %393 = vmatpush1.bf16.msra.mxu0 0
    %394 = vmatprep.subr.bf16.mxu0 0
    %395 = vmatpush1.bf16.msra.mxu0 0
    %396 = vmatprep.subr.bf16.mxu0 0
    %397 = vmatpush1.bf16.msra.mxu0 0
    %398 = vmatprep.subr.bf16.mxu0 0
    %399 = vmatpush1.bf16.msra.mxu0 0
    %400 = vmatprep.subr.bf16.mxu0 0
    %401 = vmatpush1.bf16.msra.mxu0 0
    %402 = vmatprep.subr.bf16.mxu0 0
    %403 = vmatpush1.bf16.msra.mxu0 0
    %404 = vmatprep.subr.bf16.mxu0 0
    %405 = vmatpush1.bf16.msra.mxu0 0
    %406 = vmatprep.subr.bf16.mxu0 0
    %407 = vmatpush1.bf16.msra.mxu0 0
    %408 = vmatprep.subr.bf16.mxu0 0
    %409 = vmatpush1.bf16.msra.mxu0 0
    %410 = vmatprep.subr.bf16.mxu0 0
    %411 = vmatpush1.bf16.msra.mxu0 0
    %412 = vmatprep.subr.bf16.mxu0 0
    %413 = vmatpush1.bf16.msra.mxu0 0
    %414 = vmatprep.subr.bf16.mxu0 0
    %415 = vmatpush1.bf16.msra.mxu0 0
    %416 = vmatprep.mubr.bf16.mxu0 0
    %417 = vmatmul.mubr.bf16.gmra.mrb[0].mxu0 %v382
    %v418 = vpop.f32.mrb[0].mxu0
    %v419 = vadd.f32 %v361, %v418
    %v420 = vpop.f32.mrb[0].mxu0
    %v421 = vpop.f32.mrb[0].mxu0
    %v422 = vpop.f32.mrb[0].mxu0
    %423 = vdwg.mxu0
    %v424 = vadd.f32 %v419, %v210
    %v425 = vxor.u32 %v424, 2147483648
    %v426 = vmul.f32 %v425, 1.442695
    %v427 = vpow.pop %v426
    %v428 = vadd.f32 %v427, 1.0
    %v429 = vrcp.pop %v428
    %v430 = vmul.f32 1.0, %v429
    %v431 = vmul.f32 %v430, 2.0
    %v432 = vsub.f32 %v431, 1.0
    %v433 = vmul.f32 %v430, 0.0
    %435 = vrot.lane.b32.xlu0 %v432, 64
    %v436 = vpop.permute.xlu0 %435
    %v438 = vmul.f32 %v430, %v436
    %440 = vrot.lane.b32.xlu0 %v438, 32
    %v441 = vpop.permute.xlu0 %440
    %v443 = vadd.f32 %v433, %v441
    %v444 = vtanh.pop %v443
    %446 = vrot.lane.b32.xlu0 %v444, 64
    %v447 = vpop.permute.xlu0 %446
    %v449 = vmul.f32 %v430, %v447
    %v450 = vpack.c.bf16 %v449, %v449
    %v451 = vld [vmem:[#allocation5] sm:$0xf]
    %v452 = vld [vmem:[#allocation5 + $0x4] sm:$0xf]
    %v453 = vld [vmem:[#allocation5 + $0x8] sm:$0xf]
    %v454 = vld [vmem:[#allocation5 + $0xc] sm:$0xf]
    %v455 = vld [vmem:[#allocation7] sm:$0xf]
    %v456 = vld [vmem:[#allocation7 + $0x4] sm:$0xf]
    %v457 = vld [vmem:[#allocation7 + $0x8] sm:$0xf]
    %v458 = vld [vmem:[#allocation7 + $0xc] sm:$0xf]
    %v463 = vunpack.c.l.b16 %v455
    %v464 = vunpack.c.l.b16 %v456
    %v465 = vunpack.c.l.b16 %v457
    %v466 = vunpack.c.l.b16 %v458
    %v467 = vpack.c.b16 %v464, %v463
    %v468 = vpack.c.b16 %v466, %v465
    %471 = vmatprep.subr.bf16.mxu0 0
    %472 = vmatpush1.bf16.msra.mxu0 %v467
    %473 = vmatprep.subr.bf16.mxu0 0
    %474 = vmatpush1.bf16.msra.mxu0 %v468
    %475 = vmatprep.subr.bf16.mxu0 0
    %476 = vmatpush1.bf16.msra.mxu0 0
    %477 = vmatprep.subr.bf16.mxu0 0
    %478 = vmatpush1.bf16.msra.mxu0 0
    %479 = vmatprep.subr.bf16.mxu0 0
    %480 = vmatpush1.bf16.msra.mxu0 0
    %481 = vmatprep.subr.bf16.mxu0 0
    %482 = vmatpush1.bf16.msra.mxu0 0
    %483 = vmatprep.subr.bf16.mxu0 0
    %484 = vmatpush1.bf16.msra.mxu0 0
    %485 = vmatprep.subr.bf16.mxu0 0
    %486 = vmatpush1.bf16.msra.mxu0 0
    %487 = vmatprep.subr.bf16.mxu0 0
    %488 = vmatpush1.bf16.msra.mxu0 0
    %489 = vmatprep.subr.bf16.mxu0 0
    %490 = vmatpush1.bf16.msra.mxu0 0
    %491 = vmatprep.subr.bf16.mxu0 0
    %492 = vmatpush1.bf16.msra.mxu0 0
    %493 = vmatprep.subr.bf16.mxu0 0
    %494 = vmatpush1.bf16.msra.mxu0 0
    %495 = vmatprep.subr.bf16.mxu0 0
    %496 = vmatpush1.bf16.msra.mxu0 0
    %497 = vmatprep.subr.bf16.mxu0 0
    %498 = vmatpush1.bf16.msra.mxu0 0
    %499 = vmatprep.subr.bf16.mxu0 0
    %500 = vmatpush1.bf16.msra.mxu0 0
    %501 = vmatprep.subr.bf16.mxu0 0
    %502 = vmatpush1.bf16.msra.mxu0 0
    %503 = vmatprep.mubr.bf16.mxu0 0
    %504 = vmatmul.mubr.bf16.gmra.mrb[0].mxu0 %v237
    %v505 = vpop.f32.mrb[0].mxu0
    %v506 = vadd.f32 0.0, %v505
    %v507 = vpop.f32.mrb[0].mxu0
    %v508 = vpop.f32.mrb[0].mxu0
    %v509 = vpop.f32.mrb[0].mxu0
    %510 = vdwg.mxu0
    %512 = vrot.lane.b32.xlu0 %v450, 32
    %v513 = vpop.permute.xlu0 %512
    %v518 = vunpack.c.l.b16 %v451
    %v519 = vunpack.c.l.b16 %v452
    %v520 = vunpack.c.l.b16 %v453
    %v521 = vunpack.c.l.b16 %v454
    %v522 = vpack.c.b16 %v519, %v518
    %v523 = vpack.c.b16 %v521, %v520
    %v527 = vsel %vm235, %v513, 0
    %529 = vmatprep.subr.bf16.mxu0 0
    %530 = vmatpush1.bf16.msra.mxu0 %v522
    %531 = vmatprep.subr.bf16.mxu0 0
    %532 = vmatpush1.bf16.msra.mxu0 %v523
    %533 = vmatprep.subr.bf16.mxu0 0
    %534 = vmatpush1.bf16.msra.mxu0 0
    %535 = vmatprep.subr.bf16.mxu0 0
    %536 = vmatpush1.bf16.msra.mxu0 0
    %537 = vmatprep.subr.bf16.mxu0 0
    %538 = vmatpush1.bf16.msra.mxu0 0
    %539 = vmatprep.subr.bf16.mxu0 0
    %540 = vmatpush1.bf16.msra.mxu0 0
    %541 = vmatprep.subr.bf16.mxu0 0
    %542 = vmatpush1.bf16.msra.mxu0 0
    %543 = vmatprep.subr.bf16.mxu0 0
    %544 = vmatpush1.bf16.msra.mxu0 0
    %545 = vmatprep.subr.bf16.mxu0 0
    %546 = vmatpush1.bf16.msra.mxu0 0
    %547 = vmatprep.subr.bf16.mxu0 0
    %548 = vmatpush1.bf16.msra.mxu0 0
    %549 = vmatprep.subr.bf16.mxu0 0
    %550 = vmatpush1.bf16.msra.mxu0 0
    %551 = vmatprep.subr.bf16.mxu0 0
    %552 = vmatpush1.bf16.msra.mxu0 0
    %553 = vmatprep.subr.bf16.mxu0 0
    %554 = vmatpush1.bf16.msra.mxu0 0
    %555 = vmatprep.subr.bf16.mxu0 0
    %556 = vmatpush1.bf16.msra.mxu0 0
    %557 = vmatprep.subr.bf16.mxu0 0
    %558 = vmatpush1.bf16.msra.mxu0 0
    %559 = vmatprep.subr.bf16.mxu0 0
    %560 = vmatpush1.bf16.msra.mxu0 0
    %561 = vmatprep.mubr.bf16.mxu0 0
    %562 = vmatmul.mubr.bf16.gmra.mrb[0].mxu0 %v527
    %v563 = vpop.f32.mrb[0].mxu0
    %v564 = vadd.f32 %v506, %v563
    %v565 = vpop.f32.mrb[0].mxu0
    %v566 = vpop.f32.mrb[0].mxu0
    %v567 = vpop.f32.mrb[0].mxu0
    %568 = vdwg.mxu0
    %v569 = vadd.f32 %v564, %v217
    %v570 = vxor.u32 %v569, 2147483648
    %v571 = vmul.f32 %v570, 1.442695
    %v572 = vpow.pop %v571
    %v573 = vadd.f32 %v572, 1.0
    %v574 = vrcp.pop %v573
    %v575 = vmul.f32 1.0, %v574
    %v576 = vmul.f32 %v575, 2.0
    %v577 = vsub.f32 %v576, 1.0
    %v578 = vmul.f32 %v575, 0.0
    %580 = vrot.lane.b32.xlu0 %v577, 64
    %v581 = vpop.permute.xlu0 %580
    %v583 = vmul.f32 %v575, %v581
    %585 = vrot.lane.b32.xlu0 %v583, 32
    %v586 = vpop.permute.xlu0 %585
    %v588 = vadd.f32 %v578, %v586
    %v589 = vtanh.pop %v588
    %591 = vrot.lane.b32.xlu0 %v589, 64
    %v592 = vpop.permute.xlu0 %591
    %v594 = vmul.f32 %v575, %v592
    %595 = vmatprep.subr.bf16.mxu0 0
    %596 = vmatpush1.bf16.msra.mxu0 %v231
    %597 = vmatprep.subr.bf16.mxu0 0
    %598 = vmatpush1.bf16.msra.mxu0 %v232
    %599 = vmatprep.subr.bf16.mxu0 0
    %600 = vmatpush1.bf16.msra.mxu0 0
    %601 = vmatprep.subr.bf16.mxu0 0
    %602 = vmatpush1.bf16.msra.mxu0 0
    %603 = vmatprep.subr.bf16.mxu0 0
    %604 = vmatpush1.bf16.msra.mxu0 0
    %605 = vmatprep.subr.bf16.mxu0 0
    %606 = vmatpush1.bf16.msra.mxu0 0
    %607 = vmatprep.subr.bf16.mxu0 0
    %608 = vmatpush1.bf16.msra.mxu0 0
    %609 = vmatprep.subr.bf16.mxu0 0
    %610 = vmatpush1.bf16.msra.mxu0 0
    %611 = vmatprep.subr.bf16.mxu0 0
    %612 = vmatpush1.bf16.msra.mxu0 0
    %613 = vmatprep.subr.bf16.mxu0 0
    %614 = vmatpush1.bf16.msra.mxu0 0
    %615 = vmatprep.subr.bf16.mxu0 0
    %616 = vmatpush1.bf16.msra.mxu0 0
    %617 = vmatprep.subr.bf16.mxu0 0
    %618 = vmatpush1.bf16.msra.mxu0 0
    %619 = vmatprep.subr.bf16.mxu0 0
    %620 = vmatpush1.bf16.msra.mxu0 0
    %621 = vmatprep.subr.bf16.mxu0 0
    %622 = vmatpush1.bf16.msra.mxu0 0
    %623 = vmatprep.subr.bf16.mxu0 0
    %624 = vmatpush1.bf16.msra.mxu0 0
    %625 = vmatprep.subr.bf16.mxu0 0
    %626 = vmatpush1.bf16.msra.mxu0 0
    %627 = vmatprep.mubr.bf16.mxu0 0
    %628 = vmatmul.mubr.bf16.gmra.mrb[0].mxu0 %v382
    %v629 = vpop.f32.mrb[0].mxu0
    %v630 = vadd.f32 0.0, %v629
    %v631 = vpop.f32.mrb[0].mxu0
    %v632 = vpop.f32.mrb[0].mxu0
    %v633 = vpop.f32.mrb[0].mxu0
    %634 = vdwg.mxu0
    %v635 = vadd.f32 %v178, %v630
    %v636 = vxor.u32 %v635, 2147483648
    %v637 = vmul.f32 %v636, 1.442695
    %v638 = vpow.pop %v637
    %v639 = vadd.f32 %v638, 1.0
    %v640 = vrcp.pop %v639
    %v641 = vmul.f32 1.0, %v640
    %v642 = vmul.f32 %v641, 2.0
    %v643 = vsub.f32 %v642, 1.0
    %v644 = vmul.f32 %v641, %v298
    %646 = vrot.lane.b32.xlu0 %v643, 64
    %v647 = vpop.permute.xlu0 %646
    %v649 = vmul.f32 %v641, %v647
    %651 = vrot.lane.b32.xlu0 %v649, 32
    %v652 = vpop.permute.xlu0 %651
    %v654 = vadd.f32 %v644, %v652
    %v655 = vtanh.pop %v654
    %657 = vrot.lane.b32.xlu0 %v655, 64
    %v658 = vpop.permute.xlu0 %657
    %v660 = vmul.f32 %v641, %v658
    %v661 = vpack.c.bf16 %v660, %v660
    %662 = vmatprep.subr.bf16.mxu0 0
    %663 = vmatpush1.bf16.msra.mxu0 %v322
    %664 = vmatprep.subr.bf16.mxu0 0
    %665 = vmatpush1.bf16.msra.mxu0 %v323
    %666 = vmatprep.subr.bf16.mxu0 0
    %667 = vmatpush1.bf16.msra.mxu0 0
    %668 = vmatprep.subr.bf16.mxu0 0
    %669 = vmatpush1.bf16.msra.mxu0 0
    %670 = vmatprep.subr.bf16.mxu0 0
    %671 = vmatpush1.bf16.msra.mxu0 0
    %672 = vmatprep.subr.bf16.mxu0 0
    %673 = vmatpush1.bf16.msra.mxu0 0
    %674 = vmatprep.subr.bf16.mxu0 0
    %675 = vmatpush1.bf16.msra.mxu0 0
    %676 = vmatprep.subr.bf16.mxu0 0
    %677 = vmatpush1.bf16.msra.mxu0 0
    %678 = vmatprep.subr.bf16.mxu0 0
    %679 = vmatpush1.bf16.msra.mxu0 0
    %680 = vmatprep.subr.bf16.mxu0 0
    %681 = vmatpush1.bf16.msra.mxu0 0
    %682 = vmatprep.subr.bf16.mxu0 0
    %683 = vmatpush1.bf16.msra.mxu0 0
    %684 = vmatprep.subr.bf16.mxu0 0
    %685 = vmatpush1.bf16.msra.mxu0 0
    %686 = vmatprep.subr.bf16.mxu0 0
    %687 = vmatpush1.bf16.msra.mxu0 0
    %688 = vmatprep.subr.bf16.mxu0 0
    %689 = vmatpush1.bf16.msra.mxu0 0
    %690 = vmatprep.subr.bf16.mxu0 0
    %691 = vmatpush1.bf16.msra.mxu0 0
    %692 = vmatprep.subr.bf16.mxu0 0
    %693 = vmatpush1.bf16.msra.mxu0 0
    %694 = vmatprep.mubr.bf16.mxu0 0
    %695 = vmatmul.mubr.bf16.gmra.mrb[0].mxu0 %v527
    %v696 = vpop.f32.mrb[0].mxu0
    %v697 = vadd.f32 0.0, %v696
    %v698 = vpop.f32.mrb[0].mxu0
    %v699 = vpop.f32.mrb[0].mxu0
    %v700 = vpop.f32.mrb[0].mxu0
    %701 = vdwg.mxu0
    %703 = vrot.lane.b32.xlu0 %v661, 32
    %v704 = vpop.permute.xlu0 %703
    %v706 = vsel %vm235, %v704, 0
    %708 = vmatprep.subr.bf16.mxu0 0
    %709 = vmatpush1.bf16.msra.mxu0 %v377
    %710 = vmatprep.subr.bf16.mxu0 0
    %711 = vmatpush1.bf16.msra.mxu0 %v378
    %712 = vmatprep.subr.bf16.mxu0 0
    %713 = vmatpush1.bf16.msra.mxu0 0
    %714 = vmatprep.subr.bf16.mxu0 0
    %715 = vmatpush1.bf16.msra.mxu0 0
    %716 = vmatprep.subr.bf16.mxu0 0
    %717 = vmatpush1.bf16.msra.mxu0 0
    %718 = vmatprep.subr.bf16.mxu0 0
    %719 = vmatpush1.bf16.msra.mxu0 0
    %720 = vmatprep.subr.bf16.mxu0 0
    %721 = vmatpush1.bf16.msra.mxu0 0
    %722 = vmatprep.subr.bf16.mxu0 0
    %723 = vmatpush1.bf16.msra.mxu0 0
    %724 = vmatprep.subr.bf16.mxu0 0
    %725 = vmatpush1.bf16.msra.mxu0 0
    %726 = vmatprep.subr.bf16.mxu0 0
    %727 = vmatpush1.bf16.msra.mxu0 0
    %728 = vmatprep.subr.bf16.mxu0 0
    %729 = vmatpush1.bf16.msra.mxu0 0
    %730 = vmatprep.subr.bf16.mxu0 0
    %731 = vmatpush1.bf16.msra.mxu0 0
    %732 = vmatprep.subr.bf16.mxu0 0
    %733 = vmatpush1.bf16.msra.mxu0 0
    %734 = vmatprep.subr.bf16.mxu0 0
    %735 = vmatpush1.bf16.msra.mxu0 0
    %736 = vmatprep.subr.bf16.mxu0 0
    %737 = vmatpush1.bf16.msra.mxu0 0
    %738 = vmatprep.subr.bf16.mxu0 0
    %739 = vmatpush1.bf16.msra.mxu0 0
    %740 = vmatprep.mubr.bf16.mxu0 0
    %741 = vmatmul.mubr.bf16.gmra.mrb[0].mxu0 %v706
    %v742 = vpop.f32.mrb[0].mxu0
    %v743 = vadd.f32 %v697, %v742
    %v744 = vpop.f32.mrb[0].mxu0
    %v745 = vpop.f32.mrb[0].mxu0
    %v746 = vpop.f32.mrb[0].mxu0
    %747 = vdwg.mxu0
    %v748 = vadd.f32 %v743, %v210
    %v749 = vxor.u32 %v748, 2147483648
    %v750 = vmul.f32 %v749, 1.442695
    %v751 = vpow.pop %v750
    %v752 = vadd.f32 %v751, 1.0
    %v753 = vrcp.pop %v752
    %v754 = vmul.f32 1.0, %v753
    %v755 = vmul.f32 %v754, 2.0
    %v756 = vsub.f32 %v755, 1.0
    %v757 = vmul.f32 %v754, %v443
    %759 = vrot.lane.b32.xlu0 %v756, 64
    %v760 = vpop.permute.xlu0 %759
    %v762 = vmul.f32 %v754, %v760
    %764 = vrot.lane.b32.xlu0 %v762, 32
    %v765 = vpop.permute.xlu0 %764
    %v767 = vadd.f32 %v757, %v765
    %v768 = vtanh.pop %v767
    %770 = vrot.lane.b32.xlu0 %v768, 64
    %v771 = vpop.permute.xlu0 %770
    %v773 = vmul.f32 %v754, %v771
    %v774 = vpack.c.bf16 %v773, %v773
    %v775 = vpack.c.bf16 %v594, %v594
    %777 = vrot.lane.b32.xlu0 %v775, 32
    %v778 = vpop.permute.xlu0 %777
    %v780 = vsel %vm235, %v778, 0
    %782 = vmatprep.subr.bf16.mxu0 0
    %783 = vmatpush1.bf16.msra.mxu0 %v467
    %784 = vmatprep.subr.bf16.mxu0 0
    %785 = vmatpush1.bf16.msra.mxu0 %v468
    %786 = vmatprep.subr.bf16.mxu0 0
    %787 = vmatpush1.bf16.msra.mxu0 0
    %788 = vmatprep.subr.bf16.mxu0 0
    %789 = vmatpush1.bf16.msra.mxu0 0
    %790 = vmatprep.subr.bf16.mxu0 0
    %791 = vmatpush1.bf16.msra.mxu0 0
    %792 = vmatprep.subr.bf16.mxu0 0
    %793 = vmatpush1.bf16.msra.mxu0 0
    %794 = vmatprep.subr.bf16.mxu0 0
    %795 = vmatpush1.bf16.msra.mxu0 0
    %796 = vmatprep.subr.bf16.mxu0 0
    %797 = vmatpush1.bf16.msra.mxu0 0
    %798 = vmatprep.subr.bf16.mxu0 0
    %799 = vmatpush1.bf16.msra.mxu0 0
    %800 = vmatprep.subr.bf16.mxu0 0
    %801 = vmatpush1.bf16.msra.mxu0 0
    %802 = vmatprep.subr.bf16.mxu0 0
    %803 = vmatpush1.bf16.msra.mxu0 0
    %804 = vmatprep.subr.bf16.mxu0 0
    %805 = vmatpush1.bf16.msra.mxu0 0
    %806 = vmatprep.subr.bf16.mxu0 0
    %807 = vmatpush1.bf16.msra.mxu0 0
    %808 = vmatprep.subr.bf16.mxu0 0
    %809 = vmatpush1.bf16.msra.mxu0 0
    %810 = vmatprep.subr.bf16.mxu0 0
    %811 = vmatpush1.bf16.msra.mxu0 0
    %812 = vmatprep.subr.bf16.mxu0 0
    %813 = vmatpush1.bf16.msra.mxu0 0
    %814 = vmatprep.mubr.bf16.mxu0 0
    %815 = vmatmul.mubr.bf16.gmra.mrb[0].mxu0 %v780
    %v816 = vpop.f32.mrb[0].mxu0
    %v817 = vadd.f32 0.0, %v816
    %v818 = vpop.f32.mrb[0].mxu0
    %v819 = vpop.f32.mrb[0].mxu0
    %v820 = vpop.f32.mrb[0].mxu0
    %821 = vdwg.mxu0
    %823 = vrot.lane.b32.xlu0 %v774, 32
    %v824 = vpop.permute.xlu0 %823
    %v826 = vsel %vm235, %v824, 0
    %828 = vmatprep.subr.bf16.mxu0 0
    %829 = vmatpush1.bf16.msra.mxu0 %v522
    %830 = vmatprep.subr.bf16.mxu0 0
    %831 = vmatpush1.bf16.msra.mxu0 %v523
    %832 = vmatprep.subr.bf16.mxu0 0
    %833 = vmatpush1.bf16.msra.mxu0 0
    %834 = vmatprep.subr.bf16.mxu0 0
    %835 = vmatpush1.bf16.msra.mxu0 0
    %836 = vmatprep.subr.bf16.mxu0 0
    %837 = vmatpush1.bf16.msra.mxu0 0
    %838 = vmatprep.subr.bf16.mxu0 0
    %839 = vmatpush1.bf16.msra.mxu0 0
    %840 = vmatprep.subr.bf16.mxu0 0
    %841 = vmatpush1.bf16.msra.mxu0 0
    %842 = vmatprep.subr.bf16.mxu0 0
    %843 = vmatpush1.bf16.msra.mxu0 0
    %844 = vmatprep.subr.bf16.mxu0 0
    %845 = vmatpush1.bf16.msra.mxu0 0
    %846 = vmatprep.subr.bf16.mxu0 0
    %847 = vmatpush1.bf16.msra.mxu0 0
    %848 = vmatprep.subr.bf16.mxu0 0
    %849 = vmatpush1.bf16.msra.mxu0 0
    %850 = vmatprep.subr.bf16.mxu0 0
    %851 = vmatpush1.bf16.msra.mxu0 0
    %852 = vmatprep.subr.bf16.mxu0 0
    %853 = vmatpush1.bf16.msra.mxu0 0
    %854 = vmatprep.subr.bf16.mxu0 0
    %855 = vmatpush1.bf16.msra.mxu0 0
    %856 = vmatprep.subr.bf16.mxu0 0
    %857 = vmatpush1.bf16.msra.mxu0 0
    %858 = vmatprep.subr.bf16.mxu0 0
    %859 = vmatpush1.bf16.msra.mxu0 0
    %860 = vmatprep.mubr.bf16.mxu0 0
    %861 = vmatmul.mubr.bf16.gmra.mrb[0].mxu0 %v826
    %v862 = vpop.f32.mrb[0].mxu0
    %v863 = vadd.f32 %v817, %v862
    %v864 = vpop.f32.mrb[0].mxu0
    %v865 = vpop.f32.mrb[0].mxu0
    %v866 = vpop.f32.mrb[0].mxu0
    %867 = vdwg.mxu0
    %v868 = vadd.f32 %v863, %v217
    %v869 = vxor.u32 %v868, 2147483648
    %v870 = vmul.f32 %v869, 1.442695
    %v871 = vpow.pop %v870
    %v872 = vadd.f32 %v871, 1.0
    %v873 = vrcp.pop %v872
    %v874 = vmul.f32 1.0, %v873
    %v875 = vmul.f32 %v874, 2.0
    %v876 = vsub.f32 %v875, 1.0
    %v877 = vmul.f32 %v874, %v588
    %879 = vrot.lane.b32.xlu0 %v876, 64
    %v880 = vpop.permute.xlu0 %879
    %v882 = vmul.f32 %v874, %v880
    %884 = vrot.lane.b32.xlu0 %v882, 32
    %v885 = vpop.permute.xlu0 %884
    %v887 = vadd.f32 %v877, %v885
    %v888 = vtanh.pop %v887
    %890 = vrot.lane.b32.xlu0 %v888, 64
    %v891 = vpop.permute.xlu0 %890
    %v893 = vmul.f32 %v874, %v891
    %894 = vmatprep.subr.bf16.mxu0 0
    %895 = vmatpush1.bf16.msra.mxu0 %v231
    %896 = vmatprep.subr.bf16.mxu0 0
    %897 = vmatpush1.bf16.msra.mxu0 %v232
    %898 = vmatprep.subr.bf16.mxu0 0
    %899 = vmatpush1.bf16.msra.mxu0 0
    %900 = vmatprep.subr.bf16.mxu0 0
    %901 = vmatpush1.bf16.msra.mxu0 0
    %902 = vmatprep.subr.bf16.mxu0 0
    %903 = vmatpush1.bf16.msra.mxu0 0
    %904 = vmatprep.subr.bf16.mxu0 0
    %905 = vmatpush1.bf16.msra.mxu0 0
    %906 = vmatprep.subr.bf16.mxu0 0
    %907 = vmatpush1.bf16.msra.mxu0 0
    %908 = vmatprep.subr.bf16.mxu0 0
    %909 = vmatpush1.bf16.msra.mxu0 0
    %910 = vmatprep.subr.bf16.mxu0 0
    %911 = vmatpush1.bf16.msra.mxu0 0
    %912 = vmatprep.subr.bf16.mxu0 0
    %913 = vmatpush1.bf16.msra.mxu0 0
    %914 = vmatprep.subr.bf16.mxu0 0
    %915 = vmatpush1.bf16.msra.mxu0 0
    %916 = vmatprep.subr.bf16.mxu0 0
    %917 = vmatpush1.bf16.msra.mxu0 0
    %918 = vmatprep.subr.bf16.mxu0 0
    %919 = vmatpush1.bf16.msra.mxu0 0
    %920 = vmatprep.subr.bf16.mxu0 0
    %921 = vmatpush1.bf16.msra.mxu0 0
    %922 = vmatprep.subr.bf16.mxu0 0
    %923 = vmatpush1.bf16.msra.mxu0 0
    %924 = vmatprep.subr.bf16.mxu0 0
    %925 = vmatpush1.bf16.msra.mxu0 0
    %926 = vmatprep.mubr.bf16.mxu0 0
    %927 = vmatmul.mubr.bf16.gmra.mrb[0].mxu0 %v706
    %v928 = vpop.f32.mrb[0].mxu0
    %v929 = vadd.f32 0.0, %v928
    %v930 = vpop.f32.mrb[0].mxu0
    %v931 = vpop.f32.mrb[0].mxu0
    %v932 = vpop.f32.mrb[0].mxu0
    %933 = vdwg.mxu0
    %v934 = vadd.f32 %v183, %v929
    %v935 = vxor.u32 %v934, 2147483648
    %v936 = vmul.f32 %v935, 1.442695
    %v937 = vpow.pop %v936
    %v938 = vadd.f32 %v937, 1.0
    %v939 = vrcp.pop %v938
    %v940 = vmul.f32 1.0, %v939
    %v941 = vmul.f32 %v940, 2.0
    %v942 = vsub.f32 %v941, 1.0
    %v943 = vmul.f32 %v940, %v654
    %945 = vrot.lane.b32.xlu0 %v942, 64
    %v946 = vpop.permute.xlu0 %945
    %v948 = vmul.f32 %v940, %v946
    %950 = vrot.lane.b32.xlu0 %v948, 32
    %v951 = vpop.permute.xlu0 %950
    %v953 = vadd.f32 %v943, %v951
    %v954 = vtanh.pop %v953
    %956 = vrot.lane.b32.xlu0 %v954, 64
    %v957 = vpop.permute.xlu0 %956
    %v959 = vmul.f32 %v940, %v957
    %v960 = vpack.c.bf16 %v959, %v959
    %961 = vmatprep.subr.bf16.mxu0 0
    %962 = vmatpush1.bf16.msra.mxu0 %v322
    %963 = vmatprep.subr.bf16.mxu0 0
    %964 = vmatpush1.bf16.msra.mxu0 %v323
    %965 = vmatprep.subr.bf16.mxu0 0
    %966 = vmatpush1.bf16.msra.mxu0 0
    %967 = vmatprep.subr.bf16.mxu0 0
    %968 = vmatpush1.bf16.msra.mxu0 0
    %969 = vmatprep.subr.bf16.mxu0 0
    %970 = vmatpush1.bf16.msra.mxu0 0
    %971 = vmatprep.subr.bf16.mxu0 0
    %972 = vmatpush1.bf16.msra.mxu0 0
    %973 = vmatprep.subr.bf16.mxu0 0
    %974 = vmatpush1.bf16.msra.mxu0 0
    %975 = vmatprep.subr.bf16.mxu0 0
    %976 = vmatpush1.bf16.msra.mxu0 0
    %977 = vmatprep.subr.bf16.mxu0 0
    %978 = vmatpush1.bf16.msra.mxu0 0
    %979 = vmatprep.subr.bf16.mxu0 0
    %980 = vmatpush1.bf16.msra.mxu0 0
    %981 = vmatprep.subr.bf16.mxu0 0
    %982 = vmatpush1.bf16.msra.mxu0 0
    %983 = vmatprep.subr.bf16.mxu0 0
    %984 = vmatpush1.bf16.msra.mxu0 0
    %985 = vmatprep.subr.bf16.mxu0 0
    %986 = vmatpush1.bf16.msra.mxu0 0
    %987 = vmatprep.subr.bf16.mxu0 0
    %988 = vmatpush1.bf16.msra.mxu0 0
    %989 = vmatprep.subr.bf16.mxu0 0
    %990 = vmatpush1.bf16.msra.mxu0 0
    %991 = vmatprep.subr.bf16.mxu0 0
    %992 = vmatpush1.bf16.msra.mxu0 0
    %993 = vmatprep.mubr.bf16.mxu0 0
    %994 = vmatmul.mubr.bf16.gmra.mrb[0].mxu0 %v826
    %v995 = vpop.f32.mrb[0].mxu0
    %v996 = vadd.f32 0.0, %v995
    %v997 = vpop.f32.mrb[0].mxu0
    %v998 = vpop.f32.mrb[0].mxu0
    %v999 = vpop.f32.mrb[0].mxu0
    %1000 = vdwg.mxu0
    %1002 = vrot.lane.b32.xlu0 %v960, 32
    %v1003 = vpop.permute.xlu0 %1002
    %v1005 = vsel %vm235, %v1003, 0
    %1007 = vmatprep.subr.bf16.mxu0 0
    %1008 = vmatpush1.bf16.msra.mxu0 %v377
    %1009 = vmatprep.subr.bf16.mxu0 0
    %1010 = vmatpush1.bf16.msra.mxu0 %v378
    %1011 = vmatprep.subr.bf16.mxu0 0
    %1012 = vmatpush1.bf16.msra.mxu0 0
    %1013 = vmatprep.subr.bf16.mxu0 0
    %1014 = vmatpush1.bf16.msra.mxu0 0
    %1015 = vmatprep.subr.bf16.mxu0 0
    %1016 = vmatpush1.bf16.msra.mxu0 0
    %1017 = vmatprep.subr.bf16.mxu0 0
    %1018 = vmatpush1.bf16.msra.mxu0 0
    %1019 = vmatprep.subr.bf16.mxu0 0
    %1020 = vmatpush1.bf16.msra.mxu0 0
    %1021 = vmatprep.subr.bf16.mxu0 0
    %1022 = vmatpush1.bf16.msra.mxu0 0
    %1023 = vmatprep.subr.bf16.mxu0 0
    %1024 = vmatpush1.bf16.msra.mxu0 0
    %1025 = vmatprep.subr.bf16.mxu0 0
    %1026 = vmatpush1.bf16.msra.mxu0 0
    %1027 = vmatprep.subr.bf16.mxu0 0
    %1028 = vmatpush1.bf16.msra.mxu0 0
    %1029 = vmatprep.subr.bf16.mxu0 0
    %1030 = vmatpush1.bf16.msra.mxu0 0
    %1031 = vmatprep.subr.bf16.mxu0 0
    %1032 = vmatpush1.bf16.msra.mxu0 0
    %1033 = vmatprep.subr.bf16.mxu0 0
    %1034 = vmatpush1.bf16.msra.mxu0 0
    %1035 = vmatprep.subr.bf16.mxu0 0
    %1036 = vmatpush1.bf16.msra.mxu0 0
    %1037 = vmatprep.subr.bf16.mxu0 0
    %1038 = vmatpush1.bf16.msra.mxu0 0
    %1039 = vmatprep.mubr.bf16.mxu0 0
    %1040 = vmatmul.mubr.bf16.gmra.mrb[0].mxu0 %v1005
    %v1041 = vpop.f32.mrb[0].mxu0
    %v1042 = vadd.f32 %v996, %v1041
    %v1043 = vpop.f32.mrb[0].mxu0
    %v1044 = vpop.f32.mrb[0].mxu0
    %v1045 = vpop.f32.mrb[0].mxu0
    %1046 = vdwg.mxu0
    %v1047 = vadd.f32 %v1042, %v210
    %v1048 = vxor.u32 %v1047, 2147483648
    %v1049 = vmul.f32 %v1048, 1.442695
    %v1050 = vpow.pop %v1049
    %v1051 = vadd.f32 %v1050, 1.0
    %v1052 = vrcp.pop %v1051
    %v1053 = vmul.f32 1.0, %v1052
    %v1054 = vmul.f32 %v1053, 2.0
    %v1055 = vsub.f32 %v1054, 1.0
    %v1056 = vmul.f32 %v1053, %v767
    %1058 = vrot.lane.b32.xlu0 %v1055, 64
    %v1059 = vpop.permute.xlu0 %1058
    %v1061 = vmul.f32 %v1053, %v1059
    %1063 = vrot.lane.b32.xlu0 %v1061, 32
    %v1064 = vpop.permute.xlu0 %1063
    %v1066 = vadd.f32 %v1056, %v1064
    %v1067 = vtanh.pop %v1066
    %1069 = vrot.lane.b32.xlu0 %v1067, 64
    %v1070 = vpop.permute.xlu0 %1069
    %v1072 = vmul.f32 %v1053, %v1070
    %v1073 = vpack.c.bf16 %v1072, %v1072
    %v1074 = vpack.c.bf16 %v893, %v893
    %1076 = vrot.lane.b32.xlu0 %v1074, 32
    %v1077 = vpop.permute.xlu0 %1076
    %v1079 = vsel %vm235, %v1077, 0
    %1081 = vmatprep.subr.bf16.mxu0 0
    %1082 = vmatpush1.bf16.msra.mxu0 %v467
    %1083 = vmatprep.subr.bf16.mxu0 0
    %1084 = vmatpush1.bf16.msra.mxu0 %v468
    %1085 = vmatprep.subr.bf16.mxu0 0
    %1086 = vmatpush1.bf16.msra.mxu0 0
    %1087 = vmatprep.subr.bf16.mxu0 0
    %1088 = vmatpush1.bf16.msra.mxu0 0
    %1089 = vmatprep.subr.bf16.mxu0 0
    %1090 = vmatpush1.bf16.msra.mxu0 0
    %1091 = vmatprep.subr.bf16.mxu0 0
    %1092 = vmatpush1.bf16.msra.mxu0 0
    %1093 = vmatprep.subr.bf16.mxu0 0
    %1094 = vmatpush1.bf16.msra.mxu0 0
    %1095 = vmatprep.subr.bf16.mxu0 0
    %1096 = vmatpush1.bf16.msra.mxu0 0
    %1097 = vmatprep.subr.bf16.mxu0 0
    %1098 = vmatpush1.bf16.msra.mxu0 0
    %1099 = vmatprep.subr.bf16.mxu0 0
    %1100 = vmatpush1.bf16.msra.mxu0 0
    %1101 = vmatprep.subr.bf16.mxu0 0
    %1102 = vmatpush1.bf16.msra.mxu0 0
    %1103 = vmatprep.subr.bf16.mxu0 0
    %1104 = vmatpush1.bf16.msra.mxu0 0
    %1105 = vmatprep.subr.bf16.mxu0 0
    %1106 = vmatpush1.bf16.msra.mxu0 0
    %1107 = vmatprep.subr.bf16.mxu0 0
    %1108 = vmatpush1.bf16.msra.mxu0 0
    %1109 = vmatprep.subr.bf16.mxu0 0
    %1110 = vmatpush1.bf16.msra.mxu0 0
    %1111 = vmatprep.subr.bf16.mxu0 0
    %1112 = vmatpush1.bf16.msra.mxu0 0
    %1113 = vmatprep.mubr.bf16.mxu0 0
    %1114 = vmatmul.mubr.bf16.gmra.mrb[0].mxu0 %v1079
    %v1115 = vpop.f32.mrb[0].mxu0
    %v1116 = vadd.f32 0.0, %v1115
    %v1117 = vpop.f32.mrb[0].mxu0
    %v1118 = vpop.f32.mrb[0].mxu0
    %v1119 = vpop.f32.mrb[0].mxu0
    %1120 = vdwg.mxu0
    %1122 = vrot.lane.b32.xlu0 %v1073, 32
    %v1123 = vpop.permute.xlu0 %1122
    %v1125 = vsel %vm235, %v1123, 0
    %1127 = vmatprep.subr.bf16.mxu0 0
    %1128 = vmatpush1.bf16.msra.mxu0 %v522
    %1129 = vmatprep.subr.bf16.mxu0 0
    %1130 = vmatpush1.bf16.msra.mxu0 %v523
    %1131 = vmatprep.subr.bf16.mxu0 0
    %1132 = vmatpush1.bf16.msra.mxu0 0
    %1133 = vmatprep.subr.bf16.mxu0 0
    %1134 = vmatpush1.bf16.msra.mxu0 0
    %1135 = vmatprep.subr.bf16.mxu0 0
    %1136 = vmatpush1.bf16.msra.mxu0 0
    %1137 = vmatprep.subr.bf16.mxu0 0
    %1138 = vmatpush1.bf16.msra.mxu0 0
    %1139 = vmatprep.subr.bf16.mxu0 0
    %1140 = vmatpush1.bf16.msra.mxu0 0
    %1141 = vmatprep.subr.bf16.mxu0 0
    %1142 = vmatpush1.bf16.msra.mxu0 0
    %1143 = vmatprep.subr.bf16.mxu0 0
    %1144 = vmatpush1.bf16.msra.mxu0 0
    %1145 = vmatprep.subr.bf16.mxu0 0
    %1146 = vmatpush1.bf16.msra.mxu0 0
    %1147 = vmatprep.subr.bf16.mxu0 0
    %1148 = vmatpush1.bf16.msra.mxu0 0
    %1149 = vmatprep.subr.bf16.mxu0 0
    %1150 = vmatpush1.bf16.msra.mxu0 0
    %1151 = vmatprep.subr.bf16.mxu0 0
    %1152 = vmatpush1.bf16.msra.mxu0 0
    %1153 = vmatprep.subr.bf16.mxu0 0
    %1154 = vmatpush1.bf16.msra.mxu0 0
    %1155 = vmatprep.subr.bf16.mxu0 0
    %1156 = vmatpush1.bf16.msra.mxu0 0
    %1157 = vmatprep.subr.bf16.mxu0 0
    %1158 = vmatpush1.bf16.msra.mxu0 0
    %1159 = vmatprep.mubr.bf16.mxu0 0
    %1160 = vmatmul.mubr.bf16.gmra.mrb[0].mxu0 %v1125
    %v1161 = vpop.f32.mrb[0].mxu0
    %v1162 = vadd.f32 %v1116, %v1161
    %v1163 = vpop.f32.mrb[0].mxu0
    %v1164 = vpop.f32.mrb[0].mxu0
    %v1165 = vpop.f32.mrb[0].mxu0
    %1166 = vdwg.mxu0
    %v1167 = vadd.f32 %v1162, %v217
    %v1168 = vxor.u32 %v1167, 2147483648
    %v1169 = vmul.f32 %v1168, 1.442695
    %v1170 = vpow.pop %v1169
    %v1171 = vadd.f32 %v1170, 1.0
    %v1172 = vrcp.pop %v1171
    %v1173 = vmul.f32 1.0, %v1172
    %v1174 = vmul.f32 %v1173, 2.0
    %v1175 = vsub.f32 %v1174, 1.0
    %v1176 = vmul.f32 %v1173, %v887
    %1178 = vrot.lane.b32.xlu0 %v1175, 64
    %v1179 = vpop.permute.xlu0 %1178
    %v1181 = vmul.f32 %v1173, %v1179
    %1183 = vrot.lane.b32.xlu0 %v1181, 32
    %v1184 = vpop.permute.xlu0 %1183
    %v1186 = vadd.f32 %v1176, %v1184
    %v1187 = vtanh.pop %v1186
    %1189 = vrot.lane.b32.xlu0 %v1187, 64
    %v1190 = vpop.permute.xlu0 %1189
    %v1192 = vmul.f32 %v1173, %v1190
    %1193 = vmatprep.subr.bf16.mxu0 0
    %1194 = vmatpush1.bf16.msra.mxu0 %v231
    %1195 = vmatprep.subr.bf16.mxu0 0
    %1196 = vmatpush1.bf16.msra.mxu0 %v232
    %1197 = vmatprep.subr.bf16.mxu0 0
    %1198 = vmatpush1.bf16.msra.mxu0 0
    %1199 = vmatprep.subr.bf16.mxu0 0
    %1200 = vmatpush1.bf16.msra.mxu0 0
    %1201 = vmatprep.subr.bf16.mxu0 0
    %1202 = vmatpush1.bf16.msra.mxu0 0
    %1203 = vmatprep.subr.bf16.mxu0 0
    %1204 = vmatpush1.bf16.msra.mxu0 0
    %1205 = vmatprep.subr.bf16.mxu0 0
    %1206 = vmatpush1.bf16.msra.mxu0 0
    %1207 = vmatprep.subr.bf16.mxu0 0
    %1208 = vmatpush1.bf16.msra.mxu0 0
    %1209 = vmatprep.subr.bf16.mxu0 0
    %1210 = vmatpush1.bf16.msra.mxu0 0
    %1211 = vmatprep.subr.bf16.mxu0 0
    %1212 = vmatpush1.bf16.msra.mxu0 0
    %1213 = vmatprep.subr.bf16.mxu0 0
    %1214 = vmatpush1.bf16.msra.mxu0 0
    %1215 = vmatprep.subr.bf16.mxu0 0
    %1216 = vmatpush1.bf16.msra.mxu0 0
    %1217 = vmatprep.subr.bf16.mxu0 0
    %1218 = vmatpush1.bf16.msra.mxu0 0
    %1219 = vmatprep.subr.bf16.mxu0 0
    %1220 = vmatpush1.bf16.msra.mxu0 0
    %1221 = vmatprep.subr.bf16.mxu0 0
    %1222 = vmatpush1.bf16.msra.mxu0 0
    %1223 = vmatprep.subr.bf16.mxu0 0
    %1224 = vmatpush1.bf16.msra.mxu0 0
    %1225 = vmatprep.mubr.bf16.mxu0 0
    %1226 = vmatmul.mubr.bf16.gmra.mrb[0].mxu0 %v1005
    %v1227 = vpop.f32.mrb[0].mxu0
    %v1228 = vadd.f32 0.0, %v1227
    %v1229 = vpop.f32.mrb[0].mxu0
    %v1230 = vpop.f32.mrb[0].mxu0
    %v1231 = vpop.f32.mrb[0].mxu0
    %1232 = vdwg.mxu0
    %v1233 = vadd.f32 %v186, %v1228
    %v1234 = vxor.u32 %v1233, 2147483648
    %v1235 = vmul.f32 %v1234, 1.442695
    %v1236 = vpow.pop %v1235
    %v1237 = vadd.f32 %v1236, 1.0
    %v1238 = vrcp.pop %v1237
    %v1239 = vmul.f32 1.0, %v1238
    %v1240 = vmul.f32 %v1239, 2.0
    %v1241 = vsub.f32 %v1240, 1.0
    %v1242 = vmul.f32 %v1239, %v953
    %1244 = vrot.lane.b32.xlu0 %v1241, 64
    %v1245 = vpop.permute.xlu0 %1244
    %v1247 = vmul.f32 %v1239, %v1245
    %1249 = vrot.lane.b32.xlu0 %v1247, 32
    %v1250 = vpop.permute.xlu0 %1249
    %v1252 = vadd.f32 %v1242, %v1250
    %v1253 = vtanh.pop %v1252
    %1255 = vrot.lane.b32.xlu0 %v1253, 64
    %v1256 = vpop.permute.xlu0 %1255
    %v1258 = vmul.f32 %v1239, %v1256
    %v1259 = vpack.c.bf16 %v1258, %v1258
    %1260 = vmatprep.subr.bf16.mxu0 0
    %1261 = vmatpush1.bf16.msra.mxu0 %v322
    %1262 = vmatprep.subr.bf16.mxu0 0
    %1263 = vmatpush1.bf16.msra.mxu0 %v323
    %1264 = vmatprep.subr.bf16.mxu0 0
    %1265 = vmatpush1.bf16.msra.mxu0 0
    %1266 = vmatprep.subr.bf16.mxu0 0
    %1267 = vmatpush1.bf16.msra.mxu0 0
    %1268 = vmatprep.subr.bf16.mxu0 0
    %1269 = vmatpush1.bf16.msra.mxu0 0
    %1270 = vmatprep.subr.bf16.mxu0 0
    %1271 = vmatpush1.bf16.msra.mxu0 0
    %1272 = vmatprep.subr.bf16.mxu0 0
    %1273 = vmatpush1.bf16.msra.mxu0 0
    %1274 = vmatprep.subr.bf16.mxu0 0
    %1275 = vmatpush1.bf16.msra.mxu0 0
    %1276 = vmatprep.subr.bf16.mxu0 0
    %1277 = vmatpush1.bf16.msra.mxu0 0
    %1278 = vmatprep.subr.bf16.mxu0 0
    %1279 = vmatpush1.bf16.msra.mxu0 0
    %1280 = vmatprep.subr.bf16.mxu0 0
    %1281 = vmatpush1.bf16.msra.mxu0 0
    %1282 = vmatprep.subr.bf16.mxu0 0
    %1283 = vmatpush1.bf16.msra.mxu0 0
    %1284 = vmatprep.subr.bf16.mxu0 0
    %1285 = vmatpush1.bf16.msra.mxu0 0
    %1286 = vmatprep.subr.bf16.mxu0 0
    %1287 = vmatpush1.bf16.msra.mxu0 0
    %1288 = vmatprep.subr.bf16.mxu0 0
    %1289 = vmatpush1.bf16.msra.mxu0 0
    %1290 = vmatprep.subr.bf16.mxu0 0
    %1291 = vmatpush1.bf16.msra.mxu0 0
    %1292 = vmatprep.mubr.bf16.mxu0 0
    %1293 = vmatmul.mubr.bf16.gmra.mrb[0].mxu0 %v1125
    %v1294 = vpop.f32.mrb[0].mxu0
    %v1295 = vadd.f32 0.0, %v1294
    %v1296 = vpop.f32.mrb[0].mxu0
    %v1297 = vpop.f32.mrb[0].mxu0
    %v1298 = vpop.f32.mrb[0].mxu0
    %1299 = vdwg.mxu0
    %1301 = vrot.lane.b32.xlu0 %v1259, 32
    %v1302 = vpop.permute.xlu0 %1301
    %v1304 = vsel %vm235, %v1302, 0
    %1306 = vmatprep.subr.bf16.mxu0 0
    %1307 = vmatpush1.bf16.msra.mxu0 %v377
    %1308 = vmatprep.subr.bf16.mxu0 0
    %1309 = vmatpush1.bf16.msra.mxu0 %v378
    %1310 = vmatprep.subr.bf16.mxu0 0
    %1311 = vmatpush1.bf16.msra.mxu0 0
    %1312 = vmatprep.subr.bf16.mxu0 0
    %1313 = vmatpush1.bf16.msra.mxu0 0
    %1314 = vmatprep.subr.bf16.mxu0 0
    %1315 = vmatpush1.bf16.msra.mxu0 0
    %1316 = vmatprep.subr.bf16.mxu0 0
    %1317 = vmatpush1.bf16.msra.mxu0 0
    %1318 = vmatprep.subr.bf16.mxu0 0
    %1319 = vmatpush1.bf16.msra.mxu0 0
    %1320 = vmatprep.subr.bf16.mxu0 0
    %1321 = vmatpush1.bf16.msra.mxu0 0
    %1322 = vmatprep.subr.bf16.mxu0 0
    %1323 = vmatpush1.bf16.msra.mxu0 0
    %1324 = vmatprep.subr.bf16.mxu0 0
    %1325 = vmatpush1.bf16.msra.mxu0 0
    %1326 = vmatprep.subr.bf16.mxu0 0
    %1327 = vmatpush1.bf16.msra.mxu0 0
    %1328 = vmatprep.subr.bf16.mxu0 0
    %1329 = vmatpush1.bf16.msra.mxu0 0
    %1330 = vmatprep.subr.bf16.mxu0 0
    %1331 = vmatpush1.bf16.msra.mxu0 0
    %1332 = vmatprep.subr.bf16.mxu0 0
    %1333 = vmatpush1.bf16.msra.mxu0 0
    %1334 = vmatprep.subr.bf16.mxu0 0
    %1335 = vmatpush1.bf16.msra.mxu0 0
    %1336 = vmatprep.subr.bf16.mxu0 0
    %1337 = vmatpush1.bf16.msra.mxu0 0
    %1338 = vmatprep.mubr.bf16.mxu0 0
    %1339 = vmatmul.mubr.bf16.gmra.mrb[0].mxu0 %v1304
    %v1340 = vpop.f32.mrb[0].mxu0
    %v1341 = vadd.f32 %v1295, %v1340
    %v1342 = vpop.f32.mrb[0].mxu0
    %v1343 = vpop.f32.mrb[0].mxu0
    %v1344 = vpop.f32.mrb[0].mxu0
    %1345 = vdwg.mxu0
    %v1346 = vadd.f32 %v1341, %v210
    %v1347 = vxor.u32 %v1346, 2147483648
    %v1348 = vmul.f32 %v1347, 1.442695
    %v1349 = vpow.pop %v1348
    %v1350 = vadd.f32 %v1349, 1.0
    %v1351 = vrcp.pop %v1350
    %v1352 = vmul.f32 1.0, %v1351
    %v1353 = vmul.f32 %v1352, 2.0
    %v1354 = vsub.f32 %v1353, 1.0
    %v1355 = vmul.f32 %v1352, %v1066
    %1357 = vrot.lane.b32.xlu0 %v1354, 64
    %v1358 = vpop.permute.xlu0 %1357
    %v1360 = vmul.f32 %v1352, %v1358
    %1362 = vrot.lane.b32.xlu0 %v1360, 32
    %v1363 = vpop.permute.xlu0 %1362
    %v1365 = vadd.f32 %v1355, %v1363
    %v1366 = vtanh.pop %v1365
    %1368 = vrot.lane.b32.xlu0 %v1366, 64
    %v1369 = vpop.permute.xlu0 %1368
    %v1371 = vmul.f32 %v1352, %v1369
    %v1372 = vpack.c.bf16 %v1371, %v1371
    %v1373 = vpack.c.bf16 %v1192, %v1192
    %1375 = vrot.lane.b32.xlu0 %v1373, 32
    %v1376 = vpop.permute.xlu0 %1375
    %v1378 = vsel %vm235, %v1376, 0
    %1380 = vmatprep.subr.bf16.mxu0 0
    %1381 = vmatpush1.bf16.msra.mxu0 %v467
    %1382 = vmatprep.subr.bf16.mxu0 0
    %1383 = vmatpush1.bf16.msra.mxu0 %v468
    %1384 = vmatprep.subr.bf16.mxu0 0
    %1385 = vmatpush1.bf16.msra.mxu0 0
    %1386 = vmatprep.subr.bf16.mxu0 0
    %1387 = vmatpush1.bf16.msra.mxu0 0
    %1388 = vmatprep.subr.bf16.mxu0 0
    %1389 = vmatpush1.bf16.msra.mxu0 0
    %1390 = vmatprep.subr.bf16.mxu0 0
    %1391 = vmatpush1.bf16.msra.mxu0 0
    %1392 = vmatprep.subr.bf16.mxu0 0
    %1393 = vmatpush1.bf16.msra.mxu0 0
    %1394 = vmatprep.subr.bf16.mxu0 0
    %1395 = vmatpush1.bf16.msra.mxu0 0
    %1396 = vmatprep.subr.bf16.mxu0 0
    %1397 = vmatpush1.bf16.msra.mxu0 0
    %1398 = vmatprep.subr.bf16.mxu0 0
    %1399 = vmatpush1.bf16.msra.mxu0 0
    %1400 = vmatprep.subr.bf16.mxu0 0
    %1401 = vmatpush1.bf16.msra.mxu0 0
    %1402 = vmatprep.subr.bf16.mxu0 0
    %1403 = vmatpush1.bf16.msra.mxu0 0
    %1404 = vmatprep.subr.bf16.mxu0 0
    %1405 = vmatpush1.bf16.msra.mxu0 0
    %1406 = vmatprep.subr.bf16.mxu0 0
    %1407 = vmatpush1.bf16.msra.mxu0 0
    %1408 = vmatprep.subr.bf16.mxu0 0
    %1409 = vmatpush1.bf16.msra.mxu0 0
    %1410 = vmatprep.subr.bf16.mxu0 0
    %1411 = vmatpush1.bf16.msra.mxu0 0
    %1412 = vmatprep.mubr.bf16.mxu0 0
    %1413 = vmatmul.mubr.bf16.gmra.mrb[0].mxu0 %v1378
    %v1414 = vpop.f32.mrb[0].mxu0
    %v1415 = vadd.f32 0.0, %v1414
    %v1416 = vpop.f32.mrb[0].mxu0
    %v1417 = vpop.f32.mrb[0].mxu0
    %v1418 = vpop.f32.mrb[0].mxu0
    %1419 = vdwg.mxu0
    %1421 = vrot.lane.b32.xlu0 %v1372, 32
    %v1422 = vpop.permute.xlu0 %1421
    %v1424 = vsel %vm235, %v1422, 0
    %1426 = vmatprep.subr.bf16.mxu0 0
    %1427 = vmatpush1.bf16.msra.mxu0 %v522
    %1428 = vmatprep.subr.bf16.mxu0 0
    %1429 = vmatpush1.bf16.msra.mxu0 %v523
    %1430 = vmatprep.subr.bf16.mxu0 0
    %1431 = vmatpush1.bf16.msra.mxu0 0
    %1432 = vmatprep.subr.bf16.mxu0 0
    %1433 = vmatpush1.bf16.msra.mxu0 0
    %1434 = vmatprep.subr.bf16.mxu0 0
    %1435 = vmatpush1.bf16.msra.mxu0 0
    %1436 = vmatprep.subr.bf16.mxu0 0
    %1437 = vmatpush1.bf16.msra.mxu0 0
    %1438 = vmatprep.subr.bf16.mxu0 0
    %1439 = vmatpush1.bf16.msra.mxu0 0
    %1440 = vmatprep.subr.bf16.mxu0 0
    %1441 = vmatpush1.bf16.msra.mxu0 0
    %1442 = vmatprep.subr.bf16.mxu0 0
    %1443 = vmatpush1.bf16.msra.mxu0 0
    %1444 = vmatprep.subr.bf16.mxu0 0
    %1445 = vmatpush1.bf16.msra.mxu0 0
    %1446 = vmatprep.subr.bf16.mxu0 0
    %1447 = vmatpush1.bf16.msra.mxu0 0
    %1448 = vmatprep.subr.bf16.mxu0 0
    %1449 = vmatpush1.bf16.msra.mxu0 0
    %1450 = vmatprep.subr.bf16.mxu0 0
    %1451 = vmatpush1.bf16.msra.mxu0 0
    %1452 = vmatprep.subr.bf16.mxu0 0
    %1453 = vmatpush1.bf16.msra.mxu0 0
    %1454 = vmatprep.subr.bf16.mxu0 0
    %1455 = vmatpush1.bf16.msra.mxu0 0
    %1456 = vmatprep.subr.bf16.mxu0 0
    %1457 = vmatpush1.bf16.msra.mxu0 0
    %1458 = vmatprep.mubr.bf16.mxu0 0
    %1459 = vmatmul.mubr.bf16.gmra.mrb[0].mxu0 %v1424
    %v1460 = vpop.f32.mrb[0].mxu0
    %v1461 = vadd.f32 %v1415, %v1460
    %v1462 = vpop.f32.mrb[0].mxu0
    %v1463 = vpop.f32.mrb[0].mxu0
    %v1464 = vpop.f32.mrb[0].mxu0
    %1465 = vdwg.mxu0
    %v1466 = vadd.f32 %v1461, %v217
    %v1467 = vxor.u32 %v1466, 2147483648
    %v1468 = vmul.f32 %v1467, 1.442695
    %v1469 = vpow.pop %v1468
    %v1470 = vadd.f32 %v1469, 1.0
    %v1471 = vrcp.pop %v1470
    %v1472 = vmul.f32 1.0, %v1471
    %v1473 = vmul.f32 %v1472, 2.0
    %v1474 = vsub.f32 %v1473, 1.0
    %v1475 = vmul.f32 %v1472, %v1186
    %1477 = vrot.lane.b32.xlu0 %v1474, 64
    %v1478 = vpop.permute.xlu0 %1477
    %v1480 = vmul.f32 %v1472, %v1478
    %1482 = vrot.lane.b32.xlu0 %v1480, 32
    %v1483 = vpop.permute.xlu0 %1482
    %v1485 = vadd.f32 %v1475, %v1483
    %v1486 = vtanh.pop %v1485
    %1488 = vrot.lane.b32.xlu0 %v1486, 64
    %v1489 = vpop.permute.xlu0 %1488
    %v1491 = vmul.f32 %v1472, %v1489
    %1492 = vmatprep.subr.bf16.mxu0 0
    %1493 = vmatpush1.bf16.msra.mxu0 %v231
    %1494 = vmatprep.subr.bf16.mxu0 0
    %1495 = vmatpush1.bf16.msra.mxu0 %v232
    %1496 = vmatprep.subr.bf16.mxu0 0
    %1497 = vmatpush1.bf16.msra.mxu0 0
    %1498 = vmatprep.subr.bf16.mxu0 0
    %1499 = vmatpush1.bf16.msra.mxu0 0
    %1500 = vmatprep.subr.bf16.mxu0 0
    %1501 = vmatpush1.bf16.msra.mxu0 0
    %1502 = vmatprep.subr.bf16.mxu0 0
    %1503 = vmatpush1.bf16.msra.mxu0 0
    %1504 = vmatprep.subr.bf16.mxu0 0
    %1505 = vmatpush1.bf16.msra.mxu0 0
    %1506 = vmatprep.subr.bf16.mxu0 0
    %1507 = vmatpush1.bf16.msra.mxu0 0
    %1508 = vmatprep.subr.bf16.mxu0 0
    %1509 = vmatpush1.bf16.msra.mxu0 0
    %1510 = vmatprep.subr.bf16.mxu0 0
    %1511 = vmatpush1.bf16.msra.mxu0 0
    %1512 = vmatprep.subr.bf16.mxu0 0
    %1513 = vmatpush1.bf16.msra.mxu0 0
    %1514 = vmatprep.subr.bf16.mxu0 0
    %1515 = vmatpush1.bf16.msra.mxu0 0
    %1516 = vmatprep.subr.bf16.mxu0 0
    %1517 = vmatpush1.bf16.msra.mxu0 0
    %1518 = vmatprep.subr.bf16.mxu0 0
    %1519 = vmatpush1.bf16.msra.mxu0 0
    %1520 = vmatprep.subr.bf16.mxu0 0
    %1521 = vmatpush1.bf16.msra.mxu0 0
    %1522 = vmatprep.subr.bf16.mxu0 0
    %1523 = vmatpush1.bf16.msra.mxu0 0
    %1524 = vmatprep.mubr.bf16.mxu0 0
    %1525 = vmatmul.mubr.bf16.gmra.mrb[0].mxu0 %v1304
    %v1526 = vpop.f32.mrb[0].mxu0
    %v1527 = vadd.f32 0.0, %v1526
    %v1528 = vpop.f32.mrb[0].mxu0
    %v1529 = vpop.f32.mrb[0].mxu0
    %v1530 = vpop.f32.mrb[0].mxu0
    %1531 = vdwg.mxu0
    %v1532 = vadd.f32 %v191, %v1527
    %v1533 = vxor.u32 %v1532, 2147483648
    %v1534 = vmul.f32 %v1533, 1.442695
    %v1535 = vpow.pop %v1534
    %v1536 = vadd.f32 %v1535, 1.0
    %v1537 = vrcp.pop %v1536
    %v1538 = vmul.f32 1.0, %v1537
    %v1539 = vmul.f32 %v1538, 2.0
    %v1540 = vsub.f32 %v1539, 1.0
    %v1541 = vmul.f32 %v1538, %v1252
    %1543 = vrot.lane.b32.xlu0 %v1540, 64
    %v1544 = vpop.permute.xlu0 %1543
    %v1546 = vmul.f32 %v1538, %v1544
    %1548 = vrot.lane.b32.xlu0 %v1546, 32
    %v1549 = vpop.permute.xlu0 %1548
    %v1551 = vadd.f32 %v1541, %v1549
    %v1552 = vtanh.pop %v1551
    %1554 = vrot.lane.b32.xlu0 %v1552, 64
    %v1555 = vpop.permute.xlu0 %1554
    %v1557 = vmul.f32 %v1538, %v1555
    %v1558 = vpack.c.bf16 %v1557, %v1557
    %1559 = vmatprep.subr.bf16.mxu0 0
    %1560 = vmatpush1.bf16.msra.mxu0 %v322
    %1561 = vmatprep.subr.bf16.mxu0 0
    %1562 = vmatpush1.bf16.msra.mxu0 %v323
    %1563 = vmatprep.subr.bf16.mxu0 0
    %1564 = vmatpush1.bf16.msra.mxu0 0
    %1565 = vmatprep.subr.bf16.mxu0 0
    %1566 = vmatpush1.bf16.msra.mxu0 0
    %1567 = vmatprep.subr.bf16.mxu0 0
    %1568 = vmatpush1.bf16.msra.mxu0 0
    %1569 = vmatprep.subr.bf16.mxu0 0
    %1570 = vmatpush1.bf16.msra.mxu0 0
    %1571 = vmatprep.subr.bf16.mxu0 0
    %1572 = vmatpush1.bf16.msra.mxu0 0
    %1573 = vmatprep.subr.bf16.mxu0 0
    %1574 = vmatpush1.bf16.msra.mxu0 0
    %1575 = vmatprep.subr.bf16.mxu0 0
    %1576 = vmatpush1.bf16.msra.mxu0 0
    %1577 = vmatprep.subr.bf16.mxu0 0
    %1578 = vmatpush1.bf16.msra.mxu0 0
    %1579 = vmatprep.subr.bf16.mxu0 0
    %1580 = vmatpush1.bf16.msra.mxu0 0
    %1581 = vmatprep.subr.bf16.mxu0 0
    %1582 = vmatpush1.bf16.msra.mxu0 0
    %1583 = vmatprep.subr.bf16.mxu0 0
    %1584 = vmatpush1.bf16.msra.mxu0 0
    %1585 = vmatprep.subr.bf16.mxu0 0
    %1586 = vmatpush1.bf16.msra.mxu0 0
    %1587 = vmatprep.subr.bf16.mxu0 0
    %1588 = vmatpush1.bf16.msra.mxu0 0
    %1589 = vmatprep.subr.bf16.mxu0 0
    %1590 = vmatpush1.bf16.msra.mxu0 0
    %1591 = vmatprep.mubr.bf16.mxu0 0
    %1592 = vmatmul.mubr.bf16.gmra.mrb[0].mxu0 %v1424
    %v1593 = vpop.f32.mrb[0].mxu0
    %v1594 = vadd.f32 0.0, %v1593
    %v1595 = vpop.f32.mrb[0].mxu0
    %v1596 = vpop.f32.mrb[0].mxu0
    %v1597 = vpop.f32.mrb[0].mxu0
    %1598 = vdwg.mxu0
    %1600 = vrot.lane.b32.xlu0 %v1558, 32
    %v1601 = vpop.permute.xlu0 %1600
    %v1603 = vsel %vm235, %v1601, 0
    %1605 = vmatprep.subr.bf16.mxu0 0
    %1606 = vmatpush1.bf16.msra.mxu0 %v377
    %1607 = vmatprep.subr.bf16.mxu0 0
    %1608 = vmatpush1.bf16.msra.mxu0 %v378
    %1609 = vmatprep.subr.bf16.mxu0 0
    %1610 = vmatpush1.bf16.msra.mxu0 0
    %1611 = vmatprep.subr.bf16.mxu0 0
    %1612 = vmatpush1.bf16.msra.mxu0 0
    %1613 = vmatprep.subr.bf16.mxu0 0
    %1614 = vmatpush1.bf16.msra.mxu0 0
    %1615 = vmatprep.subr.bf16.mxu0 0
    %1616 = vmatpush1.bf16.msra.mxu0 0
    %1617 = vmatprep.subr.bf16.mxu0 0
    %1618 = vmatpush1.bf16.msra.mxu0 0
    %1619 = vmatprep.subr.bf16.mxu0 0
    %1620 = vmatpush1.bf16.msra.mxu0 0
    %1621 = vmatprep.subr.bf16.mxu0 0
    %1622 = vmatpush1.bf16.msra.mxu0 0
    %1623 = vmatprep.subr.bf16.mxu0 0
    %1624 = vmatpush1.bf16.msra.mxu0 0
    %1625 = vmatprep.subr.bf16.mxu0 0
    %1626 = vmatpush1.bf16.msra.mxu0 0
    %1627 = vmatprep.subr.bf16.mxu0 0
    %1628 = vmatpush1.bf16.msra.mxu0 0
    %1629 = vmatprep.subr.bf16.mxu0 0
    %1630 = vmatpush1.bf16.msra.mxu0 0
    %1631 = vmatprep.subr.bf16.mxu0 0
    %1632 = vmatpush1.bf16.msra.mxu0 0
    %1633 = vmatprep.subr.bf16.mxu0 0
    %1634 = vmatpush1.bf16.msra.mxu0 0
    %1635 = vmatprep.subr.bf16.mxu0 0
    %1636 = vmatpush1.bf16.msra.mxu0 0
    %1637 = vmatprep.mubr.bf16.mxu0 0
    %1638 = vmatmul.mubr.bf16.gmra.mrb[0].mxu0 %v1603
    %v1639 = vpop.f32.mrb[0].mxu0
    %v1640 = vadd.f32 %v1594, %v1639
    %v1641 = vpop.f32.mrb[0].mxu0
    %v1642 = vpop.f32.mrb[0].mxu0
    %v1643 = vpop.f32.mrb[0].mxu0
    %1644 = vdwg.mxu0
    %v1645 = vadd.f32 %v1640, %v210
    %v1646 = vxor.u32 %v1645, 2147483648
    %v1647 = vmul.f32 %v1646, 1.442695
    %v1648 = vpow.pop %v1647
    %v1649 = vadd.f32 %v1648, 1.0
    %v1650 = vrcp.pop %v1649
    %v1651 = vmul.f32 1.0, %v1650
    %v1652 = vmul.f32 %v1651, 2.0
    %v1653 = vsub.f32 %v1652, 1.0
    %v1654 = vmul.f32 %v1651, %v1365
    %1656 = vrot.lane.b32.xlu0 %v1653, 64
    %v1657 = vpop.permute.xlu0 %1656
    %v1659 = vmul.f32 %v1651, %v1657
    %1661 = vrot.lane.b32.xlu0 %v1659, 32
    %v1662 = vpop.permute.xlu0 %1661
    %v1664 = vadd.f32 %v1654, %v1662
    %v1665 = vtanh.pop %v1664
    %1667 = vrot.lane.b32.xlu0 %v1665, 64
    %v1668 = vpop.permute.xlu0 %1667
    %v1670 = vmul.f32 %v1651, %v1668
    %v1671 = vpack.c.bf16 %v1670, %v1670
    %v1672 = vpack.c.bf16 %v1491, %v1491
    %1674 = vrot.lane.b32.xlu0 %v1672, 32
    %v1675 = vpop.permute.xlu0 %1674
    %v1677 = vsel %vm235, %v1675, 0
    %1679 = vmatprep.subr.bf16.mxu0 0
    %1680 = vmatpush1.bf16.msra.mxu0 %v467
    %1681 = vmatprep.subr.bf16.mxu0 0
    %1682 = vmatpush1.bf16.msra.mxu0 %v468
    %1683 = vmatprep.subr.bf16.mxu0 0
    %1684 = vmatpush1.bf16.msra.mxu0 0
    %1685 = vmatprep.subr.bf16.mxu0 0
    %1686 = vmatpush1.bf16.msra.mxu0 0
    %1687 = vmatprep.subr.bf16.mxu0 0
    %1688 = vmatpush1.bf16.msra.mxu0 0
    %1689 = vmatprep.subr.bf16.mxu0 0
    %1690 = vmatpush1.bf16.msra.mxu0 0
    %1691 = vmatprep.subr.bf16.mxu0 0
    %1692 = vmatpush1.bf16.msra.mxu0 0
    %1693 = vmatprep.subr.bf16.mxu0 0
    %1694 = vmatpush1.bf16.msra.mxu0 0
    %1695 = vmatprep.subr.bf16.mxu0 0
    %1696 = vmatpush1.bf16.msra.mxu0 0
    %1697 = vmatprep.subr.bf16.mxu0 0
    %1698 = vmatpush1.bf16.msra.mxu0 0
    %1699 = vmatprep.subr.bf16.mxu0 0
    %1700 = vmatpush1.bf16.msra.mxu0 0
    %1701 = vmatprep.subr.bf16.mxu0 0
    %1702 = vmatpush1.bf16.msra.mxu0 0
    %1703 = vmatprep.subr.bf16.mxu0 0
    %1704 = vmatpush1.bf16.msra.mxu0 0
    %1705 = vmatprep.subr.bf16.mxu0 0
    %1706 = vmatpush1.bf16.msra.mxu0 0
    %1707 = vmatprep.subr.bf16.mxu0 0
    %1708 = vmatpush1.bf16.msra.mxu0 0
    %1709 = vmatprep.subr.bf16.mxu0 0
    %1710 = vmatpush1.bf16.msra.mxu0 0
    %1711 = vmatprep.mubr.bf16.mxu0 0
    %1712 = vmatmul.mubr.bf16.gmra.mrb[0].mxu0 %v1677
    %v1713 = vpop.f32.mrb[0].mxu0
    %v1714 = vadd.f32 0.0, %v1713
    %v1715 = vpop.f32.mrb[0].mxu0
    %v1716 = vpop.f32.mrb[0].mxu0
    %v1717 = vpop.f32.mrb[0].mxu0
    %1718 = vdwg.mxu0
    %1720 = vrot.lane.b32.xlu0 %v1671, 32
    %v1721 = vpop.permute.xlu0 %1720
    %v1723 = vsel %vm235, %v1721, 0
    %1725 = vmatprep.subr.bf16.mxu0 0
    %1726 = vmatpush1.bf16.msra.mxu0 %v522
    %1727 = vmatprep.subr.bf16.mxu0 0
    %1728 = vmatpush1.bf16.msra.mxu0 %v523
    %1729 = vmatprep.subr.bf16.mxu0 0
    %1730 = vmatpush1.bf16.msra.mxu0 0
    %1731 = vmatprep.subr.bf16.mxu0 0
    %1732 = vmatpush1.bf16.msra.mxu0 0
    %1733 = vmatprep.subr.bf16.mxu0 0
    %1734 = vmatpush1.bf16.msra.mxu0 0
    %1735 = vmatprep.subr.bf16.mxu0 0
    %1736 = vmatpush1.bf16.msra.mxu0 0
    %1737 = vmatprep.subr.bf16.mxu0 0
    %1738 = vmatpush1.bf16.msra.mxu0 0
    %1739 = vmatprep.subr.bf16.mxu0 0
    %1740 = vmatpush1.bf16.msra.mxu0 0
    %1741 = vmatprep.subr.bf16.mxu0 0
    %1742 = vmatpush1.bf16.msra.mxu0 0
    %1743 = vmatprep.subr.bf16.mxu0 0
    %1744 = vmatpush1.bf16.msra.mxu0 0
    %1745 = vmatprep.subr.bf16.mxu0 0
    %1746 = vmatpush1.bf16.msra.mxu0 0
    %1747 = vmatprep.subr.bf16.mxu0 0
    %1748 = vmatpush1.bf16.msra.mxu0 0
    %1749 = vmatprep.subr.bf16.mxu0 0
    %1750 = vmatpush1.bf16.msra.mxu0 0
    %1751 = vmatprep.subr.bf16.mxu0 0
    %1752 = vmatpush1.bf16.msra.mxu0 0
    %1753 = vmatprep.subr.bf16.mxu0 0
    %1754 = vmatpush1.bf16.msra.mxu0 0
    %1755 = vmatprep.subr.bf16.mxu0 0
    %1756 = vmatpush1.bf16.msra.mxu0 0
    %1757 = vmatprep.mubr.bf16.mxu0 0
    %1758 = vmatmul.mubr.bf16.gmra.mrb[0].mxu0 %v1723
    %v1759 = vpop.f32.mrb[0].mxu0
    %v1760 = vadd.f32 %v1714, %v1759
    %v1761 = vpop.f32.mrb[0].mxu0
    %v1762 = vpop.f32.mrb[0].mxu0
    %v1763 = vpop.f32.mrb[0].mxu0
    %1764 = vdwg.mxu0
    %v1765 = vadd.f32 %v1760, %v217
    %v1766 = vxor.u32 %v1765, 2147483648
    %v1767 = vmul.f32 %v1766, 1.442695
    %v1768 = vpow.pop %v1767
    %v1769 = vadd.f32 %v1768, 1.0
    %v1770 = vrcp.pop %v1769
    %v1771 = vmul.f32 1.0, %v1770
    %v1772 = vmul.f32 %v1771, 2.0
    %v1773 = vsub.f32 %v1772, 1.0
    %v1774 = vmul.f32 %v1771, %v1485
    %1776 = vrot.lane.b32.xlu0 %v1773, 64
    %v1777 = vpop.permute.xlu0 %1776
    %v1779 = vmul.f32 %v1771, %v1777
    %1781 = vrot.lane.b32.xlu0 %v1779, 32
    %v1782 = vpop.permute.xlu0 %1781
    %v1784 = vadd.f32 %v1774, %v1782
    %v1785 = vtanh.pop %v1784
    %1787 = vrot.lane.b32.xlu0 %v1785, 64
    %v1788 = vpop.permute.xlu0 %1787
    %v1790 = vmul.f32 %v1771, %v1788
    %1791 = vmatprep.subr.bf16.mxu0 0
    %1792 = vmatpush1.bf16.msra.mxu0 %v231
    %1793 = vmatprep.subr.bf16.mxu0 0
    %1794 = vmatpush1.bf16.msra.mxu0 %v232
    %1795 = vmatprep.subr.bf16.mxu0 0
    %1796 = vmatpush1.bf16.msra.mxu0 0
    %1797 = vmatprep.subr.bf16.mxu0 0
    %1798 = vmatpush1.bf16.msra.mxu0 0
    %1799 = vmatprep.subr.bf16.mxu0 0
    %1800 = vmatpush1.bf16.msra.mxu0 0
    %1801 = vmatprep.subr.bf16.mxu0 0
    %1802 = vmatpush1.bf16.msra.mxu0 0
    %1803 = vmatprep.subr.bf16.mxu0 0
    %1804 = vmatpush1.bf16.msra.mxu0 0
    %1805 = vmatprep.subr.bf16.mxu0 0
    %1806 = vmatpush1.bf16.msra.mxu0 0
    %1807 = vmatprep.subr.bf16.mxu0 0
    %1808 = vmatpush1.bf16.msra.mxu0 0
    %1809 = vmatprep.subr.bf16.mxu0 0
    %1810 = vmatpush1.bf16.msra.mxu0 0
    %1811 = vmatprep.subr.bf16.mxu0 0
    %1812 = vmatpush1.bf16.msra.mxu0 0
    %1813 = vmatprep.subr.bf16.mxu0 0
    %1814 = vmatpush1.bf16.msra.mxu0 0
    %1815 = vmatprep.subr.bf16.mxu0 0
    %1816 = vmatpush1.bf16.msra.mxu0 0
    %1817 = vmatprep.subr.bf16.mxu0 0
    %1818 = vmatpush1.bf16.msra.mxu0 0
    %1819 = vmatprep.subr.bf16.mxu0 0
    %1820 = vmatpush1.bf16.msra.mxu0 0
    %1821 = vmatprep.subr.bf16.mxu0 0
    %1822 = vmatpush1.bf16.msra.mxu0 0
    %1823 = vmatprep.mubr.bf16.mxu0 0
    %1824 = vmatmul.mubr.bf16.gmra.mrb[0].mxu0 %v1603
    %v1825 = vpop.f32.mrb[0].mxu0
    %v1826 = vadd.f32 0.0, %v1825
    %v1827 = vpop.f32.mrb[0].mxu0
    %v1828 = vpop.f32.mrb[0].mxu0
    %v1829 = vpop.f32.mrb[0].mxu0
    %1830 = vdwg.mxu0
    %v1831 = vadd.f32 %v194, %v1826
    %v1832 = vxor.u32 %v1831, 2147483648
    %v1833 = vmul.f32 %v1832, 1.442695
    %v1834 = vpow.pop %v1833
    %v1835 = vadd.f32 %v1834, 1.0
    %v1836 = vrcp.pop %v1835
    %v1837 = vmul.f32 1.0, %v1836
    %v1838 = vmul.f32 %v1837, 2.0
    %v1839 = vsub.f32 %v1838, 1.0
    %v1840 = vmul.f32 %v1837, %v1551
    %1842 = vrot.lane.b32.xlu0 %v1839, 64
    %v1843 = vpop.permute.xlu0 %1842
    %v1845 = vmul.f32 %v1837, %v1843
    %1847 = vrot.lane.b32.xlu0 %v1845, 32
    %v1848 = vpop.permute.xlu0 %1847
    %v1850 = vadd.f32 %v1840, %v1848
    %v1851 = vtanh.pop %v1850
    %1853 = vrot.lane.b32.xlu0 %v1851, 64
    %v1854 = vpop.permute.xlu0 %1853
    %v1856 = vmul.f32 %v1837, %v1854
    %v1857 = vpack.c.bf16 %v1856, %v1856
    %1858 = vmatprep.subr.bf16.mxu0 0
    %1859 = vmatpush1.bf16.msra.mxu0 %v322
    %1860 = vmatprep.subr.bf16.mxu0 0
    %1861 = vmatpush1.bf16.msra.mxu0 %v323
    %1862 = vmatprep.subr.bf16.mxu0 0
    %1863 = vmatpush1.bf16.msra.mxu0 0
    %1864 = vmatprep.subr.bf16.mxu0 0
    %1865 = vmatpush1.bf16.msra.mxu0 0
    %1866 = vmatprep.subr.bf16.mxu0 0
    %1867 = vmatpush1.bf16.msra.mxu0 0
    %1868 = vmatprep.subr.bf16.mxu0 0
    %1869 = vmatpush1.bf16.msra.mxu0 0
    %1870 = vmatprep.subr.bf16.mxu0 0
    %1871 = vmatpush1.bf16.msra.mxu0 0
    %1872 = vmatprep.subr.bf16.mxu0 0
    %1873 = vmatpush1.bf16.msra.mxu0 0
    %1874 = vmatprep.subr.bf16.mxu0 0
    %1875 = vmatpush1.bf16.msra.mxu0 0
    %1876 = vmatprep.subr.bf16.mxu0 0
    %1877 = vmatpush1.bf16.msra.mxu0 0
    %1878 = vmatprep.subr.bf16.mxu0 0
    %1879 = vmatpush1.bf16.msra.mxu0 0
    %1880 = vmatprep.subr.bf16.mxu0 0
    %1881 = vmatpush1.bf16.msra.mxu0 0
    %1882 = vmatprep.subr.bf16.mxu0 0
    %1883 = vmatpush1.bf16.msra.mxu0 0
    %1884 = vmatprep.subr.bf16.mxu0 0
    %1885 = vmatpush1.bf16.msra.mxu0 0
    %1886 = vmatprep.subr.bf16.mxu0 0
    %1887 = vmatpush1.bf16.msra.mxu0 0
    %1888 = vmatprep.subr.bf16.mxu0 0
    %1889 = vmatpush1.bf16.msra.mxu0 0
    %1890 = vmatprep.mubr.bf16.mxu0 0
    %1891 = vmatmul.mubr.bf16.gmra.mrb[0].mxu0 %v1723
    %v1892 = vpop.f32.mrb[0].mxu0
    %v1893 = vadd.f32 0.0, %v1892
    %v1894 = vpop.f32.mrb[0].mxu0
    %v1895 = vpop.f32.mrb[0].mxu0
    %v1896 = vpop.f32.mrb[0].mxu0
    %1897 = vdwg.mxu0
    %1899 = vrot.lane.b32.xlu0 %v1857, 32
    %v1900 = vpop.permute.xlu0 %1899
    %v1902 = vsel %vm235, %v1900, 0
    %1904 = vmatprep.subr.bf16.mxu0 0
    %1905 = vmatpush1.bf16.msra.mxu0 %v377
    %1906 = vmatprep.subr.bf16.mxu0 0
    %1907 = vmatpush1.bf16.msra.mxu0 %v378
    %1908 = vmatprep.subr.bf16.mxu0 0
    %1909 = vmatpush1.bf16.msra.mxu0 0
    %1910 = vmatprep.subr.bf16.mxu0 0
    %1911 = vmatpush1.bf16.msra.mxu0 0
    %1912 = vmatprep.subr.bf16.mxu0 0
    %1913 = vmatpush1.bf16.msra.mxu0 0
    %1914 = vmatprep.subr.bf16.mxu0 0
    %1915 = vmatpush1.bf16.msra.mxu0 0
    %1916 = vmatprep.subr.bf16.mxu0 0
    %1917 = vmatpush1.bf16.msra.mxu0 0
    %1918 = vmatprep.subr.bf16.mxu0 0
    %1919 = vmatpush1.bf16.msra.mxu0 0
    %1920 = vmatprep.subr.bf16.mxu0 0
    %1921 = vmatpush1.bf16.msra.mxu0 0
    %1922 = vmatprep.subr.bf16.mxu0 0
    %1923 = vmatpush1.bf16.msra.mxu0 0
    %1924 = vmatprep.subr.bf16.mxu0 0
    %1925 = vmatpush1.bf16.msra.mxu0 0
    %1926 = vmatprep.subr.bf16.mxu0 0
    %1927 = vmatpush1.bf16.msra.mxu0 0
    %1928 = vmatprep.subr.bf16.mxu0 0
    %1929 = vmatpush1.bf16.msra.mxu0 0
    %1930 = vmatprep.subr.bf16.mxu0 0
    %1931 = vmatpush1.bf16.msra.mxu0 0
    %1932 = vmatprep.subr.bf16.mxu0 0
    %1933 = vmatpush1.bf16.msra.mxu0 0
    %1934 = vmatprep.subr.bf16.mxu0 0
    %1935 = vmatpush1.bf16.msra.mxu0 0
    %1936 = vmatprep.mubr.bf16.mxu0 0
    %1937 = vmatmul.mubr.bf16.gmra.mrb[0].mxu0 %v1902
    %v1938 = vpop.f32.mrb[0].mxu0
    %v1939 = vadd.f32 %v1893, %v1938
    %v1940 = vpop.f32.mrb[0].mxu0
    %v1941 = vpop.f32.mrb[0].mxu0
    %v1942 = vpop.f32.mrb[0].mxu0
    %1943 = vdwg.mxu0
    %v1944 = vadd.f32 %v1939, %v210
    %v1945 = vxor.u32 %v1944, 2147483648
    %v1946 = vmul.f32 %v1945, 1.442695
    %v1947 = vpow.pop %v1946
    %v1948 = vadd.f32 %v1947, 1.0
    %v1949 = vrcp.pop %v1948
    %v1950 = vmul.f32 1.0, %v1949
    %v1951 = vmul.f32 %v1950, 2.0
    %v1952 = vsub.f32 %v1951, 1.0
    %v1953 = vmul.f32 %v1950, %v1664
    %1955 = vrot.lane.b32.xlu0 %v1952, 64
    %v1956 = vpop.permute.xlu0 %1955
    %v1958 = vmul.f32 %v1950, %v1956
    %1960 = vrot.lane.b32.xlu0 %v1958, 32
    %v1961 = vpop.permute.xlu0 %1960
    %v1963 = vadd.f32 %v1953, %v1961
    %v1964 = vtanh.pop %v1963
    %1966 = vrot.lane.b32.xlu0 %v1964, 64
    %v1967 = vpop.permute.xlu0 %1966
    %v1969 = vmul.f32 %v1950, %v1967
    %v1970 = vpack.c.bf16 %v1969, %v1969
    %v1971 = vpack.c.bf16 %v1790, %v1790
    %1973 = vrot.lane.b32.xlu0 %v1971, 32
    %v1974 = vpop.permute.xlu0 %1973
    %v1976 = vsel %vm235, %v1974, 0
    %1978 = vmatprep.subr.bf16.mxu0 0
    %1979 = vmatpush1.bf16.msra.mxu0 %v467
    %1980 = vmatprep.subr.bf16.mxu0 0
    %1981 = vmatpush1.bf16.msra.mxu0 %v468
    %1982 = vmatprep.subr.bf16.mxu0 0
    %1983 = vmatpush1.bf16.msra.mxu0 0
    %1984 = vmatprep.subr.bf16.mxu0 0
    %1985 = vmatpush1.bf16.msra.mxu0 0
    %1986 = vmatprep.subr.bf16.mxu0 0
    %1987 = vmatpush1.bf16.msra.mxu0 0
    %1988 = vmatprep.subr.bf16.mxu0 0
    %1989 = vmatpush1.bf16.msra.mxu0 0
    %1990 = vmatprep.subr.bf16.mxu0 0
    %1991 = vmatpush1.bf16.msra.mxu0 0
    %1992 = vmatprep.subr.bf16.mxu0 0
    %1993 = vmatpush1.bf16.msra.mxu0 0
    %1994 = vmatprep.subr.bf16.mxu0 0
    %1995 = vmatpush1.bf16.msra.mxu0 0
    %1996 = vmatprep.subr.bf16.mxu0 0
    %1997 = vmatpush1.bf16.msra.mxu0 0
    %1998 = vmatprep.subr.bf16.mxu0 0
    %1999 = vmatpush1.bf16.msra.mxu0 0
    %2000 = vmatprep.subr.bf16.mxu0 0
    %2001 = vmatpush1.bf16.msra.mxu0 0
    %2002 = vmatprep.subr.bf16.mxu0 0
    %2003 = vmatpush1.bf16.msra.mxu0 0
    %2004 = vmatprep.subr.bf16.mxu0 0
    %2005 = vmatpush1.bf16.msra.mxu0 0
    %2006 = vmatprep.subr.bf16.mxu0 0
    %2007 = vmatpush1.bf16.msra.mxu0 0
    %2008 = vmatprep.subr.bf16.mxu0 0
    %2009 = vmatpush1.bf16.msra.mxu0 0
    %2010 = vmatprep.mubr.bf16.mxu0 0
    %2011 = vmatmul.mubr.bf16.gmra.mrb[0].mxu0 %v1976
    %v2012 = vpop.f32.mrb[0].mxu0
    %v2013 = vadd.f32 0.0, %v2012
    %v2014 = vpop.f32.mrb[0].mxu0
    %v2015 = vpop.f32.mrb[0].mxu0
    %v2016 = vpop.f32.mrb[0].mxu0
    %2017 = vdwg.mxu0
    %2019 = vrot.lane.b32.xlu0 %v1970, 32
    %v2020 = vpop.permute.xlu0 %2019
    %v2022 = vsel %vm235, %v2020, 0
    %2024 = vmatprep.subr.bf16.mxu0 0
    %2025 = vmatpush1.bf16.msra.mxu0 %v522
    %2026 = vmatprep.subr.bf16.mxu0 0
    %2027 = vmatpush1.bf16.msra.mxu0 %v523
    %2028 = vmatprep.subr.bf16.mxu0 0
    %2029 = vmatpush1.bf16.msra.mxu0 0
    %2030 = vmatprep.subr.bf16.mxu0 0
    %2031 = vmatpush1.bf16.msra.mxu0 0
    %2032 = vmatprep.subr.bf16.mxu0 0
    %2033 = vmatpush1.bf16.msra.mxu0 0
    %2034 = vmatprep.subr.bf16.mxu0 0
    %2035 = vmatpush1.bf16.msra.mxu0 0
    %2036 = vmatprep.subr.bf16.mxu0 0
    %2037 = vmatpush1.bf16.msra.mxu0 0
    %2038 = vmatprep.subr.bf16.mxu0 0
    %2039 = vmatpush1.bf16.msra.mxu0 0
    %2040 = vmatprep.subr.bf16.mxu0 0
    %2041 = vmatpush1.bf16.msra.mxu0 0
    %2042 = vmatprep.subr.bf16.mxu0 0
    %2043 = vmatpush1.bf16.msra.mxu0 0
    %2044 = vmatprep.subr.bf16.mxu0 0
    %2045 = vmatpush1.bf16.msra.mxu0 0
    %2046 = vmatprep.subr.bf16.mxu0 0
    %2047 = vmatpush1.bf16.msra.mxu0 0
    %2048 = vmatprep.subr.bf16.mxu0 0
    %2049 = vmatpush1.bf16.msra.mxu0 0
    %2050 = vmatprep.subr.bf16.mxu0 0
    %2051 = vmatpush1.bf16.msra.mxu0 0
    %2052 = vmatprep.subr.bf16.mxu0 0
    %2053 = vmatpush1.bf16.msra.mxu0 0
    %2054 = vmatprep.subr.bf16.mxu0 0
    %2055 = vmatpush1.bf16.msra.mxu0 0
    %2056 = vmatprep.mubr.bf16.mxu0 0
    %2057 = vmatmul.mubr.bf16.gmra.mrb[0].mxu0 %v2022
    %v2058 = vpop.f32.mrb[0].mxu0
    %v2059 = vadd.f32 %v2013, %v2058
    %v2060 = vpop.f32.mrb[0].mxu0
    %v2061 = vpop.f32.mrb[0].mxu0
    %v2062 = vpop.f32.mrb[0].mxu0
    %2063 = vdwg.mxu0
    %v2064 = vadd.f32 %v2059, %v217
    %v2065 = vxor.u32 %v2064, 2147483648
    %v2066 = vmul.f32 %v2065, 1.442695
    %v2067 = vpow.pop %v2066
    %v2068 = vadd.f32 %v2067, 1.0
    %v2069 = vrcp.pop %v2068
    %v2070 = vmul.f32 1.0, %v2069
    %v2071 = vmul.f32 %v2070, 2.0
    %v2072 = vsub.f32 %v2071, 1.0
    %v2073 = vmul.f32 %v2070, %v1784
    %2075 = vrot.lane.b32.xlu0 %v2072, 64
    %v2076 = vpop.permute.xlu0 %2075
    %v2078 = vmul.f32 %v2070, %v2076
    %2080 = vrot.lane.b32.xlu0 %v2078, 32
    %v2081 = vpop.permute.xlu0 %2080
    %v2083 = vadd.f32 %v2073, %v2081
    %v2084 = vtanh.pop %v2083
    %2086 = vrot.lane.b32.xlu0 %v2084, 64
    %v2087 = vpop.permute.xlu0 %2086
    %v2089 = vmul.f32 %v2070, %v2087
    %2090 = vmatprep.subr.bf16.mxu0 0
    %2091 = vmatpush1.bf16.msra.mxu0 %v231
    %2092 = vmatprep.subr.bf16.mxu0 0
    %2093 = vmatpush1.bf16.msra.mxu0 %v232
    %2094 = vmatprep.subr.bf16.mxu0 0
    %2095 = vmatpush1.bf16.msra.mxu0 0
    %2096 = vmatprep.subr.bf16.mxu0 0
    %2097 = vmatpush1.bf16.msra.mxu0 0
    %2098 = vmatprep.subr.bf16.mxu0 0
    %2099 = vmatpush1.bf16.msra.mxu0 0
    %2100 = vmatprep.subr.bf16.mxu0 0
    %2101 = vmatpush1.bf16.msra.mxu0 0
    %2102 = vmatprep.subr.bf16.mxu0 0
    %2103 = vmatpush1.bf16.msra.mxu0 0
    %2104 = vmatprep.subr.bf16.mxu0 0
    %2105 = vmatpush1.bf16.msra.mxu0 0
    %2106 = vmatprep.subr.bf16.mxu0 0
    %2107 = vmatpush1.bf16.msra.mxu0 0
    %2108 = vmatprep.subr.bf16.mxu0 0
    %2109 = vmatpush1.bf16.msra.mxu0 0
    %2110 = vmatprep.subr.bf16.mxu0 0
    %2111 = vmatpush1.bf16.msra.mxu0 0
    %2112 = vmatprep.subr.bf16.mxu0 0
    %2113 = vmatpush1.bf16.msra.mxu0 0
    %2114 = vmatprep.subr.bf16.mxu0 0
    %2115 = vmatpush1.bf16.msra.mxu0 0
    %2116 = vmatprep.subr.bf16.mxu0 0
    %2117 = vmatpush1.bf16.msra.mxu0 0
    %2118 = vmatprep.subr.bf16.mxu0 0
    %2119 = vmatpush1.bf16.msra.mxu0 0
    %2120 = vmatprep.subr.bf16.mxu0 0
    %2121 = vmatpush1.bf16.msra.mxu0 0
    %2122 = vmatprep.mubr.bf16.mxu0 0
    %2123 = vmatmul.mubr.bf16.gmra.mrb[0].mxu0 %v1902
    %v2124 = vpop.f32.mrb[0].mxu0
    %v2125 = vadd.f32 0.0, %v2124
    %v2126 = vpop.f32.mrb[0].mxu0
    %v2127 = vpop.f32.mrb[0].mxu0
    %v2128 = vpop.f32.mrb[0].mxu0
    %2129 = vdwg.mxu0
    %v2130 = vadd.f32 %v199, %v2125
    %v2131 = vxor.u32 %v2130, 2147483648
    %v2132 = vmul.f32 %v2131, 1.442695
    %v2133 = vpow.pop %v2132
    %v2134 = vadd.f32 %v2133, 1.0
    %v2135 = vrcp.pop %v2134
    %v2136 = vmul.f32 1.0, %v2135
    %v2137 = vmul.f32 %v2136, 2.0
    %v2138 = vsub.f32 %v2137, 1.0
    %v2139 = vmul.f32 %v2136, %v1850
    %2141 = vrot.lane.b32.xlu0 %v2138, 64
    %v2142 = vpop.permute.xlu0 %2141
    %v2144 = vmul.f32 %v2136, %v2142
    %2146 = vrot.lane.b32.xlu0 %v2144, 32
    %v2147 = vpop.permute.xlu0 %2146
    %v2149 = vadd.f32 %v2139, %v2147
    %v2150 = vtanh.pop %v2149
    %2152 = vrot.lane.b32.xlu0 %v2150, 64
    %v2153 = vpop.permute.xlu0 %2152
    %v2155 = vmul.f32 %v2136, %v2153
    %v2156 = vpack.c.bf16 %v2155, %v2155
    %2157 = vmatprep.subr.bf16.mxu0 0
    %2158 = vmatpush1.bf16.msra.mxu0 %v322
    %2159 = vmatprep.subr.bf16.mxu0 0
    %2160 = vmatpush1.bf16.msra.mxu0 %v323
    %2161 = vmatprep.subr.bf16.mxu0 0
    %2162 = vmatpush1.bf16.msra.mxu0 0
    %2163 = vmatprep.subr.bf16.mxu0 0
    %2164 = vmatpush1.bf16.msra.mxu0 0
    %2165 = vmatprep.subr.bf16.mxu0 0
    %2166 = vmatpush1.bf16.msra.mxu0 0
    %2167 = vmatprep.subr.bf16.mxu0 0
    %2168 = vmatpush1.bf16.msra.mxu0 0
    %2169 = vmatprep.subr.bf16.mxu0 0
    %2170 = vmatpush1.bf16.msra.mxu0 0
    %2171 = vmatprep.subr.bf16.mxu0 0
    %2172 = vmatpush1.bf16.msra.mxu0 0
    %2173 = vmatprep.subr.bf16.mxu0 0
    %2174 = vmatpush1.bf16.msra.mxu0 0
    %2175 = vmatprep.subr.bf16.mxu0 0
    %2176 = vmatpush1.bf16.msra.mxu0 0
    %2177 = vmatprep.subr.bf16.mxu0 0
    %2178 = vmatpush1.bf16.msra.mxu0 0
    %2179 = vmatprep.subr.bf16.mxu0 0
    %2180 = vmatpush1.bf16.msra.mxu0 0
    %2181 = vmatprep.subr.bf16.mxu0 0
    %2182 = vmatpush1.bf16.msra.mxu0 0
    %2183 = vmatprep.subr.bf16.mxu0 0
    %2184 = vmatpush1.bf16.msra.mxu0 0
    %2185 = vmatprep.subr.bf16.mxu0 0
    %2186 = vmatpush1.bf16.msra.mxu0 0
    %2187 = vmatprep.subr.bf16.mxu0 0
    %2188 = vmatpush1.bf16.msra.mxu0 0
    %2189 = vmatprep.mubr.bf16.mxu0 0
    %2190 = vmatmul.mubr.bf16.gmra.mrb[0].mxu0 %v2022
    %v2191 = vpop.f32.mrb[0].mxu0
    %v2192 = vadd.f32 0.0, %v2191
    %v2193 = vpop.f32.mrb[0].mxu0
    %v2194 = vpop.f32.mrb[0].mxu0
    %v2195 = vpop.f32.mrb[0].mxu0
    %2196 = vdwg.mxu0
    %2198 = vrot.lane.b32.xlu0 %v2156, 32
    %v2199 = vpop.permute.xlu0 %2198
    %v2201 = vsel %vm235, %v2199, 0
    %2203 = vmatprep.subr.bf16.mxu0 0
    %2204 = vmatpush1.bf16.msra.mxu0 %v377
    %2205 = vmatprep.subr.bf16.mxu0 0
    %2206 = vmatpush1.bf16.msra.mxu0 %v378
    %2207 = vmatprep.subr.bf16.mxu0 0
    %2208 = vmatpush1.bf16.msra.mxu0 0
    %2209 = vmatprep.subr.bf16.mxu0 0
    %2210 = vmatpush1.bf16.msra.mxu0 0
    %2211 = vmatprep.subr.bf16.mxu0 0
    %2212 = vmatpush1.bf16.msra.mxu0 0
    %2213 = vmatprep.subr.bf16.mxu0 0
    %2214 = vmatpush1.bf16.msra.mxu0 0
    %2215 = vmatprep.subr.bf16.mxu0 0
    %2216 = vmatpush1.bf16.msra.mxu0 0
    %2217 = vmatprep.subr.bf16.mxu0 0
    %2218 = vmatpush1.bf16.msra.mxu0 0
    %2219 = vmatprep.subr.bf16.mxu0 0
    %2220 = vmatpush1.bf16.msra.mxu0 0
    %2221 = vmatprep.subr.bf16.mxu0 0
    %2222 = vmatpush1.bf16.msra.mxu0 0
    %2223 = vmatprep.subr.bf16.mxu0 0
    %2224 = vmatpush1.bf16.msra.mxu0 0
    %2225 = vmatprep.subr.bf16.mxu0 0
    %2226 = vmatpush1.bf16.msra.mxu0 0
    %2227 = vmatprep.subr.bf16.mxu0 0
    %2228 = vmatpush1.bf16.msra.mxu0 0
    %2229 = vmatprep.subr.bf16.mxu0 0
    %2230 = vmatpush1.bf16.msra.mxu0 0
    %2231 = vmatprep.subr.bf16.mxu0 0
    %2232 = vmatpush1.bf16.msra.mxu0 0
    %2233 = vmatprep.subr.bf16.mxu0 0
    %2234 = vmatpush1.bf16.msra.mxu0 0
    %2235 = vmatprep.mubr.bf16.mxu0 0
    %2236 = vmatmul.mubr.bf16.gmra.mrb[0].mxu0 %v2201
    %v2237 = vpop.f32.mrb[0].mxu0
    %v2238 = vadd.f32 %v2192, %v2237
    %v2239 = vpop.f32.mrb[0].mxu0
    %v2240 = vpop.f32.mrb[0].mxu0
    %v2241 = vpop.f32.mrb[0].mxu0
    %2242 = vdwg.mxu0
    %v2243 = vadd.f32 %v2238, %v210
    %v2244 = vxor.u32 %v2243, 2147483648
    %v2245 = vmul.f32 %v2244, 1.442695
    %v2246 = vpow.pop %v2245
    %v2247 = vadd.f32 %v2246, 1.0
    %v2248 = vrcp.pop %v2247
    %v2249 = vmul.f32 1.0, %v2248
    %v2250 = vmul.f32 %v2249, 2.0
    %v2251 = vsub.f32 %v2250, 1.0
    %v2252 = vmul.f32 %v2249, %v1963
    %2254 = vrot.lane.b32.xlu0 %v2251, 64
    %v2255 = vpop.permute.xlu0 %2254
    %v2257 = vmul.f32 %v2249, %v2255
    %2259 = vrot.lane.b32.xlu0 %v2257, 32
    %v2260 = vpop.permute.xlu0 %2259
    %v2262 = vadd.f32 %v2252, %v2260
    %v2263 = vtanh.pop %v2262
    %2265 = vrot.lane.b32.xlu0 %v2263, 64
    %v2266 = vpop.permute.xlu0 %2265
    %v2268 = vmul.f32 %v2249, %v2266
    %v2269 = vpack.c.bf16 %v2268, %v2268
    %v2270 = vpack.c.bf16 %v2089, %v2089
    %2272 = vrot.lane.b32.xlu0 %v2270, 32
    %v2273 = vpop.permute.xlu0 %2272
    %v2275 = vsel %vm235, %v2273, 0
    %2277 = vmatprep.subr.bf16.mxu0 0
    %2278 = vmatpush1.bf16.msra.mxu0 %v467
    %2279 = vmatprep.subr.bf16.mxu0 0
    %2280 = vmatpush1.bf16.msra.mxu0 %v468
    %2281 = vmatprep.subr.bf16.mxu0 0
    %2282 = vmatpush1.bf16.msra.mxu0 0
    %2283 = vmatprep.subr.bf16.mxu0 0
    %2284 = vmatpush1.bf16.msra.mxu0 0
    %2285 = vmatprep.subr.bf16.mxu0 0
    %2286 = vmatpush1.bf16.msra.mxu0 0
    %2287 = vmatprep.subr.bf16.mxu0 0
    %2288 = vmatpush1.bf16.msra.mxu0 0
    %2289 = vmatprep.subr.bf16.mxu0 0
    %2290 = vmatpush1.bf16.msra.mxu0 0
    %2291 = vmatprep.subr.bf16.mxu0 0
    %2292 = vmatpush1.bf16.msra.mxu0 0
    %2293 = vmatprep.subr.bf16.mxu0 0
    %2294 = vmatpush1.bf16.msra.mxu0 0
    %2295 = vmatprep.subr.bf16.mxu0 0
    %2296 = vmatpush1.bf16.msra.mxu0 0
    %2297 = vmatprep.subr.bf16.mxu0 0
    %2298 = vmatpush1.bf16.msra.mxu0 0
    %2299 = vmatprep.subr.bf16.mxu0 0
    %2300 = vmatpush1.bf16.msra.mxu0 0
    %2301 = vmatprep.subr.bf16.mxu0 0
    %2302 = vmatpush1.bf16.msra.mxu0 0
    %2303 = vmatprep.subr.bf16.mxu0 0
    %2304 = vmatpush1.bf16.msra.mxu0 0
    %2305 = vmatprep.subr.bf16.mxu0 0
    %2306 = vmatpush1.bf16.msra.mxu0 0
    %2307 = vmatprep.subr.bf16.mxu0 0
    %2308 = vmatpush1.bf16.msra.mxu0 0
    %2309 = vmatprep.mubr.bf16.mxu0 0
    %2310 = vmatmul.mubr.bf16.gmra.mrb[0].mxu0 %v2275
    %v2311 = vpop.f32.mrb[0].mxu0
    %v2312 = vadd.f32 0.0, %v2311
    %v2313 = vpop.f32.mrb[0].mxu0
    %v2314 = vpop.f32.mrb[0].mxu0
    %v2315 = vpop.f32.mrb[0].mxu0
    %2316 = vdwg.mxu0
    %2318 = vrot.lane.b32.xlu0 %v2269, 32
    %v2319 = vpop.permute.xlu0 %2318
    %v2321 = vsel %vm235, %v2319, 0
    %2323 = vmatprep.subr.bf16.mxu0 0
    %2324 = vmatpush1.bf16.msra.mxu0 %v522
    %2325 = vmatprep.subr.bf16.mxu0 0
    %2326 = vmatpush1.bf16.msra.mxu0 %v523
    %2327 = vmatprep.subr.bf16.mxu0 0
    %2328 = vmatpush1.bf16.msra.mxu0 0
    %2329 = vmatprep.subr.bf16.mxu0 0
    %2330 = vmatpush1.bf16.msra.mxu0 0
    %2331 = vmatprep.subr.bf16.mxu0 0
    %2332 = vmatpush1.bf16.msra.mxu0 0
    %2333 = vmatprep.subr.bf16.mxu0 0
    %2334 = vmatpush1.bf16.msra.mxu0 0
    %2335 = vmatprep.subr.bf16.mxu0 0
    %2336 = vmatpush1.bf16.msra.mxu0 0
    %2337 = vmatprep.subr.bf16.mxu0 0
    %2338 = vmatpush1.bf16.msra.mxu0 0
    %2339 = vmatprep.subr.bf16.mxu0 0
    %2340 = vmatpush1.bf16.msra.mxu0 0
    %2341 = vmatprep.subr.bf16.mxu0 0
    %2342 = vmatpush1.bf16.msra.mxu0 0
    %2343 = vmatprep.subr.bf16.mxu0 0
    %2344 = vmatpush1.bf16.msra.mxu0 0
    %2345 = vmatprep.subr.bf16.mxu0 0
    %2346 = vmatpush1.bf16.msra.mxu0 0
    %2347 = vmatprep.subr.bf16.mxu0 0
    %2348 = vmatpush1.bf16.msra.mxu0 0
    %2349 = vmatprep.subr.bf16.mxu0 0
    %2350 = vmatpush1.bf16.msra.mxu0 0
    %2351 = vmatprep.subr.bf16.mxu0 0
    %2352 = vmatpush1.bf16.msra.mxu0 0
    %2353 = vmatprep.subr.bf16.mxu0 0
    %2354 = vmatpush1.bf16.msra.mxu0 0
    %2355 = vmatprep.mubr.bf16.mxu0 0
    %2356 = vmatmul.mubr.bf16.gmra.mrb[0].mxu0 %v2321
    %v2357 = vpop.f32.mrb[0].mxu0
    %v2358 = vadd.f32 %v2312, %v2357
    %v2359 = vpop.f32.mrb[0].mxu0
    %v2360 = vpop.f32.mrb[0].mxu0
    %v2361 = vpop.f32.mrb[0].mxu0
    %2362 = vdwg.mxu0
    %v2363 = vadd.f32 %v2358, %v217
    %v2364 = vxor.u32 %v2363, 2147483648
    %v2365 = vmul.f32 %v2364, 1.442695
    %v2366 = vpow.pop %v2365
    %v2367 = vadd.f32 %v2366, 1.0
    %v2368 = vrcp.pop %v2367
    %v2369 = vmul.f32 1.0, %v2368
    %v2370 = vmul.f32 %v2369, 2.0
    %v2371 = vsub.f32 %v2370, 1.0
    %v2372 = vmul.f32 %v2369, %v2083
    %2374 = vrot.lane.b32.xlu0 %v2371, 64
    %v2375 = vpop.permute.xlu0 %2374
    %v2377 = vmul.f32 %v2369, %v2375
    %2379 = vrot.lane.b32.xlu0 %v2377, 32
    %v2380 = vpop.permute.xlu0 %2379
    %v2382 = vadd.f32 %v2372, %v2380
    %v2383 = vtanh.pop %v2382
    %2385 = vrot.lane.b32.xlu0 %v2383, 64
    %v2386 = vpop.permute.xlu0 %2385
    %v2388 = vmul.f32 %v2369, %v2386
    %2389 = vmatprep.subr.bf16.mxu0 0
    %2390 = vmatpush1.bf16.msra.mxu0 %v231
    %2391 = vmatprep.subr.bf16.mxu0 0
    %2392 = vmatpush1.bf16.msra.mxu0 %v232
    %2393 = vmatprep.subr.bf16.mxu0 0
    %2394 = vmatpush1.bf16.msra.mxu0 0
    %2395 = vmatprep.subr.bf16.mxu0 0
    %2396 = vmatpush1.bf16.msra.mxu0 0
    %2397 = vmatprep.subr.bf16.mxu0 0
    %2398 = vmatpush1.bf16.msra.mxu0 0
    %2399 = vmatprep.subr.bf16.mxu0 0
    %2400 = vmatpush1.bf16.msra.mxu0 0
    %2401 = vmatprep.subr.bf16.mxu0 0
    %2402 = vmatpush1.bf16.msra.mxu0 0
    %2403 = vmatprep.subr.bf16.mxu0 0
    %2404 = vmatpush1.bf16.msra.mxu0 0
    %2405 = vmatprep.subr.bf16.mxu0 0
    %2406 = vmatpush1.bf16.msra.mxu0 0
    %2407 = vmatprep.subr.bf16.mxu0 0
    %2408 = vmatpush1.bf16.msra.mxu0 0
    %2409 = vmatprep.subr.bf16.mxu0 0
    %2410 = vmatpush1.bf16.msra.mxu0 0
    %2411 = vmatprep.subr.bf16.mxu0 0
    %2412 = vmatpush1.bf16.msra.mxu0 0
    %2413 = vmatprep.subr.bf16.mxu0 0
    %2414 = vmatpush1.bf16.msra.mxu0 0
    %2415 = vmatprep.subr.bf16.mxu0 0
    %2416 = vmatpush1.bf16.msra.mxu0 0
    %2417 = vmatprep.subr.bf16.mxu0 0
    %2418 = vmatpush1.bf16.msra.mxu0 0
    %2419 = vmatprep.subr.bf16.mxu0 0
    %2420 = vmatpush1.bf16.msra.mxu0 0
    %2421 = vmatprep.mubr.bf16.mxu0 0
    %2422 = vmatmul.mubr.bf16.gmra.mrb[0].mxu0 %v2201
    %v2423 = vpop.f32.mrb[0].mxu0
    %v2424 = vadd.f32 0.0, %v2423
    %v2425 = vpop.f32.mrb[0].mxu0
    %v2426 = vpop.f32.mrb[0].mxu0
    %v2427 = vpop.f32.mrb[0].mxu0
    %2428 = vdwg.mxu0
    %v2429 = vadd.f32 %v202, %v2424
    %v2430 = vxor.u32 %v2429, 2147483648
    %v2431 = vmul.f32 %v2430, 1.442695
    %v2432 = vpow.pop %v2431
    %v2433 = vadd.f32 %v2432, 1.0
    %v2434 = vrcp.pop %v2433
    %v2435 = vmul.f32 1.0, %v2434
    %v2436 = vmul.f32 %v2435, 2.0
    %v2437 = vsub.f32 %v2436, 1.0
    %v2438 = vmul.f32 %v2435, %v2149
    %2440 = vrot.lane.b32.xlu0 %v2437, 64
    %v2441 = vpop.permute.xlu0 %2440
    %v2443 = vmul.f32 %v2435, %v2441
    %2445 = vrot.lane.b32.xlu0 %v2443, 32
    %v2446 = vpop.permute.xlu0 %2445
    %v2448 = vadd.f32 %v2438, %v2446
    %v2449 = vtanh.pop %v2448
    %2451 = vrot.lane.b32.xlu0 %v2449, 64
    %v2452 = vpop.permute.xlu0 %2451
    %v2454 = vmul.f32 %v2435, %v2452
    %v2455 = vpack.c.bf16 %v2454, %v2454
    %2456 = vmatprep.subr.bf16.mxu0 0
    %2457 = vmatpush1.bf16.msra.mxu0 %v322
    %2458 = vmatprep.subr.bf16.mxu0 0
    %2459 = vmatpush1.bf16.msra.mxu0 %v323
    %2460 = vmatprep.subr.bf16.mxu0 0
    %2461 = vmatpush1.bf16.msra.mxu0 0
    %2462 = vmatprep.subr.bf16.mxu0 0
    %2463 = vmatpush1.bf16.msra.mxu0 0
    %2464 = vmatprep.subr.bf16.mxu0 0
    %2465 = vmatpush1.bf16.msra.mxu0 0
    %2466 = vmatprep.subr.bf16.mxu0 0
    %2467 = vmatpush1.bf16.msra.mxu0 0
    %2468 = vmatprep.subr.bf16.mxu0 0
    %2469 = vmatpush1.bf16.msra.mxu0 0
    %2470 = vmatprep.subr.bf16.mxu0 0
    %2471 = vmatpush1.bf16.msra.mxu0 0
    %2472 = vmatprep.subr.bf16.mxu0 0
    %2473 = vmatpush1.bf16.msra.mxu0 0
    %2474 = vmatprep.subr.bf16.mxu0 0
    %2475 = vmatpush1.bf16.msra.mxu0 0
    %2476 = vmatprep.subr.bf16.mxu0 0
    %2477 = vmatpush1.bf16.msra.mxu0 0
    %2478 = vmatprep.subr.bf16.mxu0 0
    %2479 = vmatpush1.bf16.msra.mxu0 0
    %2480 = vmatprep.subr.bf16.mxu0 0
    %2481 = vmatpush1.bf16.msra.mxu0 0
    %2482 = vmatprep.subr.bf16.mxu0 0
    %2483 = vmatpush1.bf16.msra.mxu0 0
    %2484 = vmatprep.subr.bf16.mxu0 0
    %2485 = vmatpush1.bf16.msra.mxu0 0
    %2486 = vmatprep.subr.bf16.mxu0 0
    %2487 = vmatpush1.bf16.msra.mxu0 0
    %2488 = vmatprep.mubr.bf16.mxu0 0
    %2489 = vmatmul.mubr.bf16.gmra.mrb[0].mxu0 %v2321
    %v2490 = vpop.f32.mrb[0].mxu0
    %v2491 = vadd.f32 0.0, %v2490
    %v2492 = vpop.f32.mrb[0].mxu0
    %v2493 = vpop.f32.mrb[0].mxu0
    %v2494 = vpop.f32.mrb[0].mxu0
    %2495 = vdwg.mxu0
    %2497 = vrot.lane.b32.xlu0 %v2455, 32
    %v2498 = vpop.permute.xlu0 %2497
    %v2500 = vsel %vm235, %v2498, 0
    %2502 = vmatprep.subr.bf16.mxu0 0
    %2503 = vmatpush1.bf16.msra.mxu0 %v377
    %2504 = vmatprep.subr.bf16.mxu0 0
    %2505 = vmatpush1.bf16.msra.mxu0 %v378
    %2506 = vmatprep.subr.bf16.mxu0 0
    %2507 = vmatpush1.bf16.msra.mxu0 0
    %2508 = vmatprep.subr.bf16.mxu0 0
    %2509 = vmatpush1.bf16.msra.mxu0 0
    %2510 = vmatprep.subr.bf16.mxu0 0
    %2511 = vmatpush1.bf16.msra.mxu0 0
    %2512 = vmatprep.subr.bf16.mxu0 0
    %2513 = vmatpush1.bf16.msra.mxu0 0
    %2514 = vmatprep.subr.bf16.mxu0 0
    %2515 = vmatpush1.bf16.msra.mxu0 0
    %2516 = vmatprep.subr.bf16.mxu0 0
    %2517 = vmatpush1.bf16.msra.mxu0 0
    %2518 = vmatprep.subr.bf16.mxu0 0
    %2519 = vmatpush1.bf16.msra.mxu0 0
    %2520 = vmatprep.subr.bf16.mxu0 0
    %2521 = vmatpush1.bf16.msra.mxu0 0
    %2522 = vmatprep.subr.bf16.mxu0 0
    %2523 = vmatpush1.bf16.msra.mxu0 0
    %2524 = vmatprep.subr.bf16.mxu0 0
    %2525 = vmatpush1.bf16.msra.mxu0 0
    %2526 = vmatprep.subr.bf16.mxu0 0
    %2527 = vmatpush1.bf16.msra.mxu0 0
    %2528 = vmatprep.subr.bf16.mxu0 0
    %2529 = vmatpush1.bf16.msra.mxu0 0
    %2530 = vmatprep.subr.bf16.mxu0 0
    %2531 = vmatpush1.bf16.msra.mxu0 0
    %2532 = vmatprep.subr.bf16.mxu0 0
    %2533 = vmatpush1.bf16.msra.mxu0 0
    %2534 = vmatprep.mubr.bf16.mxu0 0
    %2535 = vmatmul.mubr.bf16.gmra.mrb[0].mxu0 %v2500
    %v2536 = vpop.f32.mrb[0].mxu0
    %v2537 = vadd.f32 %v2491, %v2536
    %v2538 = vpop.f32.mrb[0].mxu0
    %v2539 = vpop.f32.mrb[0].mxu0
    %v2540 = vpop.f32.mrb[0].mxu0
    %2541 = vdwg.mxu0
    %v2542 = vadd.f32 %v2537, %v210
    %v2543 = vxor.u32 %v2542, 2147483648
    %v2544 = vmul.f32 %v2543, 1.442695
    %v2545 = vpow.pop %v2544
    %v2546 = vadd.f32 %v2545, 1.0
    %v2547 = vrcp.pop %v2546
    %v2548 = vmul.f32 1.0, %v2547
    %v2549 = vmul.f32 %v2548, 2.0
    %v2550 = vsub.f32 %v2549, 1.0
    %v2551 = vmul.f32 %v2548, %v2262
    %2553 = vrot.lane.b32.xlu0 %v2550, 64
    %v2554 = vpop.permute.xlu0 %2553
    %v2556 = vmul.f32 %v2548, %v2554
    %2558 = vrot.lane.b32.xlu0 %v2556, 32
    %v2559 = vpop.permute.xlu0 %2558
    %v2561 = vadd.f32 %v2551, %v2559
    %v2562 = vtanh.pop %v2561
    %2564 = vrot.lane.b32.xlu0 %v2562, 64
    %v2565 = vpop.permute.xlu0 %2564
    %v2567 = vmul.f32 %v2548, %v2565
    %v2568 = vpack.c.bf16 %v2567, %v2567
    %v2569 = vpack.c.bf16 %v2388, %v2388
    %2571 = vrot.lane.b32.xlu0 %v2569, 32
    %v2572 = vpop.permute.xlu0 %2571
    %v2574 = vsel %vm235, %v2572, 0
    %2576 = vmatprep.subr.bf16.mxu0 0
    %2577 = vmatpush1.bf16.msra.mxu0 %v467
    %2578 = vmatprep.subr.bf16.mxu0 0
    %2579 = vmatpush1.bf16.msra.mxu0 %v468
    %2580 = vmatprep.subr.bf16.mxu0 0
    %2581 = vmatpush1.bf16.msra.mxu0 0
    %2582 = vmatprep.subr.bf16.mxu0 0
    %2583 = vmatpush1.bf16.msra.mxu0 0
    %2584 = vmatprep.subr.bf16.mxu0 0
    %2585 = vmatpush1.bf16.msra.mxu0 0
    %2586 = vmatprep.subr.bf16.mxu0 0
    %2587 = vmatpush1.bf16.msra.mxu0 0
    %2588 = vmatprep.subr.bf16.mxu0 0
    %2589 = vmatpush1.bf16.msra.mxu0 0
    %2590 = vmatprep.subr.bf16.mxu0 0
    %2591 = vmatpush1.bf16.msra.mxu0 0
    %2592 = vmatprep.subr.bf16.mxu0 0
    %2593 = vmatpush1.bf16.msra.mxu0 0
    %2594 = vmatprep.subr.bf16.mxu0 0
    %2595 = vmatpush1.bf16.msra.mxu0 0
    %2596 = vmatprep.subr.bf16.mxu0 0
    %2597 = vmatpush1.bf16.msra.mxu0 0
    %2598 = vmatprep.subr.bf16.mxu0 0
    %2599 = vmatpush1.bf16.msra.mxu0 0
    %2600 = vmatprep.subr.bf16.mxu0 0
    %2601 = vmatpush1.bf16.msra.mxu0 0
    %2602 = vmatprep.subr.bf16.mxu0 0
    %2603 = vmatpush1.bf16.msra.mxu0 0
    %2604 = vmatprep.subr.bf16.mxu0 0
    %2605 = vmatpush1.bf16.msra.mxu0 0
    %2606 = vmatprep.subr.bf16.mxu0 0
    %2607 = vmatpush1.bf16.msra.mxu0 0
    %2608 = vmatprep.mubr.bf16.mxu0 0
    %2609 = vmatmul.mubr.bf16.gmra.mrb[0].mxu0 %v2574
    %v2610 = vpop.f32.mrb[0].mxu0
    %v2611 = vadd.f32 0.0, %v2610
    %v2612 = vpop.f32.mrb[0].mxu0
    %v2613 = vpop.f32.mrb[0].mxu0
    %v2614 = vpop.f32.mrb[0].mxu0
    %2615 = vdwg.mxu0
    %2617 = vrot.lane.b32.xlu0 %v2568, 32
    %v2618 = vpop.permute.xlu0 %2617
    %v2620 = vsel %vm235, %v2618, 0
    %2622 = vmatprep.subr.bf16.mxu0 0
    %2623 = vmatpush1.bf16.msra.mxu0 %v522
    %2624 = vmatprep.subr.bf16.mxu0 0
    %2625 = vmatpush1.bf16.msra.mxu0 %v523
    %2626 = vmatprep.subr.bf16.mxu0 0
    %2627 = vmatpush1.bf16.msra.mxu0 0
    %2628 = vmatprep.subr.bf16.mxu0 0
    %2629 = vmatpush1.bf16.msra.mxu0 0
    %2630 = vmatprep.subr.bf16.mxu0 0
    %2631 = vmatpush1.bf16.msra.mxu0 0
    %2632 = vmatprep.subr.bf16.mxu0 0
    %2633 = vmatpush1.bf16.msra.mxu0 0
    %2634 = vmatprep.subr.bf16.mxu0 0
    %2635 = vmatpush1.bf16.msra.mxu0 0
    %2636 = vmatprep.subr.bf16.mxu0 0
    %2637 = vmatpush1.bf16.msra.mxu0 0
    %2638 = vmatprep.subr.bf16.mxu0 0
    %2639 = vmatpush1.bf16.msra.mxu0 0
    %2640 = vmatprep.subr.bf16.mxu0 0
    %2641 = vmatpush1.bf16.msra.mxu0 0
    %2642 = vmatprep.subr.bf16.mxu0 0
    %2643 = vmatpush1.bf16.msra.mxu0 0
    %2644 = vmatprep.subr.bf16.mxu0 0
    %2645 = vmatpush1.bf16.msra.mxu0 0
    %2646 = vmatprep.subr.bf16.mxu0 0
    %2647 = vmatpush1.bf16.msra.mxu0 0
    %2648 = vmatprep.subr.bf16.mxu0 0
    %2649 = vmatpush1.bf16.msra.mxu0 0
    %2650 = vmatprep.subr.bf16.mxu0 0
    %2651 = vmatpush1.bf16.msra.mxu0 0
    %2652 = vmatprep.subr.bf16.mxu0 0
    %2653 = vmatpush1.bf16.msra.mxu0 0
    %2654 = vmatprep.mubr.bf16.mxu0 0
    %2655 = vmatmul.mubr.bf16.gmra.mrb[0].mxu0 %v2620
    %v2656 = vpop.f32.mrb[0].mxu0
    %v2657 = vadd.f32 %v2611, %v2656
    %v2658 = vpop.f32.mrb[0].mxu0
    %v2659 = vpop.f32.mrb[0].mxu0
    %v2660 = vpop.f32.mrb[0].mxu0
    %2661 = vdwg.mxu0
    %v2662 = vadd.f32 %v2657, %v217
    %v2663 = vxor.u32 %v2662, 2147483648
    %v2664 = vmul.f32 %v2663, 1.442695
    %v2665 = vpow.pop %v2664
    %v2666 = vadd.f32 %v2665, 1.0
    %v2667 = vrcp.pop %v2666
    %v2668 = vmul.f32 1.0, %v2667
    %v2669 = vmul.f32 %v2668, 2.0
    %v2670 = vsub.f32 %v2669, 1.0
    %v2671 = vmul.f32 %v2668, %v2382
    %2673 = vrot.lane.b32.xlu0 %v2670, 64
    %v2674 = vpop.permute.xlu0 %2673
    %v2676 = vmul.f32 %v2668, %v2674
    %2678 = vrot.lane.b32.xlu0 %v2676, 32
    %v2679 = vpop.permute.xlu0 %2678
    %v2681 = vadd.f32 %v2671, %v2679
    %v2682 = vtanh.pop %v2681
    %2684 = vrot.lane.b32.xlu0 %v2682, 64
    %v2685 = vpop.permute.xlu0 %2684
    %v2687 = vmul.f32 %v2668, %v2685
    %v2688 = vpack.c.bf16 %v2687, %v2687
    %v2689 = vld [vmem:[%s10] sm:$0xf]
    %v2690 = vld [vmem:[%s10 + $0x4] sm:$0xf]
    %v2691 = vld [vmem:[%s10 + $0x8] sm:$0xf]
    %v2692 = vld [vmem:[%s10 + $0xc] sm:$0xf]
    %v2693 = vld [vmem:[%s11] sm:$0x1]
    %v2695 = vlaneseq
    %v2696 = vshrl.u32 %v2695, 7
    %v2697 = vsub.s32 0, %v2696
    %v2698 = vrot.slane %v2693, %v2697
    %2701 = vrot.lane.b32.xlu0 %v2688, 32
    %v2702 = vpop.permute.xlu0 %2701
    %v2707 = vunpack.c.l.b16 %v2689
    %v2708 = vunpack.c.l.b16 %v2690
    %v2709 = vunpack.c.l.b16 %v2691
    %v2710 = vunpack.c.l.b16 %v2692
    %v2711 = vpack.c.b16 %v2708, %v2707
    %v2712 = vpack.c.b16 %v2710, %v2709
    %v2716 = vsel %vm235, %v2702, 0
    %2718 = vmatprep.subr.bf16.mxu0 0
    %2719 = vmatpush1.bf16.msra.mxu0 %v2711
    %2720 = vmatprep.subr.bf16.mxu0 0
    %2721 = vmatpush1.bf16.msra.mxu0 %v2712
    %2722 = vmatprep.subr.bf16.mxu0 0
    %2723 = vmatpush1.bf16.msra.mxu0 0
    %2724 = vmatprep.subr.bf16.mxu0 0
    %2725 = vmatpush1.bf16.msra.mxu0 0
    %2726 = vmatprep.subr.bf16.mxu0 0
    %2727 = vmatpush1.bf16.msra.mxu0 0
    %2728 = vmatprep.subr.bf16.mxu0 0
    %2729 = vmatpush1.bf16.msra.mxu0 0
    %2730 = vmatprep.subr.bf16.mxu0 0
    %2731 = vmatpush1.bf16.msra.mxu0 0
    %2732 = vmatprep.subr.bf16.mxu0 0
    %2733 = vmatpush1.bf16.msra.mxu0 0
    %2734 = vmatprep.subr.bf16.mxu0 0
    %2735 = vmatpush1.bf16.msra.mxu0 0
    %2736 = vmatprep.subr.bf16.mxu0 0
    %2737 = vmatpush1.bf16.msra.mxu0 0
    %2738 = vmatprep.subr.bf16.mxu0 0
    %2739 = vmatpush1.bf16.msra.mxu0 0
    %2740 = vmatprep.subr.bf16.mxu0 0
    %2741 = vmatpush1.bf16.msra.mxu0 0
    %2742 = vmatprep.subr.bf16.mxu0 0
    %2743 = vmatpush1.bf16.msra.mxu0 0
    %2744 = vmatprep.subr.bf16.mxu0 0
    %2745 = vmatpush1.bf16.msra.mxu0 0
    %2746 = vmatprep.subr.bf16.mxu0 0
    %2747 = vmatpush1.bf16.msra.mxu0 0
    %2748 = vmatprep.subr.bf16.mxu0 0
    %2749 = vmatpush1.bf16.msra.mxu0 0
    %2750 = vmatprep.mubr.bf16.mxu0 0
    %2751 = vmatmul.mubr.bf16.gmra.mrb[0].mxu0 %v2716
    %v2752 = vpop.f32.mrb[0].mxu0
    %v2753 = vadd.f32 %v2698, %v2752
    %v2754 = vpop.f32.mrb[0].mxu0
    %v2755 = vpop.f32.mrb[0].mxu0
    %v2756 = vpop.f32.mrb[0].mxu0
    %2757 = vdwg.mxu0
    %2758 = vst [vmem:[#allocation8] sm:$0xff] %v2753
    // Predicated region
    $region62: #{tpu_custom_call.1} parent=1 // pred_check
      _
    $region63: #{tpu_custom_call.1} parent=1 // pred_check_branch
      %2760 = sbr.rel (0) target = $region65
    $region64: #{tpu_custom_call.1} parent=1 // pred_region
      %s2762 = ssub.s32 128, 128
      %2763 = vsyncadd [#allocation4], %s2762
      %s2765 = sshll.u32 [#allocation8], 4
      %s2766 = int_to_ptr.vmem [resolvable:$true] %s2765
      %2768 = dma.vmem_to_hbm [thread:$0]  %s2766, 128, %s12, [#allocation4]
    $region65: #{tpu_custom_call.1} parent=1 // pred_fallthru
      _
    // Predicated region
    $region66: #{tpu_custom_call.1} parent=1 // pred_check
      _
    $region67: #{tpu_custom_call.1} parent=1 // pred_check_branch
      %2770 = sbr.rel (0) target = $region69
    $region68: #{tpu_custom_call.1} parent=1 // pred_region
      %2771 = dma.done [#allocation4], 128
    $region69: #{tpu_custom_call.1} parent=1 // pred_fallthru
      _
    %2772 = vsyncpa [#allocation3], 1
    %2773 = vsyncpa [#allocation6], 1
    %2774 = vsyncpa [#allocation4], 1

</llo_original>
